<compile_context>
chip_gen: v5e
topology: v5e:2x2
jax: 0.10.0
libtpu: 0.0.40
codegen_flags: <defaults>
</compile_context>

<pallas_src>
import math

import jax
import jax.numpy as jnp
from jax import lax
from jax.experimental import pallas as pl
from jax.experimental.pallas import tpu as pltpu

MODEL_DIM = 32
N_HEADS = 4
HEAD_DIM = MODEL_DIM // N_HEADS
HIDDEN_FC = 64
MAX_SEQ = 8
VOCAB = 16
NEG_INF = -1e9
LN_EPS = 1e-5


# ----------------------------------------------------------------------------
# In-kernel helpers (trace-time functions)
# ----------------------------------------------------------------------------
def _layernorm(x, g, b):
    mean = jnp.mean(x, axis=-1, keepdims=True)
    var = jnp.mean(x * x, axis=-1, keepdims=True) - mean * mean
    return (x - mean) * lax.rsqrt(var + LN_EPS) * g + b


def _mha(q_in, kv_in, mask, layer, base, out_slot, wqkv_ref, wout_ref, headb_ref):
    """Multi-head attention; per-head weights pre-sliced host-side (lane dense).

    q_in: (S, D) query-side activations, kv_in: (S, D) key/value-side.
    Scale 1/sqrt(head_dim) is folded into wq/bq host-side.
    """
    out = None
    for h in range(N_HEADS):
        wq = wqkv_ref[layer, base + 0, h]                       # (D, dh)
        wk = wqkv_ref[layer, base + 1, h]
        wv = wqkv_ref[layer, base + 2, h]
        bq = headb_ref[layer, base + 0, h].reshape(1, HEAD_DIM)
        bk = headb_ref[layer, base + 1, h].reshape(1, HEAD_DIM)
        bv = headb_ref[layer, base + 2, h].reshape(1, HEAD_DIM)

        q = jnp.dot(q_in, wq, preferred_element_type=jnp.float32) + bq   # (S, dh)
        k = jnp.dot(kv_in, wk, preferred_element_type=jnp.float32) + bk
        v = jnp.dot(kv_in, wv, preferred_element_type=jnp.float32) + bv

        # scores = q @ k^T  (NT contraction), additive mask
        s = lax.dot_general(q, k, (((1,), (1,)), ((), ())),
                            preferred_element_type=jnp.float32) + mask   # (S, S)
        m = jnp.max(s, axis=-1, keepdims=True)
        e = jnp.exp(s - m)
        p = e * pl.reciprocal(jnp.sum(e, axis=-1, keepdims=True), approx=True)
        ctx = jnp.dot(p, v, preferred_element_type=jnp.float32)          # (S, dh)

        wo = wout_ref[layer, out_slot, h]                                # (dh, D)
        contrib = jnp.dot(ctx, wo, preferred_element_type=jnp.float32)   # (S, D)
        out = contrib if out is None else out + contrib
    return out


# ----------------------------------------------------------------------------
# Fused decoder kernel (embedding + all layers), grid over batch
# ----------------------------------------------------------------------------
def decoder_kernel(tok_ref, x_ref, smask_ref, cmask_ref, table_ref, pe_ref,
                   wqkv_ref, wout_ref, wf1_ref, wf2_ref, headb_ref, vecb_ref,
                   out_ref):
    S, D = pe_ref.shape
    V = table_ref.shape[0]
    F = wf1_ref.shape[-1]
    L = wf1_ref.shape[0]

    # --- sentence embedding: one-hot matmul lookup + positional encoding ----
    # TODO(synk): reference SentenceEmbedding's string tokenization and
    # START/END/PAD insertion is host-side preprocessing; the kernel consumes
    # integer ids.  At VOCAB=16 the one-hot matmul is fine; for large vocabs a
    # scalar-prefetched row gather would replace it.
    tok = tok_ref[...].reshape(S, 1)                                     # int32
    onehot = (tok == lax.broadcasted_iota(jnp.int32, (S, V), 1)).astype(jnp.float32)
    y = jnp.dot(onehot, table_ref[...],
                preferred_element_type=jnp.float32) + pe_ref[...]        # (S, D)

    x = x_ref[0]                                                         # (S, D)
    smask = smask_ref[0]                                                 # (S, S)
    cmask = cmask_ref[0]

    # n_layers is static -> this Python loop is unrolled; y stays resident.
    for l in range(L):
        b_so = vecb_ref[l, 0, :D].reshape(1, D)
        b_co = vecb_ref[l, 1, :D].reshape(1, D)
        b_f1 = vecb_ref[l, 2, :].reshape(1, F)
        b_f2 = vecb_ref[l, 3, :D].reshape(1, D)
        g1 = vecb_ref[l, 4, :D].reshape(1, D)
        be1 = vecb_ref[l, 5, :D].reshape(1, D)
        g2 = vecb_ref[l, 6, :D].reshape(1, D)
        be2 = vecb_ref[l, 7, :D].reshape(1, D)
        g3 = vecb_ref[l, 8, :D].reshape(1, D)
        be3 = vecb_ref[l, 9, :D].reshape(1, D)

        # masked multi-head self attention (+ residual, LN); dropout = identity
        sa = _mha(y, y, smask, l, 0, 0, wqkv_ref, wout_ref, headb_ref) + b_so
        y = _layernorm(sa + y, g1, be1)

        # multi-head cross attention: Q from y, K/V from encoder output x
        ca = _mha(y, x, cmask, l, 3, 1, wqkv_ref, wout_ref, headb_ref) + b_co
        y = _layernorm(ca + y, g2, be2)

        # position-wise feed forward
        h1 = jnp.maximum(
            jnp.dot(y, wf1_ref[l], preferred_element_type=jnp.float32) + b_f1, 0.0)
        ff = jnp.dot(h1, wf2_ref[l], preferred_element_type=jnp.float32) + b_f2
        y = _layernorm(ff + y, g3, be3)

    out_ref[...] = y[None]


def run_decoder(y_tokens, x, self_mask, cross_mask, params):
    B, S = y_tokens.shape
    D = x.shape[-1]
    tok3 = y_tokens.reshape(B, 1, S).astype(jnp.int32)
    pe = params['pe'][:S]                      # handles S < max_sequence_len

    args = (tok3, x, self_mask, cross_mask, params['emb'], pe,
            params['w_qkv_heads'], params['w_out_heads'],
            params['w_f1'], params['w_f2'],
            params['head_b'], params['vec_b'])

    in_specs = [
        pl.BlockSpec((1, 1, S), lambda b: (b, 0, 0)),                     # tokens
        pl.BlockSpec((1, S, D), lambda b: (b, 0, 0)),                     # x
        pl.BlockSpec((1, S, S), lambda b: (b, 0, 0)),                     # self mask
        pl.BlockSpec((1, S, S), lambda b: (b, 0, 0)),                     # cross mask
        pl.BlockSpec(params['emb'].shape, lambda b: (0, 0)),              # emb table
        pl.BlockSpec(pe.shape, lambda b: (0, 0)),                         # pos enc
        pl.BlockSpec(params['w_qkv_heads'].shape, lambda b: (0, 0, 0, 0, 0)),
        pl.BlockSpec(params['w_out_heads'].shape, lambda b: (0, 0, 0, 0, 0)),
        pl.BlockSpec(params['w_f1'].shape, lambda b: (0, 0, 0)),
        pl.BlockSpec(params['w_f2'].shape, lambda b: (0, 0, 0)),
        pl.BlockSpec(params['head_b'].shape, lambda b: (0, 0, 0, 0)),
        pl.BlockSpec(params['vec_b'].shape, lambda b: (0, 0, 0)),
    ]
    out_spec = pl.BlockSpec((1, S, D), lambda b: (b, 0, 0))

    return pl.pallas_call(
        decoder_kernel,
        out_shape=jax.ShapeDtypeStruct((B, S, D), jnp.float32),
        grid_spec=pltpu.PrefetchScalarGridSpec(
            num_scalar_prefetch=0, grid=(B,),
            in_specs=in_specs, out_specs=out_spec),
        compiler_params=pltpu.CompilerParams(
            dimension_semantics=("parallel",)),
    )(*args)


# ----------------------------------------------------------------------------
# Host-side parameter construction (deterministic, synthetic)
# ----------------------------------------------------------------------------
def sinusoidal_pe(max_seq, d_model):
    pos = jnp.arange(max_seq, dtype=jnp.float32)[:, None]
    i = jnp.arange(0, d_model, 2, dtype=jnp.float32)[None, :]
    denom = jnp.power(10000.0, i / d_model)
    pe = jnp.stack([jnp.sin(pos / denom), jnp.cos(pos / denom)], axis=-1)
    return pe.reshape(max_seq, d_model).astype(jnp.float32)


def init_params(seed, n_layers, d=MODEL_DIM, f=HIDDEN_FC, h=N_HEADS,
                vocab=VOCAB, max_seq=MAX_SEQ):
    dh = d // h
    inv_sqrt_dh = 1.0 / math.sqrt(dh)
    ws = 0.02
    key = jax.random.PRNGKey(seed)
    k_emb, k_layers = jax.random.split(key)
    emb = jax.random.normal(k_emb, (vocab, d), jnp.float32) * ws
    pe = sinusoidal_pe(max_seq, d)

    def heads_in(W):   # (d, d) -> (h, d, dh): per-head column slices (trace time)
        return jnp.transpose(W.reshape(d, h, dh), (1, 0, 2))

    def heads_out(W):  # (d, d) -> (h, dh, d): per-head rows of output projection
        return W.reshape(h, dh, d)

    wqkv_l, wout_l, wf1_l, wf2_l, hb_l, vb_l = [], [], [], [], [], []
    for kl in jax.random.split(k_layers, n_layers):
        km = jax.random.split(kl, 20)

        def nrm(i, shape):
            return jax.random.normal(km[i], shape, jnp.float32) * ws

        Wq_s, Wk_s, Wv_s, Wo_s = nrm(0, (d, d)), nrm(1, (d, d)), nrm(2, (d, d)), nrm(3, (d, d))
        Wq_c, Wk_c, Wv_c, Wo_c = nrm(4, (d, d)), nrm(5, (d, d)), nrm(6, (d, d)), nrm(7, (d, d))
        Wf1, Wf2 = nrm(8, (d, f)), nrm(9, (f, d))
        bq_s, bk_s, bv_s, bo_s = nrm(10, (d,)), nrm(11, (d,)), nrm(12, (d,)), nrm(13, (d,))
        bq_c, bk_c, bv_c, bo_c = nrm(14, (d,)), nrm(15, (d,)), nrm(16, (d,)), nrm(17, (d,))
        bf1, bf2 = nrm(18, (f,)), nrm(19, (d,))

        # scale folded into Wq/bq (self slot 0..2, cross slot 3..5)
        wqkv_l.append(jnp.stack([
            heads_in(Wq_s) * inv_sqrt_dh, heads_in(Wk_s), heads_in(Wv_s),
            heads_in(Wq_c) * inv_sqrt_dh, heads_in(Wk_c), heads_in(Wv_c)], axis=0))
        wout_l.append(jnp.stack([heads_out(Wo_s), heads_out(Wo_c)], axis=0))
        wf1_l.append(Wf1)
        wf2_l.append(Wf2)
        hb_l.append(jnp.stack([
            bq_s.reshape(h, dh) * inv_sqrt_dh, bk_s.reshape(h, dh), bv_s.reshape(h, dh),
            bq_c.reshape(h, dh) * inv_sqrt_dh, bk_c.reshape(h, dh), bv_c.reshape(h, dh)],
            axis=0))

        # packed small vectors: [b_so, b_co, b_f1, b_f2, g1, be1, g2, be2, g3, be3]
        vb = jnp.zeros((10, f), jnp.float32)
        vb = vb.at[0, :d].set(bo_s)
        vb = vb.at[1, :d].set(bo_c)
        vb = vb.at[2, :].set(bf1)
        vb = vb.at[3, :d].set(bf2)
        vb = vb.at[4, :d].set(jnp.ones((d,), jnp.float32))   # ln1 gamma (beta = 0)
        vb = vb.at[6, :d].set(jnp.ones((d,), jnp.float32))   # ln2 gamma
        vb = vb.at[8, :d].set(jnp.ones((d,), jnp.float32))   # ln3 gamma
        vb_l.append(vb)

    return {
        'emb': emb, 'pe': pe,
        'w_qkv_heads': jnp.stack(wqkv_l),   # (L, 6, H, D, dh)
        'w_out_heads': jnp.stack(wout_l),   # (L, 2, H, dh, D)
        'w_f1': jnp.stack(wf1_l),           # (L, D, F)
        'w_f2': jnp.stack(wf2_l),           # (L, F, D)
        'head_b': jnp.stack(hb_l),          # (L, 6, H, dh)
        'vec_b': jnp.stack(vb_l),           # (L, 10, F)
    }


class PallasDecoder:
    def __init__(self, model_dim, hidden_fc, n_heads, max_seq, vocab,
                 n_layers=1, seed=0):
        assert model_dim == MODEL_DIM and n_heads == N_HEADS
        self.params = init_params(seed, n_layers, model_dim, hidden_fc,
                                  n_heads, vocab, max_seq)

    def __call__(self, x, y_tokens, self_attention_mask, cross_attention_mask,
                 start_token=True, end_token=True):
        return run_decoder(y_tokens, x, self_attention_mask,
                           cross_attention_mask, self.params)


if __name__ == "__main__":
    B, S = 2, MAX_SEQ
    key = jax.random.PRNGKey(0)
    kx, kt = jax.random.split(key)

    # encoder output and decoder-side token ids
    x = jax.random.normal(kx, (B, S, MODEL_DIM), jnp.float32)
    y_tokens = jax.random.randint(kt, (B, S), 0, VOCAB, dtype=jnp.int32)

    # additive masks (0 = keep, -1e9 = mask); causal for self-attention
    causal = jnp.where(
        jnp.arange(S)[:, None] >= jnp.arange(S)[None, :], 0.0, NEG_INF
    ).astype(jnp.float32)
    self_mask = jnp.broadcast_to(causal, (B, S, S))
    cross_mask = jnp.zeros((B, S, S), jnp.float32)

    decoder = PallasDecoder(MODEL_DIM, HIDDEN_FC, N_HEADS, MAX_SEQ, VOCAB,
                            n_layers=1, seed=0)
    out = decoder(x, y_tokens, self_mask, cross_mask,
                  start_token=True, end_token=True)
    jax.block_until_ready(out)
    assert out.shape == (B, S, MODEL_DIM) and out.dtype == jnp.float32
    print("KERNEL_OK")
</pallas_src>

<mosaic_0001>
module attributes {stable_mosaic.version = 11 : i64} {
  func.func @decoder_kernel(%arg0: i32, %arg1: memref<1x1x8xi32, #tpu.memory_space<vmem>>, %arg2: memref<1x8x32xf32, #tpu.memory_space<vmem>>, %arg3: memref<1x8x8xf32, #tpu.memory_space<vmem>>, %arg4: memref<1x8x8xf32, #tpu.memory_space<vmem>>, %arg5: memref<16x32xf32, #tpu.memory_space<vmem>>, %arg6: memref<8x32xf32, #tpu.memory_space<vmem>>, %arg7: memref<1x6x4x32x8xf32, #tpu.memory_space<vmem>>, %arg8: memref<1x2x4x8x32xf32, #tpu.memory_space<vmem>>, %arg9: memref<1x32x64xf32, #tpu.memory_space<vmem>>, %arg10: memref<1x64x32xf32, #tpu.memory_space<vmem>>, %arg11: memref<1x6x4x8xf32, #tpu.memory_space<vmem>>, %arg12: memref<1x10x64xf32, #tpu.memory_space<vmem>>, %arg13: memref<1x8x32xf32, #tpu.memory_space<vmem>>) attributes {dimension_semantics = [#tpu.dimension_semantics<parallel>], iteration_bounds = array<i64: 2>, scalar_prefetch = 0 : i64, scratch_operands = 0 : i64, tpu.core_type = #tpu.core_type<tc>, window_params = [{transform_indices = @transform_0, window_bounds = array<i64: 1, 1, 8>}, {transform_indices = @transform_1, window_bounds = array<i64: 1, 8, 32>}, {transform_indices = @transform_2, window_bounds = array<i64: 1, 8, 8>}, {transform_indices = @transform_3, window_bounds = array<i64: 1, 8, 8>}, {pipeline_mode = #tpu.pipeline_mode<synchronous>, transform_indices = @transform_4, window_bounds = array<i64: 16, 32>}, {pipeline_mode = #tpu.pipeline_mode<synchronous>, transform_indices = @transform_5, window_bounds = array<i64: 8, 32>}, {pipeline_mode = #tpu.pipeline_mode<synchronous>, transform_indices = @transform_6, window_bounds = array<i64: 1, 6, 4, 32, 8>}, {pipeline_mode = #tpu.pipeline_mode<synchronous>, transform_indices = @transform_7, window_bounds = array<i64: 1, 2, 4, 8, 32>}, {pipeline_mode = #tpu.pipeline_mode<synchronous>, transform_indices = @transform_8, window_bounds = array<i64: 1, 32, 64>}, {pipeline_mode = #tpu.pipeline_mode<synchronous>, transform_indices = @transform_9, window_bounds = array<i64: 1, 64, 32>}, {pipeline_mode = #tpu.pipeline_mode<synchronous>, transform_indices = @transform_10, window_bounds = array<i64: 1, 6, 4, 8>}, {pipeline_mode = #tpu.pipeline_mode<synchronous>, transform_indices = @transform_11, window_bounds = array<i64: 1, 10, 64>}, {transform_indices = @transform_12, window_bounds = array<i64: 1, 8, 32>}]} {
    %c0 = arith.constant 0 : index
    %c0_0 = arith.constant 0 : index
    %c0_1 = arith.constant 0 : index
    %0 = vector.load %arg1[%c0, %c0_0, %c0_1] : memref<1x1x8xi32, #tpu.memory_space<vmem>>, vector<1x1x8xi32>
    %1 = vector.shape_cast %0 : vector<1x1x8xi32> to vector<8x1xi32>
    %2 = tpu.iota {dimensions = array<i32: 1>} : vector<8x16xi32>
    %3 = vector.broadcast %1 : vector<8x1xi32> to vector<8x16xi32>
    %4 = arith.cmpi eq, %3, %2 : vector<8x16xi32>
    %5 = arith.extui %4 : vector<8x16xi1> to vector<8x16xi32>
    %6 = arith.sitofp %5 : vector<8x16xi32> to vector<8x16xf32>
    %c0_2 = arith.constant 0 : index
    %c0_3 = arith.constant 0 : index
    %7 = vector.load %arg5[%c0_2, %c0_3] : memref<16x32xf32, #tpu.memory_space<vmem>>, vector<16x32xf32>
    %cst = arith.constant dense<0.000000e+00> : vector<8x32xf32>
    %8 = tpu.matmul %6, %7, %cst {dimension_numbers = #tpu.dot_dimension_numbers<[1], [0], [0], [1], [0, 0, 1, 1], [], []>} : vector<8x16xf32>, vector<16x32xf32>, vector<8x32xf32> -> vector<8x32xf32>
    %c0_4 = arith.constant 0 : index
    %c0_5 = arith.constant 0 : index
    %9 = vector.load %arg6[%c0_4, %c0_5] : memref<8x32xf32, #tpu.memory_space<vmem>>, vector<8x32xf32>
    %10 = arith.addf %8, %9 : vector<8x32xf32>
    %c0_6 = arith.constant 0 : index
    %c0_7 = arith.constant 0 : index
    %c0_8 = arith.constant 0 : index
    %11 = vector.load %arg2[%c0_6, %c0_7, %c0_8] : memref<1x8x32xf32, #tpu.memory_space<vmem>>, vector<1x8x32xf32>
    %12 = vector.shape_cast %11 : vector<1x8x32xf32> to vector<8x32xf32>
    %c0_9 = arith.constant 0 : index
    %c0_10 = arith.constant 0 : index
    %c0_11 = arith.constant 0 : index
    %13 = vector.load %arg3[%c0_9, %c0_10, %c0_11] : memref<1x8x8xf32, #tpu.memory_space<vmem>>, vector<1x8x8xf32>
    %14 = vector.shape_cast %13 : vector<1x8x8xf32> to vector<8x8xf32>
    %c0_12 = arith.constant 0 : index
    %c0_13 = arith.constant 0 : index
    %c0_14 = arith.constant 0 : index
    %15 = vector.load %arg4[%c0_12, %c0_13, %c0_14] : memref<1x8x8xf32, #tpu.memory_space<vmem>>, vector<1x8x8xf32>
    %16 = vector.shape_cast %15 : vector<1x8x8xf32> to vector<8x8xf32>
    %c0_15 = arith.constant 0 : index
    %c0_16 = arith.constant 0 : index
    %c0_17 = arith.constant 0 : index
    %17 = vector.load %arg12[%c0_15, %c0_16, %c0_17] : memref<1x10x64xf32, #tpu.memory_space<vmem>>, vector<1x1x32xf32>
    %18 = vector.shape_cast %17 : vector<1x1x32xf32> to vector<32xf32>
    %19 = vector.shape_cast %18 : vector<32xf32> to vector<1x32xf32>
    %c0_18 = arith.constant 0 : index
    %c1 = arith.constant 1 : index
    %c0_19 = arith.constant 0 : index
    %20 = vector.load %arg12[%c0_18, %c1, %c0_19] : memref<1x10x64xf32, #tpu.memory_space<vmem>>, vector<1x1x32xf32>
    %21 = vector.shape_cast %20 : vector<1x1x32xf32> to vector<32xf32>
    %22 = vector.shape_cast %21 : vector<32xf32> to vector<1x32xf32>
    %c0_20 = arith.constant 0 : index
    %c2 = arith.constant 2 : index
    %c0_21 = arith.constant 0 : index
    %23 = vector.load %arg12[%c0_20, %c2, %c0_21] : memref<1x10x64xf32, #tpu.memory_space<vmem>>, vector<1x1x64xf32>
    %24 = vector.shape_cast %23 : vector<1x1x64xf32> to vector<64xf32>
    %25 = vector.shape_cast %24 : vector<64xf32> to vector<1x64xf32>
    %c0_22 = arith.constant 0 : index
    %c3 = arith.constant 3 : index
    %c0_23 = arith.constant 0 : index
    %26 = vector.load %arg12[%c0_22, %c3, %c0_23] : memref<1x10x64xf32, #tpu.memory_space<vmem>>, vector<1x1x32xf32>
    %27 = vector.shape_cast %26 : vector<1x1x32xf32> to vector<32xf32>
    %28 = vector.shape_cast %27 : vector<32xf32> to vector<1x32xf32>
    %c0_24 = arith.constant 0 : index
    %c4 = arith.constant 4 : index
    %c0_25 = arith.constant 0 : index
    %29 = vector.load %arg12[%c0_24, %c4, %c0_25] : memref<1x10x64xf32, #tpu.memory_space<vmem>>, vector<1x1x32xf32>
    %30 = vector.shape_cast %29 : vector<1x1x32xf32> to vector<32xf32>
    %31 = vector.shape_cast %30 : vector<32xf32> to vector<1x32xf32>
    %c0_26 = arith.constant 0 : index
    %c5 = arith.constant 5 : index
    %c0_27 = arith.constant 0 : index
    %32 = vector.load %arg12[%c0_26, %c5, %c0_27] : memref<1x10x64xf32, #tpu.memory_space<vmem>>, vector<1x1x32xf32>
    %33 = vector.shape_cast %32 : vector<1x1x32xf32> to vector<32xf32>
    %34 = vector.shape_cast %33 : vector<32xf32> to vector<1x32xf32>
    %c0_28 = arith.constant 0 : index
    %c6 = arith.constant 6 : index
    %c0_29 = arith.constant 0 : index
    %35 = vector.load %arg12[%c0_28, %c6, %c0_29] : memref<1x10x64xf32, #tpu.memory_space<vmem>>, vector<1x1x32xf32>
    %36 = vector.shape_cast %35 : vector<1x1x32xf32> to vector<32xf32>
    %37 = vector.shape_cast %36 : vector<32xf32> to vector<1x32xf32>
    %c0_30 = arith.constant 0 : index
    %c7 = arith.constant 7 : index
    %c0_31 = arith.constant 0 : index
    %38 = vector.load %arg12[%c0_30, %c7, %c0_31] : memref<1x10x64xf32, #tpu.memory_space<vmem>>, vector<1x1x32xf32>
    %39 = vector.shape_cast %38 : vector<1x1x32xf32> to vector<32xf32>
    %40 = vector.shape_cast %39 : vector<32xf32> to vector<1x32xf32>
    %c0_32 = arith.constant 0 : index
    %c8 = arith.constant 8 : index
    %c0_33 = arith.constant 0 : index
    %41 = vector.load %arg12[%c0_32, %c8, %c0_33] : memref<1x10x64xf32, #tpu.memory_space<vmem>>, vector<1x1x32xf32>
    %42 = vector.shape_cast %41 : vector<1x1x32xf32> to vector<32xf32>
    %43 = vector.shape_cast %42 : vector<32xf32> to vector<1x32xf32>
    %c0_34 = arith.constant 0 : index
    %c9 = arith.constant 9 : index
    %c0_35 = arith.constant 0 : index
    %44 = vector.load %arg12[%c0_34, %c9, %c0_35] : memref<1x10x64xf32, #tpu.memory_space<vmem>>, vector<1x1x32xf32>
    %45 = vector.shape_cast %44 : vector<1x1x32xf32> to vector<32xf32>
    %46 = vector.shape_cast %45 : vector<32xf32> to vector<1x32xf32>
    %c0_36 = arith.constant 0 : index
    %c0_37 = arith.constant 0 : index
    %c0_38 = arith.constant 0 : index
    %c0_39 = arith.constant 0 : index
    %c0_40 = arith.constant 0 : index
    %47 = vector.load %arg7[%c0_36, %c0_37, %c0_38, %c0_39, %c0_40] : memref<1x6x4x32x8xf32, #tpu.memory_space<vmem>>, vector<1x1x1x32x8xf32>
    %48 = vector.shape_cast %47 : vector<1x1x1x32x8xf32> to vector<32x8xf32>
    %c0_41 = arith.constant 0 : index
    %c1_42 = arith.constant 1 : index
    %c0_43 = arith.constant 0 : index
    %c0_44 = arith.constant 0 : index
    %c0_45 = arith.constant 0 : index
    %49 = vector.load %arg7[%c0_41, %c1_42, %c0_43, %c0_44, %c0_45] : memref<1x6x4x32x8xf32, #tpu.memory_space<vmem>>, vector<1x1x1x32x8xf32>
    %50 = vector.shape_cast %49 : vector<1x1x1x32x8xf32> to vector<32x8xf32>
    %c0_46 = arith.constant 0 : index
    %c2_47 = arith.constant 2 : index
    %c0_48 = arith.constant 0 : index
    %c0_49 = arith.constant 0 : index
    %c0_50 = arith.constant 0 : index
    %51 = vector.load %arg7[%c0_46, %c2_47, %c0_48, %c0_49, %c0_50] : memref<1x6x4x32x8xf32, #tpu.memory_space<vmem>>, vector<1x1x1x32x8xf32>
    %52 = vector.shape_cast %51 : vector<1x1x1x32x8xf32> to vector<32x8xf32>
    %c0_51 = arith.constant 0 : index
    %c0_52 = arith.constant 0 : index
    %c0_53 = arith.constant 0 : index
    %c0_54 = arith.constant 0 : index
    %53 = vector.load %arg11[%c0_51, %c0_52, %c0_53, %c0_54] : memref<1x6x4x8xf32, #tpu.memory_space<vmem>>, vector<1x1x1x8xf32>
    %54 = vector.shape_cast %53 : vector<1x1x1x8xf32> to vector<8xf32>
    %55 = vector.shape_cast %54 : vector<8xf32> to vector<1x8xf32>
    %c0_55 = arith.constant 0 : index
    %c1_56 = arith.constant 1 : index
    %c0_57 = arith.constant 0 : index
    %c0_58 = arith.constant 0 : index
    %56 = vector.load %arg11[%c0_55, %c1_56, %c0_57, %c0_58] : memref<1x6x4x8xf32, #tpu.memory_space<vmem>>, vector<1x1x1x8xf32>
    %57 = vector.shape_cast %56 : vector<1x1x1x8xf32> to vector<8xf32>
    %58 = vector.shape_cast %57 : vector<8xf32> to vector<1x8xf32>
    %c0_59 = arith.constant 0 : index
    %c2_60 = arith.constant 2 : index
    %c0_61 = arith.constant 0 : index
    %c0_62 = arith.constant 0 : index
    %59 = vector.load %arg11[%c0_59, %c2_60, %c0_61, %c0_62] : memref<1x6x4x8xf32, #tpu.memory_space<vmem>>, vector<1x1x1x8xf32>
    %60 = vector.shape_cast %59 : vector<1x1x1x8xf32> to vector<8xf32>
    %61 = vector.shape_cast %60 : vector<8xf32> to vector<1x8xf32>
    %cst_63 = arith.constant dense<0.000000e+00> : vector<8x8xf32>
    %62 = tpu.matmul %10, %48, %cst_63 {dimension_numbers = #tpu.dot_dimension_numbers<[1], [0], [0], [1], [0, 0, 1, 1], [], []>} : vector<8x32xf32>, vector<32x8xf32>, vector<8x8xf32> -> vector<8x8xf32>
    %63 = vector.broadcast %55 : vector<1x8xf32> to vector<8x8xf32>
    %64 = arith.addf %62, %63 : vector<8x8xf32>
    %cst_64 = arith.constant dense<0.000000e+00> : vector<8x8xf32>
    %65 = tpu.matmul %10, %50, %cst_64 {dimension_numbers = #tpu.dot_dimension_numbers<[1], [0], [0], [1], [0, 0, 1, 1], [], []>} : vector<8x32xf32>, vector<32x8xf32>, vector<8x8xf32> -> vector<8x8xf32>
    %66 = vector.broadcast %58 : vector<1x8xf32> to vector<8x8xf32>
    %67 = arith.addf %65, %66 : vector<8x8xf32>
    %cst_65 = arith.constant dense<0.000000e+00> : vector<8x8xf32>
    %68 = tpu.matmul %10, %52, %cst_65 {dimension_numbers = #tpu.dot_dimension_numbers<[1], [0], [0], [1], [0, 0, 1, 1], [], []>} : vector<8x32xf32>, vector<32x8xf32>, vector<8x8xf32> -> vector<8x8xf32>
    %69 = vector.broadcast %61 : vector<1x8xf32> to vector<8x8xf32>
    %70 = arith.addf %68, %69 : vector<8x8xf32>
    %cst_66 = arith.constant dense<0.000000e+00> : vector<8x8xf32>
    %71 = tpu.matmul %64, %67, %cst_66 {dimension_numbers = #tpu.dot_dimension_numbers<[1], [1], [0], [0], [0, 0, 1, 0], [], []>} : vector<8x8xf32>, vector<8x8xf32>, vector<8x8xf32> -> vector<8x8xf32>
    %72 = arith.addf %71, %14 : vector<8x8xf32>
    %cst_67 = arith.constant dense<0xFF800000> : vector<8xf32>
    %73 = vector.multi_reduction <maximumf>, %72, %cst_67 [1] : vector<8x8xf32> to vector<8xf32>
    %74 = vector.shape_cast %73 : vector<8xf32> to vector<8x1xf32>
    %75 = vector.broadcast %74 : vector<8x1xf32> to vector<8x8xf32>
    %76 = arith.subf %72, %75 : vector<8x8xf32>
    %77 = math.exp %76 : vector<8x8xf32>
    %cst_68 = arith.constant dense<0.000000e+00> : vector<8xf32>
    %78 = vector.multi_reduction <add>, %77, %cst_68 [1] : vector<8x8xf32> to vector<8xf32>
    %79 = vector.shape_cast %78 : vector<8xf32> to vector<8x1xf32>
    %80 = tpu.reciprocal %79 {approx = true} : vector<8x1xf32> -> vector<8x1xf32>
    %81 = vector.broadcast %80 : vector<8x1xf32> to vector<8x8xf32>
    %82 = arith.mulf %77, %81 : vector<8x8xf32>
    %cst_69 = arith.constant dense<0.000000e+00> : vector<8x8xf32>
    %83 = tpu.matmul %82, %70, %cst_69 {dimension_numbers = #tpu.dot_dimension_numbers<[1], [0], [0], [1], [0, 0, 1, 1], [], []>} : vector<8x8xf32>, vector<8x8xf32>, vector<8x8xf32> -> vector<8x8xf32>
    %c0_70 = arith.constant 0 : index
    %c0_71 = arith.constant 0 : index
    %c0_72 = arith.constant 0 : index
    %c0_73 = arith.constant 0 : index
    %c0_74 = arith.constant 0 : index
    %84 = vector.load %arg8[%c0_70, %c0_71, %c0_72, %c0_73, %c0_74] : memref<1x2x4x8x32xf32, #tpu.memory_space<vmem>>, vector<1x1x1x8x32xf32>
    %85 = vector.shape_cast %84 : vector<1x1x1x8x32xf32> to vector<8x32xf32>
    %cst_75 = arith.constant dense<0.000000e+00> : vector<8x32xf32>
    %86 = tpu.matmul %83, %85, %cst_75 {dimension_numbers = #tpu.dot_dimension_numbers<[1], [0], [0], [1], [0, 0, 1, 1], [], []>} : vector<8x8xf32>, vector<8x32xf32>, vector<8x32xf32> -> vector<8x32xf32>
    %c0_76 = arith.constant 0 : index
    %c0_77 = arith.constant 0 : index
    %c1_78 = arith.constant 1 : index
    %c0_79 = arith.constant 0 : index
    %c0_80 = arith.constant 0 : index
    %87 = vector.load %arg7[%c0_76, %c0_77, %c1_78, %c0_79, %c0_80] : memref<1x6x4x32x8xf32, #tpu.memory_space<vmem>>, vector<1x1x1x32x8xf32>
    %88 = vector.shape_cast %87 : vector<1x1x1x32x8xf32> to vector<32x8xf32>
    %c0_81 = arith.constant 0 : index
    %c1_82 = arith.constant 1 : index
    %c1_83 = arith.constant 1 : index
    %c0_84 = arith.constant 0 : index
    %c0_85 = arith.constant 0 : index
    %89 = vector.load %arg7[%c0_81, %c1_82, %c1_83, %c0_84, %c0_85] : memref<1x6x4x32x8xf32, #tpu.memory_space<vmem>>, vector<1x1x1x32x8xf32>
    %90 = vector.shape_cast %89 : vector<1x1x1x32x8xf32> to vector<32x8xf32>
    %c0_86 = arith.constant 0 : index
    %c2_87 = arith.constant 2 : index
    %c1_88 = arith.constant 1 : index
    %c0_89 = arith.constant 0 : index
    %c0_90 = arith.constant 0 : index
    %91 = vector.load %arg7[%c0_86, %c2_87, %c1_88, %c0_89, %c0_90] : memref<1x6x4x32x8xf32, #tpu.memory_space<vmem>>, vector<1x1x1x32x8xf32>
    %92 = vector.shape_cast %91 : vector<1x1x1x32x8xf32> to vector<32x8xf32>
    %c0_91 = arith.constant 0 : index
    %c0_92 = arith.constant 0 : index
    %c1_93 = arith.constant 1 : index
    %c0_94 = arith.constant 0 : index
    %93 = vector.load %arg11[%c0_91, %c0_92, %c1_93, %c0_94] : memref<1x6x4x8xf32, #tpu.memory_space<vmem>>, vector<1x1x1x8xf32>
    %94 = vector.shape_cast %93 : vector<1x1x1x8xf32> to vector<8xf32>
    %95 = vector.shape_cast %94 : vector<8xf32> to vector<1x8xf32>
    %c0_95 = arith.constant 0 : index
    %c1_96 = arith.constant 1 : index
    %c1_97 = arith.constant 1 : index
    %c0_98 = arith.constant 0 : index
    %96 = vector.load %arg11[%c0_95, %c1_96, %c1_97, %c0_98] : memref<1x6x4x8xf32, #tpu.memory_space<vmem>>, vector<1x1x1x8xf32>
    %97 = vector.shape_cast %96 : vector<1x1x1x8xf32> to vector<8xf32>
    %98 = vector.shape_cast %97 : vector<8xf32> to vector<1x8xf32>
    %c0_99 = arith.constant 0 : index
    %c2_100 = arith.constant 2 : index
    %c1_101 = arith.constant 1 : index
    %c0_102 = arith.constant 0 : index
    %99 = vector.load %arg11[%c0_99, %c2_100, %c1_101, %c0_102] : memref<1x6x4x8xf32, #tpu.memory_space<vmem>>, vector<1x1x1x8xf32>
    %100 = vector.shape_cast %99 : vector<1x1x1x8xf32> to vector<8xf32>
    %101 = vector.shape_cast %100 : vector<8xf32> to vector<1x8xf32>
    %cst_103 = arith.constant dense<0.000000e+00> : vector<8x8xf32>
    %102 = tpu.matmul %10, %88, %cst_103 {dimension_numbers = #tpu.dot_dimension_numbers<[1], [0], [0], [1], [0, 0, 1, 1], [], []>} : vector<8x32xf32>, vector<32x8xf32>, vector<8x8xf32> -> vector<8x8xf32>
    %103 = vector.broadcast %95 : vector<1x8xf32> to vector<8x8xf32>
    %104 = arith.addf %102, %103 : vector<8x8xf32>
    %cst_104 = arith.constant dense<0.000000e+00> : vector<8x8xf32>
    %105 = tpu.matmul %10, %90, %cst_104 {dimension_numbers = #tpu.dot_dimension_numbers<[1], [0], [0], [1], [0, 0, 1, 1], [], []>} : vector<8x32xf32>, vector<32x8xf32>, vector<8x8xf32> -> vector<8x8xf32>
    %106 = vector.broadcast %98 : vector<1x8xf32> to vector<8x8xf32>
    %107 = arith.addf %105, %106 : vector<8x8xf32>
    %cst_105 = arith.constant dense<0.000000e+00> : vector<8x8xf32>
    %108 = tpu.matmul %10, %92, %cst_105 {dimension_numbers = #tpu.dot_dimension_numbers<[1], [0], [0], [1], [0, 0, 1, 1], [], []>} : vector<8x32xf32>, vector<32x8xf32>, vector<8x8xf32> -> vector<8x8xf32>
    %109 = vector.broadcast %101 : vector<1x8xf32> to vector<8x8xf32>
    %110 = arith.addf %108, %109 : vector<8x8xf32>
    %cst_106 = arith.constant dense<0.000000e+00> : vector<8x8xf32>
    %111 = tpu.matmul %104, %107, %cst_106 {dimension_numbers = #tpu.dot_dimension_numbers<[1], [1], [0], [0], [0, 0, 1, 0], [], []>} : vector<8x8xf32>, vector<8x8xf32>, vector<8x8xf32> -> vector<8x8xf32>
    %112 = arith.addf %111, %14 : vector<8x8xf32>
    %cst_107 = arith.constant dense<0xFF800000> : vector<8xf32>
    %113 = vector.multi_reduction <maximumf>, %112, %cst_107 [1] : vector<8x8xf32> to vector<8xf32>
    %114 = vector.shape_cast %113 : vector<8xf32> to vector<8x1xf32>
    %115 = vector.broadcast %114 : vector<8x1xf32> to vector<8x8xf32>
    %116 = arith.subf %112, %115 : vector<8x8xf32>
    %117 = math.exp %116 : vector<8x8xf32>
    %cst_108 = arith.constant dense<0.000000e+00> : vector<8xf32>
    %118 = vector.multi_reduction <add>, %117, %cst_108 [1] : vector<8x8xf32> to vector<8xf32>
    %119 = vector.shape_cast %118 : vector<8xf32> to vector<8x1xf32>
    %120 = tpu.reciprocal %119 {approx = true} : vector<8x1xf32> -> vector<8x1xf32>
    %121 = vector.broadcast %120 : vector<8x1xf32> to vector<8x8xf32>
    %122 = arith.mulf %117, %121 : vector<8x8xf32>
    %cst_109 = arith.constant dense<0.000000e+00> : vector<8x8xf32>
    %123 = tpu.matmul %122, %110, %cst_109 {dimension_numbers = #tpu.dot_dimension_numbers<[1], [0], [0], [1], [0, 0, 1, 1], [], []>} : vector<8x8xf32>, vector<8x8xf32>, vector<8x8xf32> -> vector<8x8xf32>
    %c0_110 = arith.constant 0 : index
    %c0_111 = arith.constant 0 : index
    %c1_112 = arith.constant 1 : index
    %c0_113 = arith.constant 0 : index
    %c0_114 = arith.constant 0 : index
    %124 = vector.load %arg8[%c0_110, %c0_111, %c1_112, %c0_113, %c0_114] : memref<1x2x4x8x32xf32, #tpu.memory_space<vmem>>, vector<1x1x1x8x32xf32>
    %125 = vector.shape_cast %124 : vector<1x1x1x8x32xf32> to vector<8x32xf32>
    %cst_115 = arith.constant dense<0.000000e+00> : vector<8x32xf32>
    %126 = tpu.matmul %123, %125, %cst_115 {dimension_numbers = #tpu.dot_dimension_numbers<[1], [0], [0], [1], [0, 0, 1, 1], [], []>} : vector<8x8xf32>, vector<8x32xf32>, vector<8x32xf32> -> vector<8x32xf32>
    %127 = arith.addf %86, %126 : vector<8x32xf32>
    %c0_116 = arith.constant 0 : index
    %c0_117 = arith.constant 0 : index
    %c2_118 = arith.constant 2 : index
    %c0_119 = arith.constant 0 : index
    %c0_120 = arith.constant 0 : index
    %128 = vector.load %arg7[%c0_116, %c0_117, %c2_118, %c0_119, %c0_120] : memref<1x6x4x32x8xf32, #tpu.memory_space<vmem>>, vector<1x1x1x32x8xf32>
    %129 = vector.shape_cast %128 : vector<1x1x1x32x8xf32> to vector<32x8xf32>
    %c0_121 = arith.constant 0 : index
    %c1_122 = arith.constant 1 : index
    %c2_123 = arith.constant 2 : index
    %c0_124 = arith.constant 0 : index
    %c0_125 = arith.constant 0 : index
    %130 = vector.load %arg7[%c0_121, %c1_122, %c2_123, %c0_124, %c0_125] : memref<1x6x4x32x8xf32, #tpu.memory_space<vmem>>, vector<1x1x1x32x8xf32>
    %131 = vector.shape_cast %130 : vector<1x1x1x32x8xf32> to vector<32x8xf32>
    %c0_126 = arith.constant 0 : index
    %c2_127 = arith.constant 2 : index
    %c2_128 = arith.constant 2 : index
    %c0_129 = arith.constant 0 : index
    %c0_130 = arith.constant 0 : index
    %132 = vector.load %arg7[%c0_126, %c2_127, %c2_128, %c0_129, %c0_130] : memref<1x6x4x32x8xf32, #tpu.memory_space<vmem>>, vector<1x1x1x32x8xf32>
    %133 = vector.shape_cast %132 : vector<1x1x1x32x8xf32> to vector<32x8xf32>
    %c0_131 = arith.constant 0 : index
    %c0_132 = arith.constant 0 : index
    %c2_133 = arith.constant 2 : index
    %c0_134 = arith.constant 0 : index
    %134 = vector.load %arg11[%c0_131, %c0_132, %c2_133, %c0_134] : memref<1x6x4x8xf32, #tpu.memory_space<vmem>>, vector<1x1x1x8xf32>
    %135 = vector.shape_cast %134 : vector<1x1x1x8xf32> to vector<8xf32>
    %136 = vector.shape_cast %135 : vector<8xf32> to vector<1x8xf32>
    %c0_135 = arith.constant 0 : index
    %c1_136 = arith.constant 1 : index
    %c2_137 = arith.constant 2 : index
    %c0_138 = arith.constant 0 : index
    %137 = vector.load %arg11[%c0_135, %c1_136, %c2_137, %c0_138] : memref<1x6x4x8xf32, #tpu.memory_space<vmem>>, vector<1x1x1x8xf32>
    %138 = vector.shape_cast %137 : vector<1x1x1x8xf32> to vector<8xf32>
    %139 = vector.shape_cast %138 : vector<8xf32> to vector<1x8xf32>
    %c0_139 = arith.constant 0 : index
    %c2_140 = arith.constant 2 : index
    %c2_141 = arith.constant 2 : index
    %c0_142 = arith.constant 0 : index
    %140 = vector.load %arg11[%c0_139, %c2_140, %c2_141, %c0_142] : memref<1x6x4x8xf32, #tpu.memory_space<vmem>>, vector<1x1x1x8xf32>
    %141 = vector.shape_cast %140 : vector<1x1x1x8xf32> to vector<8xf32>
    %142 = vector.shape_cast %141 : vector<8xf32> to vector<1x8xf32>
    %cst_143 = arith.constant dense<0.000000e+00> : vector<8x8xf32>
    %143 = tpu.matmul %10, %129, %cst_143 {dimension_numbers = #tpu.dot_dimension_numbers<[1], [0], [0], [1], [0, 0, 1, 1], [], []>} : vector<8x32xf32>, vector<32x8xf32>, vector<8x8xf32> -> vector<8x8xf32>
    %144 = vector.broadcast %136 : vector<1x8xf32> to vector<8x8xf32>
    %145 = arith.addf %143, %144 : vector<8x8xf32>
    %cst_144 = arith.constant dense<0.000000e+00> : vector<8x8xf32>
    %146 = tpu.matmul %10, %131, %cst_144 {dimension_numbers = #tpu.dot_dimension_numbers<[1], [0], [0], [1], [0, 0, 1, 1], [], []>} : vector<8x32xf32>, vector<32x8xf32>, vector<8x8xf32> -> vector<8x8xf32>
    %147 = vector.broadcast %139 : vector<1x8xf32> to vector<8x8xf32>
    %148 = arith.addf %146, %147 : vector<8x8xf32>
    %cst_145 = arith.constant dense<0.000000e+00> : vector<8x8xf32>
    %149 = tpu.matmul %10, %133, %cst_145 {dimension_numbers = #tpu.dot_dimension_numbers<[1], [0], [0], [1], [0, 0, 1, 1], [], []>} : vector<8x32xf32>, vector<32x8xf32>, vector<8x8xf32> -> vector<8x8xf32>
    %150 = vector.broadcast %142 : vector<1x8xf32> to vector<8x8xf32>
    %151 = arith.addf %149, %150 : vector<8x8xf32>
    %cst_146 = arith.constant dense<0.000000e+00> : vector<8x8xf32>
    %152 = tpu.matmul %145, %148, %cst_146 {dimension_numbers = #tpu.dot_dimension_numbers<[1], [1], [0], [0], [0, 0, 1, 0], [], []>} : vector<8x8xf32>, vector<8x8xf32>, vector<8x8xf32> -> vector<8x8xf32>
    %153 = arith.addf %152, %14 : vector<8x8xf32>
    %cst_147 = arith.constant dense<0xFF800000> : vector<8xf32>
    %154 = vector.multi_reduction <maximumf>, %153, %cst_147 [1] : vector<8x8xf32> to vector<8xf32>
    %155 = vector.shape_cast %154 : vector<8xf32> to vector<8x1xf32>
    %156 = vector.broadcast %155 : vector<8x1xf32> to vector<8x8xf32>
    %157 = arith.subf %153, %156 : vector<8x8xf32>
    %158 = math.exp %157 : vector<8x8xf32>
    %cst_148 = arith.constant dense<0.000000e+00> : vector<8xf32>
    %159 = vector.multi_reduction <add>, %158, %cst_148 [1] : vector<8x8xf32> to vector<8xf32>
    %160 = vector.shape_cast %159 : vector<8xf32> to vector<8x1xf32>
    %161 = tpu.reciprocal %160 {approx = true} : vector<8x1xf32> -> vector<8x1xf32>
    %162 = vector.broadcast %161 : vector<8x1xf32> to vector<8x8xf32>
    %163 = arith.mulf %158, %162 : vector<8x8xf32>
    %cst_149 = arith.constant dense<0.000000e+00> : vector<8x8xf32>
    %164 = tpu.matmul %163, %151, %cst_149 {dimension_numbers = #tpu.dot_dimension_numbers<[1], [0], [0], [1], [0, 0, 1, 1], [], []>} : vector<8x8xf32>, vector<8x8xf32>, vector<8x8xf32> -> vector<8x8xf32>
    %c0_150 = arith.constant 0 : index
    %c0_151 = arith.constant 0 : index
    %c2_152 = arith.constant 2 : index
    %c0_153 = arith.constant 0 : index
    %c0_154 = arith.constant 0 : index
    %165 = vector.load %arg8[%c0_150, %c0_151, %c2_152, %c0_153, %c0_154] : memref<1x2x4x8x32xf32, #tpu.memory_space<vmem>>, vector<1x1x1x8x32xf32>
    %166 = vector.shape_cast %165 : vector<1x1x1x8x32xf32> to vector<8x32xf32>
    %cst_155 = arith.constant dense<0.000000e+00> : vector<8x32xf32>
    %167 = tpu.matmul %164, %166, %cst_155 {dimension_numbers = #tpu.dot_dimension_numbers<[1], [0], [0], [1], [0, 0, 1, 1], [], []>} : vector<8x8xf32>, vector<8x32xf32>, vector<8x32xf32> -> vector<8x32xf32>
    %168 = arith.addf %127, %167 : vector<8x32xf32>
    %c0_156 = arith.constant 0 : index
    %c0_157 = arith.constant 0 : index
    %c3_158 = arith.constant 3 : index
    %c0_159 = arith.constant 0 : index
    %c0_160 = arith.constant 0 : index
    %169 = vector.load %arg7[%c0_156, %c0_157, %c3_158, %c0_159, %c0_160] : memref<1x6x4x32x8xf32, #tpu.memory_space<vmem>>, vector<1x1x1x32x8xf32>
    %170 = vector.shape_cast %169 : vector<1x1x1x32x8xf32> to vector<32x8xf32>
    %c0_161 = arith.constant 0 : index
    %c1_162 = arith.constant 1 : index
    %c3_163 = arith.constant 3 : index
    %c0_164 = arith.constant 0 : index
    %c0_165 = arith.constant 0 : index
    %171 = vector.load %arg7[%c0_161, %c1_162, %c3_163, %c0_164, %c0_165] : memref<1x6x4x32x8xf32, #tpu.memory_space<vmem>>, vector<1x1x1x32x8xf32>
    %172 = vector.shape_cast %171 : vector<1x1x1x32x8xf32> to vector<32x8xf32>
    %c0_166 = arith.constant 0 : index
    %c2_167 = arith.constant 2 : index
    %c3_168 = arith.constant 3 : index
    %c0_169 = arith.constant 0 : index
    %c0_170 = arith.constant 0 : index
    %173 = vector.load %arg7[%c0_166, %c2_167, %c3_168, %c0_169, %c0_170] : memref<1x6x4x32x8xf32, #tpu.memory_space<vmem>>, vector<1x1x1x32x8xf32>
    %174 = vector.shape_cast %173 : vector<1x1x1x32x8xf32> to vector<32x8xf32>
    %c0_171 = arith.constant 0 : index
    %c0_172 = arith.constant 0 : index
    %c3_173 = arith.constant 3 : index
    %c0_174 = arith.constant 0 : index
    %175 = vector.load %arg11[%c0_171, %c0_172, %c3_173, %c0_174] : memref<1x6x4x8xf32, #tpu.memory_space<vmem>>, vector<1x1x1x8xf32>
    %176 = vector.shape_cast %175 : vector<1x1x1x8xf32> to vector<8xf32>
    %177 = vector.shape_cast %176 : vector<8xf32> to vector<1x8xf32>
    %c0_175 = arith.constant 0 : index
    %c1_176 = arith.constant 1 : index
    %c3_177 = arith.constant 3 : index
    %c0_178 = arith.constant 0 : index
    %178 = vector.load %arg11[%c0_175, %c1_176, %c3_177, %c0_178] : memref<1x6x4x8xf32, #tpu.memory_space<vmem>>, vector<1x1x1x8xf32>
    %179 = vector.shape_cast %178 : vector<1x1x1x8xf32> to vector<8xf32>
    %180 = vector.shape_cast %179 : vector<8xf32> to vector<1x8xf32>
    %c0_179 = arith.constant 0 : index
    %c2_180 = arith.constant 2 : index
    %c3_181 = arith.constant 3 : index
    %c0_182 = arith.constant 0 : index
    %181 = vector.load %arg11[%c0_179, %c2_180, %c3_181, %c0_182] : memref<1x6x4x8xf32, #tpu.memory_space<vmem>>, vector<1x1x1x8xf32>
    %182 = vector.shape_cast %181 : vector<1x1x1x8xf32> to vector<8xf32>
    %183 = vector.shape_cast %182 : vector<8xf32> to vector<1x8xf32>
    %cst_183 = arith.constant dense<0.000000e+00> : vector<8x8xf32>
    %184 = tpu.matmul %10, %170, %cst_183 {dimension_numbers = #tpu.dot_dimension_numbers<[1], [0], [0], [1], [0, 0, 1, 1], [], []>} : vector<8x32xf32>, vector<32x8xf32>, vector<8x8xf32> -> vector<8x8xf32>
    %185 = vector.broadcast %177 : vector<1x8xf32> to vector<8x8xf32>
    %186 = arith.addf %184, %185 : vector<8x8xf32>
    %cst_184 = arith.constant dense<0.000000e+00> : vector<8x8xf32>
    %187 = tpu.matmul %10, %172, %cst_184 {dimension_numbers = #tpu.dot_dimension_numbers<[1], [0], [0], [1], [0, 0, 1, 1], [], []>} : vector<8x32xf32>, vector<32x8xf32>, vector<8x8xf32> -> vector<8x8xf32>
    %188 = vector.broadcast %180 : vector<1x8xf32> to vector<8x8xf32>
    %189 = arith.addf %187, %188 : vector<8x8xf32>
    %cst_185 = arith.constant dense<0.000000e+00> : vector<8x8xf32>
    %190 = tpu.matmul %10, %174, %cst_185 {dimension_numbers = #tpu.dot_dimension_numbers<[1], [0], [0], [1], [0, 0, 1, 1], [], []>} : vector<8x32xf32>, vector<32x8xf32>, vector<8x8xf32> -> vector<8x8xf32>
    %191 = vector.broadcast %183 : vector<1x8xf32> to vector<8x8xf32>
    %192 = arith.addf %190, %191 : vector<8x8xf32>
    %cst_186 = arith.constant dense<0.000000e+00> : vector<8x8xf32>
    %193 = tpu.matmul %186, %189, %cst_186 {dimension_numbers = #tpu.dot_dimension_numbers<[1], [1], [0], [0], [0, 0, 1, 0], [], []>} : vector<8x8xf32>, vector<8x8xf32>, vector<8x8xf32> -> vector<8x8xf32>
    %194 = arith.addf %193, %14 : vector<8x8xf32>
    %cst_187 = arith.constant dense<0xFF800000> : vector<8xf32>
    %195 = vector.multi_reduction <maximumf>, %194, %cst_187 [1] : vector<8x8xf32> to vector<8xf32>
    %196 = vector.shape_cast %195 : vector<8xf32> to vector<8x1xf32>
    %197 = vector.broadcast %196 : vector<8x1xf32> to vector<8x8xf32>
    %198 = arith.subf %194, %197 : vector<8x8xf32>
    %199 = math.exp %198 : vector<8x8xf32>
    %cst_188 = arith.constant dense<0.000000e+00> : vector<8xf32>
    %200 = vector.multi_reduction <add>, %199, %cst_188 [1] : vector<8x8xf32> to vector<8xf32>
    %201 = vector.shape_cast %200 : vector<8xf32> to vector<8x1xf32>
    %202 = tpu.reciprocal %201 {approx = true} : vector<8x1xf32> -> vector<8x1xf32>
    %203 = vector.broadcast %202 : vector<8x1xf32> to vector<8x8xf32>
    %204 = arith.mulf %199, %203 : vector<8x8xf32>
    %cst_189 = arith.constant dense<0.000000e+00> : vector<8x8xf32>
    %205 = tpu.matmul %204, %192, %cst_189 {dimension_numbers = #tpu.dot_dimension_numbers<[1], [0], [0], [1], [0, 0, 1, 1], [], []>} : vector<8x8xf32>, vector<8x8xf32>, vector<8x8xf32> -> vector<8x8xf32>
    %c0_190 = arith.constant 0 : index
    %c0_191 = arith.constant 0 : index
    %c3_192 = arith.constant 3 : index
    %c0_193 = arith.constant 0 : index
    %c0_194 = arith.constant 0 : index
    %206 = vector.load %arg8[%c0_190, %c0_191, %c3_192, %c0_193, %c0_194] : memref<1x2x4x8x32xf32, #tpu.memory_space<vmem>>, vector<1x1x1x8x32xf32>
    %207 = vector.shape_cast %206 : vector<1x1x1x8x32xf32> to vector<8x32xf32>
    %cst_195 = arith.constant dense<0.000000e+00> : vector<8x32xf32>
    %208 = tpu.matmul %205, %207, %cst_195 {dimension_numbers = #tpu.dot_dimension_numbers<[1], [0], [0], [1], [0, 0, 1, 1], [], []>} : vector<8x8xf32>, vector<8x32xf32>, vector<8x32xf32> -> vector<8x32xf32>
    %209 = arith.addf %168, %208 : vector<8x32xf32>
    %210 = vector.broadcast %19 : vector<1x32xf32> to vector<8x32xf32>
    %211 = arith.addf %209, %210 : vector<8x32xf32>
    %212 = arith.addf %211, %10 : vector<8x32xf32>
    %cst_196 = arith.constant dense<0.000000e+00> : vector<8xf32>
    %213 = vector.multi_reduction <add>, %212, %cst_196 [1] : vector<8x32xf32> to vector<8xf32>
    %214 = vector.shape_cast %213 : vector<8xf32> to vector<8x1xf32>
    %cst_197 = arith.constant 3.200000e+01 : f32
    %215 = vector.broadcast %cst_197 : f32 to vector<8x1xf32>
    %216 = arith.divf %214, %215 : vector<8x1xf32>
    %217 = arith.mulf %212, %212 : vector<8x32xf32>
    %cst_198 = arith.constant dense<0.000000e+00> : vector<8xf32>
    %218 = vector.multi_reduction <add>, %217, %cst_198 [1] : vector<8x32xf32> to vector<8xf32>
    %219 = vector.shape_cast %218 : vector<8xf32> to vector<8x1xf32>
    %cst_199 = arith.constant 3.200000e+01 : f32
    %220 = vector.broadcast %cst_199 : f32 to vector<8x1xf32>
    %221 = arith.divf %219, %220 : vector<8x1xf32>
    %222 = arith.mulf %216, %216 : vector<8x1xf32>
    %223 = arith.subf %221, %222 : vector<8x1xf32>
    %224 = vector.broadcast %216 : vector<8x1xf32> to vector<8x32xf32>
    %225 = arith.subf %212, %224 : vector<8x32xf32>
    %cst_200 = arith.constant 9.99999974E-6 : f32
    %226 = vector.broadcast %cst_200 : f32 to vector<8x1xf32>
    %227 = arith.addf %223, %226 : vector<8x1xf32>
    %228 = math.rsqrt %227 : vector<8x1xf32>
    %229 = vector.broadcast %228 : vector<8x1xf32> to vector<8x32xf32>
    %230 = arith.mulf %225, %229 : vector<8x32xf32>
    %231 = vector.broadcast %31 : vector<1x32xf32> to vector<8x32xf32>
    %232 = arith.mulf %230, %231 : vector<8x32xf32>
    %233 = vector.broadcast %34 : vector<1x32xf32> to vector<8x32xf32>
    %234 = arith.addf %232, %233 : vector<8x32xf32>
    %c0_201 = arith.constant 0 : index
    %c3_202 = arith.constant 3 : index
    %c0_203 = arith.constant 0 : index
    %c0_204 = arith.constant 0 : index
    %c0_205 = arith.constant 0 : index
    %235 = vector.load %arg7[%c0_201, %c3_202, %c0_203, %c0_204, %c0_205] : memref<1x6x4x32x8xf32, #tpu.memory_space<vmem>>, vector<1x1x1x32x8xf32>
    %236 = vector.shape_cast %235 : vector<1x1x1x32x8xf32> to vector<32x8xf32>
    %c0_206 = arith.constant 0 : index
    %c4_207 = arith.constant 4 : index
    %c0_208 = arith.constant 0 : index
    %c0_209 = arith.constant 0 : index
    %c0_210 = arith.constant 0 : index
    %237 = vector.load %arg7[%c0_206, %c4_207, %c0_208, %c0_209, %c0_210] : memref<1x6x4x32x8xf32, #tpu.memory_space<vmem>>, vector<1x1x1x32x8xf32>
    %238 = vector.shape_cast %237 : vector<1x1x1x32x8xf32> to vector<32x8xf32>
    %c0_211 = arith.constant 0 : index
    %c5_212 = arith.constant 5 : index
    %c0_213 = arith.constant 0 : index
    %c0_214 = arith.constant 0 : index
    %c0_215 = arith.constant 0 : index
    %239 = vector.load %arg7[%c0_211, %c5_212, %c0_213, %c0_214, %c0_215] : memref<1x6x4x32x8xf32, #tpu.memory_space<vmem>>, vector<1x1x1x32x8xf32>
    %240 = vector.shape_cast %239 : vector<1x1x1x32x8xf32> to vector<32x8xf32>
    %c0_216 = arith.constant 0 : index
    %c3_217 = arith.constant 3 : index
    %c0_218 = arith.constant 0 : index
    %c0_219 = arith.constant 0 : index
    %241 = vector.load %arg11[%c0_216, %c3_217, %c0_218, %c0_219] : memref<1x6x4x8xf32, #tpu.memory_space<vmem>>, vector<1x1x1x8xf32>
    %242 = vector.shape_cast %241 : vector<1x1x1x8xf32> to vector<8xf32>
    %243 = vector.shape_cast %242 : vector<8xf32> to vector<1x8xf32>
    %c0_220 = arith.constant 0 : index
    %c4_221 = arith.constant 4 : index
    %c0_222 = arith.constant 0 : index
    %c0_223 = arith.constant 0 : index
    %244 = vector.load %arg11[%c0_220, %c4_221, %c0_222, %c0_223] : memref<1x6x4x8xf32, #tpu.memory_space<vmem>>, vector<1x1x1x8xf32>
    %245 = vector.shape_cast %244 : vector<1x1x1x8xf32> to vector<8xf32>
    %246 = vector.shape_cast %245 : vector<8xf32> to vector<1x8xf32>
    %c0_224 = arith.constant 0 : index
    %c5_225 = arith.constant 5 : index
    %c0_226 = arith.constant 0 : index
    %c0_227 = arith.constant 0 : index
    %247 = vector.load %arg11[%c0_224, %c5_225, %c0_226, %c0_227] : memref<1x6x4x8xf32, #tpu.memory_space<vmem>>, vector<1x1x1x8xf32>
    %248 = vector.shape_cast %247 : vector<1x1x1x8xf32> to vector<8xf32>
    %249 = vector.shape_cast %248 : vector<8xf32> to vector<1x8xf32>
    %cst_228 = arith.constant dense<0.000000e+00> : vector<8x8xf32>
    %250 = tpu.matmul %234, %236, %cst_228 {dimension_numbers = #tpu.dot_dimension_numbers<[1], [0], [0], [1], [0, 0, 1, 1], [], []>} : vector<8x32xf32>, vector<32x8xf32>, vector<8x8xf32> -> vector<8x8xf32>
    %251 = vector.broadcast %243 : vector<1x8xf32> to vector<8x8xf32>
    %252 = arith.addf %250, %251 : vector<8x8xf32>
    %cst_229 = arith.constant dense<0.000000e+00> : vector<8x8xf32>
    %253 = tpu.matmul %12, %238, %cst_229 {dimension_numbers = #tpu.dot_dimension_numbers<[1], [0], [0], [1], [0, 0, 1, 1], [], []>} : vector<8x32xf32>, vector<32x8xf32>, vector<8x8xf32> -> vector<8x8xf32>
    %254 = vector.broadcast %246 : vector<1x8xf32> to vector<8x8xf32>
    %255 = arith.addf %253, %254 : vector<8x8xf32>
    %cst_230 = arith.constant dense<0.000000e+00> : vector<8x8xf32>
    %256 = tpu.matmul %12, %240, %cst_230 {dimension_numbers = #tpu.dot_dimension_numbers<[1], [0], [0], [1], [0, 0, 1, 1], [], []>} : vector<8x32xf32>, vector<32x8xf32>, vector<8x8xf32> -> vector<8x8xf32>
    %257 = vector.broadcast %249 : vector<1x8xf32> to vector<8x8xf32>
    %258 = arith.addf %256, %257 : vector<8x8xf32>
    %cst_231 = arith.constant dense<0.000000e+00> : vector<8x8xf32>
    %259 = tpu.matmul %252, %255, %cst_231 {dimension_numbers = #tpu.dot_dimension_numbers<[1], [1], [0], [0], [0, 0, 1, 0], [], []>} : vector<8x8xf32>, vector<8x8xf32>, vector<8x8xf32> -> vector<8x8xf32>
    %260 = arith.addf %259, %16 : vector<8x8xf32>
    %cst_232 = arith.constant dense<0xFF800000> : vector<8xf32>
    %261 = vector.multi_reduction <maximumf>, %260, %cst_232 [1] : vector<8x8xf32> to vector<8xf32>
    %262 = vector.shape_cast %261 : vector<8xf32> to vector<8x1xf32>
    %263 = vector.broadcast %262 : vector<8x1xf32> to vector<8x8xf32>
    %264 = arith.subf %260, %263 : vector<8x8xf32>
    %265 = math.exp %264 : vector<8x8xf32>
    %cst_233 = arith.constant dense<0.000000e+00> : vector<8xf32>
    %266 = vector.multi_reduction <add>, %265, %cst_233 [1] : vector<8x8xf32> to vector<8xf32>
    %267 = vector.shape_cast %266 : vector<8xf32> to vector<8x1xf32>
    %268 = tpu.reciprocal %267 {approx = true} : vector<8x1xf32> -> vector<8x1xf32>
    %269 = vector.broadcast %268 : vector<8x1xf32> to vector<8x8xf32>
    %270 = arith.mulf %265, %269 : vector<8x8xf32>
    %cst_234 = arith.constant dense<0.000000e+00> : vector<8x8xf32>
    %271 = tpu.matmul %270, %258, %cst_234 {dimension_numbers = #tpu.dot_dimension_numbers<[1], [0], [0], [1], [0, 0, 1, 1], [], []>} : vector<8x8xf32>, vector<8x8xf32>, vector<8x8xf32> -> vector<8x8xf32>
    %c0_235 = arith.constant 0 : index
    %c1_236 = arith.constant 1 : index
    %c0_237 = arith.constant 0 : index
    %c0_238 = arith.constant 0 : index
    %c0_239 = arith.constant 0 : index
    %272 = vector.load %arg8[%c0_235, %c1_236, %c0_237, %c0_238, %c0_239] : memref<1x2x4x8x32xf32, #tpu.memory_space<vmem>>, vector<1x1x1x8x32xf32>
    %273 = vector.shape_cast %272 : vector<1x1x1x8x32xf32> to vector<8x32xf32>
    %cst_240 = arith.constant dense<0.000000e+00> : vector<8x32xf32>
    %274 = tpu.matmul %271, %273, %cst_240 {dimension_numbers = #tpu.dot_dimension_numbers<[1], [0], [0], [1], [0, 0, 1, 1], [], []>} : vector<8x8xf32>, vector<8x32xf32>, vector<8x32xf32> -> vector<8x32xf32>
    %c0_241 = arith.constant 0 : index
    %c3_242 = arith.constant 3 : index
    %c1_243 = arith.constant 1 : index
    %c0_244 = arith.constant 0 : index
    %c0_245 = arith.constant 0 : index
    %275 = vector.load %arg7[%c0_241, %c3_242, %c1_243, %c0_244, %c0_245] : memref<1x6x4x32x8xf32, #tpu.memory_space<vmem>>, vector<1x1x1x32x8xf32>
    %276 = vector.shape_cast %275 : vector<1x1x1x32x8xf32> to vector<32x8xf32>
    %c0_246 = arith.constant 0 : index
    %c4_247 = arith.constant 4 : index
    %c1_248 = arith.constant 1 : index
    %c0_249 = arith.constant 0 : index
    %c0_250 = arith.constant 0 : index
    %277 = vector.load %arg7[%c0_246, %c4_247, %c1_248, %c0_249, %c0_250] : memref<1x6x4x32x8xf32, #tpu.memory_space<vmem>>, vector<1x1x1x32x8xf32>
    %278 = vector.shape_cast %277 : vector<1x1x1x32x8xf32> to vector<32x8xf32>
    %c0_251 = arith.constant 0 : index
    %c5_252 = arith.constant 5 : index
    %c1_253 = arith.constant 1 : index
    %c0_254 = arith.constant 0 : index
    %c0_255 = arith.constant 0 : index
    %279 = vector.load %arg7[%c0_251, %c5_252, %c1_253, %c0_254, %c0_255] : memref<1x6x4x32x8xf32, #tpu.memory_space<vmem>>, vector<1x1x1x32x8xf32>
    %280 = vector.shape_cast %279 : vector<1x1x1x32x8xf32> to vector<32x8xf32>
    %c0_256 = arith.constant 0 : index
    %c3_257 = arith.constant 3 : index
    %c1_258 = arith.constant 1 : index
    %c0_259 = arith.constant 0 : index
    %281 = vector.load %arg11[%c0_256, %c3_257, %c1_258, %c0_259] : memref<1x6x4x8xf32, #tpu.memory_space<vmem>>, vector<1x1x1x8xf32>
    %282 = vector.shape_cast %281 : vector<1x1x1x8xf32> to vector<8xf32>
    %283 = vector.shape_cast %282 : vector<8xf32> to vector<1x8xf32>
    %c0_260 = arith.constant 0 : index
    %c4_261 = arith.constant 4 : index
    %c1_262 = arith.constant 1 : index
    %c0_263 = arith.constant 0 : index
    %284 = vector.load %arg11[%c0_260, %c4_261, %c1_262, %c0_263] : memref<1x6x4x8xf32, #tpu.memory_space<vmem>>, vector<1x1x1x8xf32>
    %285 = vector.shape_cast %284 : vector<1x1x1x8xf32> to vector<8xf32>
    %286 = vector.shape_cast %285 : vector<8xf32> to vector<1x8xf32>
    %c0_264 = arith.constant 0 : index
    %c5_265 = arith.constant 5 : index
    %c1_266 = arith.constant 1 : index
    %c0_267 = arith.constant 0 : index
    %287 = vector.load %arg11[%c0_264, %c5_265, %c1_266, %c0_267] : memref<1x6x4x8xf32, #tpu.memory_space<vmem>>, vector<1x1x1x8xf32>
    %288 = vector.shape_cast %287 : vector<1x1x1x8xf32> to vector<8xf32>
    %289 = vector.shape_cast %288 : vector<8xf32> to vector<1x8xf32>
    %cst_268 = arith.constant dense<0.000000e+00> : vector<8x8xf32>
    %290 = tpu.matmul %234, %276, %cst_268 {dimension_numbers = #tpu.dot_dimension_numbers<[1], [0], [0], [1], [0, 0, 1, 1], [], []>} : vector<8x32xf32>, vector<32x8xf32>, vector<8x8xf32> -> vector<8x8xf32>
    %291 = vector.broadcast %283 : vector<1x8xf32> to vector<8x8xf32>
    %292 = arith.addf %290, %291 : vector<8x8xf32>
    %cst_269 = arith.constant dense<0.000000e+00> : vector<8x8xf32>
    %293 = tpu.matmul %12, %278, %cst_269 {dimension_numbers = #tpu.dot_dimension_numbers<[1], [0], [0], [1], [0, 0, 1, 1], [], []>} : vector<8x32xf32>, vector<32x8xf32>, vector<8x8xf32> -> vector<8x8xf32>
    %294 = vector.broadcast %286 : vector<1x8xf32> to vector<8x8xf32>
    %295 = arith.addf %293, %294 : vector<8x8xf32>
    %cst_270 = arith.constant dense<0.000000e+00> : vector<8x8xf32>
    %296 = tpu.matmul %12, %280, %cst_270 {dimension_numbers = #tpu.dot_dimension_numbers<[1], [0], [0], [1], [0, 0, 1, 1], [], []>} : vector<8x32xf32>, vector<32x8xf32>, vector<8x8xf32> -> vector<8x8xf32>
    %297 = vector.broadcast %289 : vector<1x8xf32> to vector<8x8xf32>
    %298 = arith.addf %296, %297 : vector<8x8xf32>
    %cst_271 = arith.constant dense<0.000000e+00> : vector<8x8xf32>
    %299 = tpu.matmul %292, %295, %cst_271 {dimension_numbers = #tpu.dot_dimension_numbers<[1], [1], [0], [0], [0, 0, 1, 0], [], []>} : vector<8x8xf32>, vector<8x8xf32>, vector<8x8xf32> -> vector<8x8xf32>
    %300 = arith.addf %299, %16 : vector<8x8xf32>
    %cst_272 = arith.constant dense<0xFF800000> : vector<8xf32>
    %301 = vector.multi_reduction <maximumf>, %300, %cst_272 [1] : vector<8x8xf32> to vector<8xf32>
    %302 = vector.shape_cast %301 : vector<8xf32> to vector<8x1xf32>
    %303 = vector.broadcast %302 : vector<8x1xf32> to vector<8x8xf32>
    %304 = arith.subf %300, %303 : vector<8x8xf32>
    %305 = math.exp %304 : vector<8x8xf32>
    %cst_273 = arith.constant dense<0.000000e+00> : vector<8xf32>
    %306 = vector.multi_reduction <add>, %305, %cst_273 [1] : vector<8x8xf32> to vector<8xf32>
    %307 = vector.shape_cast %306 : vector<8xf32> to vector<8x1xf32>
    %308 = tpu.reciprocal %307 {approx = true} : vector<8x1xf32> -> vector<8x1xf32>
    %309 = vector.broadcast %308 : vector<8x1xf32> to vector<8x8xf32>
    %310 = arith.mulf %305, %309 : vector<8x8xf32>
    %cst_274 = arith.constant dense<0.000000e+00> : vector<8x8xf32>
    %311 = tpu.matmul %310, %298, %cst_274 {dimension_numbers = #tpu.dot_dimension_numbers<[1], [0], [0], [1], [0, 0, 1, 1], [], []>} : vector<8x8xf32>, vector<8x8xf32>, vector<8x8xf32> -> vector<8x8xf32>
    %c0_275 = arith.constant 0 : index
    %c1_276 = arith.constant 1 : index
    %c1_277 = arith.constant 1 : index
    %c0_278 = arith.constant 0 : index
    %c0_279 = arith.constant 0 : index
    %312 = vector.load %arg8[%c0_275, %c1_276, %c1_277, %c0_278, %c0_279] : memref<1x2x4x8x32xf32, #tpu.memory_space<vmem>>, vector<1x1x1x8x32xf32>
    %313 = vector.shape_cast %312 : vector<1x1x1x8x32xf32> to vector<8x32xf32>
    %cst_280 = arith.constant dense<0.000000e+00> : vector<8x32xf32>
    %314 = tpu.matmul %311, %313, %cst_280 {dimension_numbers = #tpu.dot_dimension_numbers<[1], [0], [0], [1], [0, 0, 1, 1], [], []>} : vector<8x8xf32>, vector<8x32xf32>, vector<8x32xf32> -> vector<8x32xf32>
    %315 = arith.addf %274, %314 : vector<8x32xf32>
    %c0_281 = arith.constant 0 : index
    %c3_282 = arith.constant 3 : index
    %c2_283 = arith.constant 2 : index
    %c0_284 = arith.constant 0 : index
    %c0_285 = arith.constant 0 : index
    %316 = vector.load %arg7[%c0_281, %c3_282, %c2_283, %c0_284, %c0_285] : memref<1x6x4x32x8xf32, #tpu.memory_space<vmem>>, vector<1x1x1x32x8xf32>
    %317 = vector.shape_cast %316 : vector<1x1x1x32x8xf32> to vector<32x8xf32>
    %c0_286 = arith.constant 0 : index
    %c4_287 = arith.constant 4 : index
    %c2_288 = arith.constant 2 : index
    %c0_289 = arith.constant 0 : index
    %c0_290 = arith.constant 0 : index
    %318 = vector.load %arg7[%c0_286, %c4_287, %c2_288, %c0_289, %c0_290] : memref<1x6x4x32x8xf32, #tpu.memory_space<vmem>>, vector<1x1x1x32x8xf32>
    %319 = vector.shape_cast %318 : vector<1x1x1x32x8xf32> to vector<32x8xf32>
    %c0_291 = arith.constant 0 : index
    %c5_292 = arith.constant 5 : index
    %c2_293 = arith.constant 2 : index
    %c0_294 = arith.constant 0 : index
    %c0_295 = arith.constant 0 : index
    %320 = vector.load %arg7[%c0_291, %c5_292, %c2_293, %c0_294, %c0_295] : memref<1x6x4x32x8xf32, #tpu.memory_space<vmem>>, vector<1x1x1x32x8xf32>
    %321 = vector.shape_cast %320 : vector<1x1x1x32x8xf32> to vector<32x8xf32>
    %c0_296 = arith.constant 0 : index
    %c3_297 = arith.constant 3 : index
    %c2_298 = arith.constant 2 : index
    %c0_299 = arith.constant 0 : index
    %322 = vector.load %arg11[%c0_296, %c3_297, %c2_298, %c0_299] : memref<1x6x4x8xf32, #tpu.memory_space<vmem>>, vector<1x1x1x8xf32>
    %323 = vector.shape_cast %322 : vector<1x1x1x8xf32> to vector<8xf32>
    %324 = vector.shape_cast %323 : vector<8xf32> to vector<1x8xf32>
    %c0_300 = arith.constant 0 : index
    %c4_301 = arith.constant 4 : index
    %c2_302 = arith.constant 2 : index
    %c0_303 = arith.constant 0 : index
    %325 = vector.load %arg11[%c0_300, %c4_301, %c2_302, %c0_303] : memref<1x6x4x8xf32, #tpu.memory_space<vmem>>, vector<1x1x1x8xf32>
    %326 = vector.shape_cast %325 : vector<1x1x1x8xf32> to vector<8xf32>
    %327 = vector.shape_cast %326 : vector<8xf32> to vector<1x8xf32>
    %c0_304 = arith.constant 0 : index
    %c5_305 = arith.constant 5 : index
    %c2_306 = arith.constant 2 : index
    %c0_307 = arith.constant 0 : index
    %328 = vector.load %arg11[%c0_304, %c5_305, %c2_306, %c0_307] : memref<1x6x4x8xf32, #tpu.memory_space<vmem>>, vector<1x1x1x8xf32>
    %329 = vector.shape_cast %328 : vector<1x1x1x8xf32> to vector<8xf32>
    %330 = vector.shape_cast %329 : vector<8xf32> to vector<1x8xf32>
    %cst_308 = arith.constant dense<0.000000e+00> : vector<8x8xf32>
    %331 = tpu.matmul %234, %317, %cst_308 {dimension_numbers = #tpu.dot_dimension_numbers<[1], [0], [0], [1], [0, 0, 1, 1], [], []>} : vector<8x32xf32>, vector<32x8xf32>, vector<8x8xf32> -> vector<8x8xf32>
    %332 = vector.broadcast %324 : vector<1x8xf32> to vector<8x8xf32>
    %333 = arith.addf %331, %332 : vector<8x8xf32>
    %cst_309 = arith.constant dense<0.000000e+00> : vector<8x8xf32>
    %334 = tpu.matmul %12, %319, %cst_309 {dimension_numbers = #tpu.dot_dimension_numbers<[1], [0], [0], [1], [0, 0, 1, 1], [], []>} : vector<8x32xf32>, vector<32x8xf32>, vector<8x8xf32> -> vector<8x8xf32>
    %335 = vector.broadcast %327 : vector<1x8xf32> to vector<8x8xf32>
    %336 = arith.addf %334, %335 : vector<8x8xf32>
    %cst_310 = arith.constant dense<0.000000e+00> : vector<8x8xf32>
    %337 = tpu.matmul %12, %321, %cst_310 {dimension_numbers = #tpu.dot_dimension_numbers<[1], [0], [0], [1], [0, 0, 1, 1], [], []>} : vector<8x32xf32>, vector<32x8xf32>, vector<8x8xf32> -> vector<8x8xf32>
    %338 = vector.broadcast %330 : vector<1x8xf32> to vector<8x8xf32>
    %339 = arith.addf %337, %338 : vector<8x8xf32>
    %cst_311 = arith.constant dense<0.000000e+00> : vector<8x8xf32>
    %340 = tpu.matmul %333, %336, %cst_311 {dimension_numbers = #tpu.dot_dimension_numbers<[1], [1], [0], [0], [0, 0, 1, 0], [], []>} : vector<8x8xf32>, vector<8x8xf32>, vector<8x8xf32> -> vector<8x8xf32>
    %341 = arith.addf %340, %16 : vector<8x8xf32>
    %cst_312 = arith.constant dense<0xFF800000> : vector<8xf32>
    %342 = vector.multi_reduction <maximumf>, %341, %cst_312 [1] : vector<8x8xf32> to vector<8xf32>
    %343 = vector.shape_cast %342 : vector<8xf32> to vector<8x1xf32>
    %344 = vector.broadcast %343 : vector<8x1xf32> to vector<8x8xf32>
    %345 = arith.subf %341, %344 : vector<8x8xf32>
    %346 = math.exp %345 : vector<8x8xf32>
    %cst_313 = arith.constant dense<0.000000e+00> : vector<8xf32>
    %347 = vector.multi_reduction <add>, %346, %cst_313 [1] : vector<8x8xf32> to vector<8xf32>
    %348 = vector.shape_cast %347 : vector<8xf32> to vector<8x1xf32>
    %349 = tpu.reciprocal %348 {approx = true} : vector<8x1xf32> -> vector<8x1xf32>
    %350 = vector.broadcast %349 : vector<8x1xf32> to vector<8x8xf32>
    %351 = arith.mulf %346, %350 : vector<8x8xf32>
    %cst_314 = arith.constant dense<0.000000e+00> : vector<8x8xf32>
    %352 = tpu.matmul %351, %339, %cst_314 {dimension_numbers = #tpu.dot_dimension_numbers<[1], [0], [0], [1], [0, 0, 1, 1], [], []>} : vector<8x8xf32>, vector<8x8xf32>, vector<8x8xf32> -> vector<8x8xf32>
    %c0_315 = arith.constant 0 : index
    %c1_316 = arith.constant 1 : index
    %c2_317 = arith.constant 2 : index
    %c0_318 = arith.constant 0 : index
    %c0_319 = arith.constant 0 : index
    %353 = vector.load %arg8[%c0_315, %c1_316, %c2_317, %c0_318, %c0_319] : memref<1x2x4x8x32xf32, #tpu.memory_space<vmem>>, vector<1x1x1x8x32xf32>
    %354 = vector.shape_cast %353 : vector<1x1x1x8x32xf32> to vector<8x32xf32>
    %cst_320 = arith.constant dense<0.000000e+00> : vector<8x32xf32>
    %355 = tpu.matmul %352, %354, %cst_320 {dimension_numbers = #tpu.dot_dimension_numbers<[1], [0], [0], [1], [0, 0, 1, 1], [], []>} : vector<8x8xf32>, vector<8x32xf32>, vector<8x32xf32> -> vector<8x32xf32>
    %356 = arith.addf %315, %355 : vector<8x32xf32>
    %c0_321 = arith.constant 0 : index
    %c3_322 = arith.constant 3 : index
    %c3_323 = arith.constant 3 : index
    %c0_324 = arith.constant 0 : index
    %c0_325 = arith.constant 0 : index
    %357 = vector.load %arg7[%c0_321, %c3_322, %c3_323, %c0_324, %c0_325] : memref<1x6x4x32x8xf32, #tpu.memory_space<vmem>>, vector<1x1x1x32x8xf32>
    %358 = vector.shape_cast %357 : vector<1x1x1x32x8xf32> to vector<32x8xf32>
    %c0_326 = arith.constant 0 : index
    %c4_327 = arith.constant 4 : index
    %c3_328 = arith.constant 3 : index
    %c0_329 = arith.constant 0 : index
    %c0_330 = arith.constant 0 : index
    %359 = vector.load %arg7[%c0_326, %c4_327, %c3_328, %c0_329, %c0_330] : memref<1x6x4x32x8xf32, #tpu.memory_space<vmem>>, vector<1x1x1x32x8xf32>
    %360 = vector.shape_cast %359 : vector<1x1x1x32x8xf32> to vector<32x8xf32>
    %c0_331 = arith.constant 0 : index
    %c5_332 = arith.constant 5 : index
    %c3_333 = arith.constant 3 : index
    %c0_334 = arith.constant 0 : index
    %c0_335 = arith.constant 0 : index
    %361 = vector.load %arg7[%c0_331, %c5_332, %c3_333, %c0_334, %c0_335] : memref<1x6x4x32x8xf32, #tpu.memory_space<vmem>>, vector<1x1x1x32x8xf32>
    %362 = vector.shape_cast %361 : vector<1x1x1x32x8xf32> to vector<32x8xf32>
    %c0_336 = arith.constant 0 : index
    %c3_337 = arith.constant 3 : index
    %c3_338 = arith.constant 3 : index
    %c0_339 = arith.constant 0 : index
    %363 = vector.load %arg11[%c0_336, %c3_337, %c3_338, %c0_339] : memref<1x6x4x8xf32, #tpu.memory_space<vmem>>, vector<1x1x1x8xf32>
    %364 = vector.shape_cast %363 : vector<1x1x1x8xf32> to vector<8xf32>
    %365 = vector.shape_cast %364 : vector<8xf32> to vector<1x8xf32>
    %c0_340 = arith.constant 0 : index
    %c4_341 = arith.constant 4 : index
    %c3_342 = arith.constant 3 : index
    %c0_343 = arith.constant 0 : index
    %366 = vector.load %arg11[%c0_340, %c4_341, %c3_342, %c0_343] : memref<1x6x4x8xf32, #tpu.memory_space<vmem>>, vector<1x1x1x8xf32>
    %367 = vector.shape_cast %366 : vector<1x1x1x8xf32> to vector<8xf32>
    %368 = vector.shape_cast %367 : vector<8xf32> to vector<1x8xf32>
    %c0_344 = arith.constant 0 : index
    %c5_345 = arith.constant 5 : index
    %c3_346 = arith.constant 3 : index
    %c0_347 = arith.constant 0 : index
    %369 = vector.load %arg11[%c0_344, %c5_345, %c3_346, %c0_347] : memref<1x6x4x8xf32, #tpu.memory_space<vmem>>, vector<1x1x1x8xf32>
    %370 = vector.shape_cast %369 : vector<1x1x1x8xf32> to vector<8xf32>
    %371 = vector.shape_cast %370 : vector<8xf32> to vector<1x8xf32>
    %cst_348 = arith.constant dense<0.000000e+00> : vector<8x8xf32>
    %372 = tpu.matmul %234, %358, %cst_348 {dimension_numbers = #tpu.dot_dimension_numbers<[1], [0], [0], [1], [0, 0, 1, 1], [], []>} : vector<8x32xf32>, vector<32x8xf32>, vector<8x8xf32> -> vector<8x8xf32>
    %373 = vector.broadcast %365 : vector<1x8xf32> to vector<8x8xf32>
    %374 = arith.addf %372, %373 : vector<8x8xf32>
    %cst_349 = arith.constant dense<0.000000e+00> : vector<8x8xf32>
    %375 = tpu.matmul %12, %360, %cst_349 {dimension_numbers = #tpu.dot_dimension_numbers<[1], [0], [0], [1], [0, 0, 1, 1], [], []>} : vector<8x32xf32>, vector<32x8xf32>, vector<8x8xf32> -> vector<8x8xf32>
    %376 = vector.broadcast %368 : vector<1x8xf32> to vector<8x8xf32>
    %377 = arith.addf %375, %376 : vector<8x8xf32>
    %cst_350 = arith.constant dense<0.000000e+00> : vector<8x8xf32>
    %378 = tpu.matmul %12, %362, %cst_350 {dimension_numbers = #tpu.dot_dimension_numbers<[1], [0], [0], [1], [0, 0, 1, 1], [], []>} : vector<8x32xf32>, vector<32x8xf32>, vector<8x8xf32> -> vector<8x8xf32>
    %379 = vector.broadcast %371 : vector<1x8xf32> to vector<8x8xf32>
    %380 = arith.addf %378, %379 : vector<8x8xf32>
    %cst_351 = arith.constant dense<0.000000e+00> : vector<8x8xf32>
    %381 = tpu.matmul %374, %377, %cst_351 {dimension_numbers = #tpu.dot_dimension_numbers<[1], [1], [0], [0], [0, 0, 1, 0], [], []>} : vector<8x8xf32>, vector<8x8xf32>, vector<8x8xf32> -> vector<8x8xf32>
    %382 = arith.addf %381, %16 : vector<8x8xf32>
    %cst_352 = arith.constant dense<0xFF800000> : vector<8xf32>
    %383 = vector.multi_reduction <maximumf>, %382, %cst_352 [1] : vector<8x8xf32> to vector<8xf32>
    %384 = vector.shape_cast %383 : vector<8xf32> to vector<8x1xf32>
    %385 = vector.broadcast %384 : vector<8x1xf32> to vector<8x8xf32>
    %386 = arith.subf %382, %385 : vector<8x8xf32>
    %387 = math.exp %386 : vector<8x8xf32>
    %cst_353 = arith.constant dense<0.000000e+00> : vector<8xf32>
    %388 = vector.multi_reduction <add>, %387, %cst_353 [1] : vector<8x8xf32> to vector<8xf32>
    %389 = vector.shape_cast %388 : vector<8xf32> to vector<8x1xf32>
    %390 = tpu.reciprocal %389 {approx = true} : vector<8x1xf32> -> vector<8x1xf32>
    %391 = vector.broadcast %390 : vector<8x1xf32> to vector<8x8xf32>
    %392 = arith.mulf %387, %391 : vector<8x8xf32>
    %cst_354 = arith.constant dense<0.000000e+00> : vector<8x8xf32>
    %393 = tpu.matmul %392, %380, %cst_354 {dimension_numbers = #tpu.dot_dimension_numbers<[1], [0], [0], [1], [0, 0, 1, 1], [], []>} : vector<8x8xf32>, vector<8x8xf32>, vector<8x8xf32> -> vector<8x8xf32>
    %c0_355 = arith.constant 0 : index
    %c1_356 = arith.constant 1 : index
    %c3_357 = arith.constant 3 : index
    %c0_358 = arith.constant 0 : index
    %c0_359 = arith.constant 0 : index
    %394 = vector.load %arg8[%c0_355, %c1_356, %c3_357, %c0_358, %c0_359] : memref<1x2x4x8x32xf32, #tpu.memory_space<vmem>>, vector<1x1x1x8x32xf32>
    %395 = vector.shape_cast %394 : vector<1x1x1x8x32xf32> to vector<8x32xf32>
    %cst_360 = arith.constant dense<0.000000e+00> : vector<8x32xf32>
    %396 = tpu.matmul %393, %395, %cst_360 {dimension_numbers = #tpu.dot_dimension_numbers<[1], [0], [0], [1], [0, 0, 1, 1], [], []>} : vector<8x8xf32>, vector<8x32xf32>, vector<8x32xf32> -> vector<8x32xf32>
    %397 = arith.addf %356, %396 : vector<8x32xf32>
    %398 = vector.broadcast %22 : vector<1x32xf32> to vector<8x32xf32>
    %399 = arith.addf %397, %398 : vector<8x32xf32>
    %400 = arith.addf %399, %234 : vector<8x32xf32>
    %cst_361 = arith.constant dense<0.000000e+00> : vector<8xf32>
    %401 = vector.multi_reduction <add>, %400, %cst_361 [1] : vector<8x32xf32> to vector<8xf32>
    %402 = vector.shape_cast %401 : vector<8xf32> to vector<8x1xf32>
    %cst_362 = arith.constant 3.200000e+01 : f32
    %403 = vector.broadcast %cst_362 : f32 to vector<8x1xf32>
    %404 = arith.divf %402, %403 : vector<8x1xf32>
    %405 = arith.mulf %400, %400 : vector<8x32xf32>
    %cst_363 = arith.constant dense<0.000000e+00> : vector<8xf32>
    %406 = vector.multi_reduction <add>, %405, %cst_363 [1] : vector<8x32xf32> to vector<8xf32>
    %407 = vector.shape_cast %406 : vector<8xf32> to vector<8x1xf32>
    %cst_364 = arith.constant 3.200000e+01 : f32
    %408 = vector.broadcast %cst_364 : f32 to vector<8x1xf32>
    %409 = arith.divf %407, %408 : vector<8x1xf32>
    %410 = arith.mulf %404, %404 : vector<8x1xf32>
    %411 = arith.subf %409, %410 : vector<8x1xf32>
    %412 = vector.broadcast %404 : vector<8x1xf32> to vector<8x32xf32>
    %413 = arith.subf %400, %412 : vector<8x32xf32>
    %cst_365 = arith.constant 9.99999974E-6 : f32
    %414 = vector.broadcast %cst_365 : f32 to vector<8x1xf32>
    %415 = arith.addf %411, %414 : vector<8x1xf32>
    %416 = math.rsqrt %415 : vector<8x1xf32>
    %417 = vector.broadcast %416 : vector<8x1xf32> to vector<8x32xf32>
    %418 = arith.mulf %413, %417 : vector<8x32xf32>
    %419 = vector.broadcast %37 : vector<1x32xf32> to vector<8x32xf32>
    %420 = arith.mulf %418, %419 : vector<8x32xf32>
    %421 = vector.broadcast %40 : vector<1x32xf32> to vector<8x32xf32>
    %422 = arith.addf %420, %421 : vector<8x32xf32>
    %c0_366 = arith.constant 0 : index
    %c0_367 = arith.constant 0 : index
    %c0_368 = arith.constant 0 : index
    %423 = vector.load %arg9[%c0_366, %c0_367, %c0_368] : memref<1x32x64xf32, #tpu.memory_space<vmem>>, vector<1x32x64xf32>
    %424 = vector.shape_cast %423 : vector<1x32x64xf32> to vector<32x64xf32>
    %cst_369 = arith.constant dense<0.000000e+00> : vector<8x64xf32>
    %425 = tpu.matmul %422, %424, %cst_369 {dimension_numbers = #tpu.dot_dimension_numbers<[1], [0], [0], [1], [0, 0, 1, 1], [], []>} : vector<8x32xf32>, vector<32x64xf32>, vector<8x64xf32> -> vector<8x64xf32>
    %426 = vector.broadcast %25 : vector<1x64xf32> to vector<8x64xf32>
    %427 = arith.addf %425, %426 : vector<8x64xf32>
    %cst_370 = arith.constant 0.000000e+00 : f32
    %428 = vector.broadcast %cst_370 : f32 to vector<8x64xf32>
    %429 = arith.maximumf %427, %428 : vector<8x64xf32>
    %c0_371 = arith.constant 0 : index
    %c0_372 = arith.constant 0 : index
    %c0_373 = arith.constant 0 : index
    %430 = vector.load %arg10[%c0_371, %c0_372, %c0_373] : memref<1x64x32xf32, #tpu.memory_space<vmem>>, vector<1x64x32xf32>
    %431 = vector.shape_cast %430 : vector<1x64x32xf32> to vector<64x32xf32>
    %cst_374 = arith.constant dense<0.000000e+00> : vector<8x32xf32>
    %432 = tpu.matmul %429, %431, %cst_374 {dimension_numbers = #tpu.dot_dimension_numbers<[1], [0], [0], [1], [0, 0, 1, 1], [], []>} : vector<8x64xf32>, vector<64x32xf32>, vector<8x32xf32> -> vector<8x32xf32>
    %433 = vector.broadcast %28 : vector<1x32xf32> to vector<8x32xf32>
    %434 = arith.addf %432, %433 : vector<8x32xf32>
    %435 = arith.addf %434, %422 : vector<8x32xf32>
    %cst_375 = arith.constant dense<0.000000e+00> : vector<8xf32>
    %436 = vector.multi_reduction <add>, %435, %cst_375 [1] : vector<8x32xf32> to vector<8xf32>
    %437 = vector.shape_cast %436 : vector<8xf32> to vector<8x1xf32>
    %cst_376 = arith.constant 3.200000e+01 : f32
    %438 = vector.broadcast %cst_376 : f32 to vector<8x1xf32>
    %439 = arith.divf %437, %438 : vector<8x1xf32>
    %440 = arith.mulf %435, %435 : vector<8x32xf32>
    %cst_377 = arith.constant dense<0.000000e+00> : vector<8xf32>
    %441 = vector.multi_reduction <add>, %440, %cst_377 [1] : vector<8x32xf32> to vector<8xf32>
    %442 = vector.shape_cast %441 : vector<8xf32> to vector<8x1xf32>
    %cst_378 = arith.constant 3.200000e+01 : f32
    %443 = vector.broadcast %cst_378 : f32 to vector<8x1xf32>
    %444 = arith.divf %442, %443 : vector<8x1xf32>
    %445 = arith.mulf %439, %439 : vector<8x1xf32>
    %446 = arith.subf %444, %445 : vector<8x1xf32>
    %447 = vector.broadcast %439 : vector<8x1xf32> to vector<8x32xf32>
    %448 = arith.subf %435, %447 : vector<8x32xf32>
    %cst_379 = arith.constant 9.99999974E-6 : f32
    %449 = vector.broadcast %cst_379 : f32 to vector<8x1xf32>
    %450 = arith.addf %446, %449 : vector<8x1xf32>
    %451 = math.rsqrt %450 : vector<8x1xf32>
    %452 = vector.broadcast %451 : vector<8x1xf32> to vector<8x32xf32>
    %453 = arith.mulf %448, %452 : vector<8x32xf32>
    %454 = vector.broadcast %43 : vector<1x32xf32> to vector<8x32xf32>
    %455 = arith.mulf %453, %454 : vector<8x32xf32>
    %456 = vector.broadcast %46 : vector<1x32xf32> to vector<8x32xf32>
    %457 = arith.addf %455, %456 : vector<8x32xf32>
    %458 = vector.shape_cast %457 : vector<8x32xf32> to vector<1x8x32xf32>
    %c0_380 = arith.constant 0 : index
    %c0_381 = arith.constant 0 : index
    %c0_382 = arith.constant 0 : index
    %459 = vector.load %arg13[%c0_380, %c0_381, %c0_382] : memref<1x8x32xf32, #tpu.memory_space<vmem>>, vector<1x8x32xf32>
    tpu.vector_store %arg13[%c0_380, %c0_381, %c0_382], %458 {strides = array<i32>} : memref<1x8x32xf32, #tpu.memory_space<vmem>>, vector<1x8x32xf32>,
    return
  }
  func.func @transform_0(%arg0: i32) -> (i32, i32, i32) {
    %c0_i32 = arith.constant 0 : i32
    %c0_i32_0 = arith.constant 0 : i32
    %c0_i32_1 = arith.constant 0 : i32
    return %arg0, %c0_i32, %c0_i32_0 : i32, i32, i32
  }
  func.func @transform_1(%arg0: i32) -> (i32, i32, i32) {
    %c0_i32 = arith.constant 0 : i32
    %c0_i32_0 = arith.constant 0 : i32
    %c0_i32_1 = arith.constant 0 : i32
    return %arg0, %c0_i32, %c0_i32_0 : i32, i32, i32
  }
  func.func @transform_2(%arg0: i32) -> (i32, i32, i32) {
    %c0_i32 = arith.constant 0 : i32
    %c0_i32_0 = arith.constant 0 : i32
    %c0_i32_1 = arith.constant 0 : i32
    return %arg0, %c0_i32, %c0_i32_0 : i32, i32, i32
  }
  func.func @transform_3(%arg0: i32) -> (i32, i32, i32) {
    %c0_i32 = arith.constant 0 : i32
    %c0_i32_0 = arith.constant 0 : i32
    %c0_i32_1 = arith.constant 0 : i32
    return %arg0, %c0_i32, %c0_i32_0 : i32, i32, i32
  }
  func.func @transform_4(%arg0: i32) -> (i32, i32) {
    %c0_i32 = arith.constant 0 : i32
    %c0_i32_0 = arith.constant 0 : i32
    %c0_i32_1 = arith.constant 0 : i32
    return %c0_i32, %c0_i32_0 : i32, i32
  }
  func.func @transform_5(%arg0: i32) -> (i32, i32) {
    %c0_i32 = arith.constant 0 : i32
    %c0_i32_0 = arith.constant 0 : i32
    %c0_i32_1 = arith.constant 0 : i32
    return %c0_i32, %c0_i32_0 : i32, i32
  }
  func.func @transform_6(%arg0: i32) -> (i32, i32, i32, i32, i32) {
    %c0_i32 = arith.constant 0 : i32
    %c0_i32_0 = arith.constant 0 : i32
    %c0_i32_1 = arith.constant 0 : i32
    %c0_i32_2 = arith.constant 0 : i32
    %c0_i32_3 = arith.constant 0 : i32
    %c0_i32_4 = arith.constant 0 : i32
    return %c0_i32, %c0_i32_0, %c0_i32_1, %c0_i32_2, %c0_i32_3 : i32, i32, i32, i32, i32
  }
  func.func @transform_7(%arg0: i32) -> (i32, i32, i32, i32, i32) {
    %c0_i32 = arith.constant 0 : i32
    %c0_i32_0 = arith.constant 0 : i32
    %c0_i32_1 = arith.constant 0 : i32
    %c0_i32_2 = arith.constant 0 : i32
    %c0_i32_3 = arith.constant 0 : i32
    %c0_i32_4 = arith.constant 0 : i32
    return %c0_i32, %c0_i32_0, %c0_i32_1, %c0_i32_2, %c0_i32_3 : i32, i32, i32, i32, i32
  }
  func.func @transform_8(%arg0: i32) -> (i32, i32, i32) {
    %c0_i32 = arith.constant 0 : i32
    %c0_i32_0 = arith.constant 0 : i32
    %c0_i32_1 = arith.constant 0 : i32
    %c0_i32_2 = arith.constant 0 : i32
    return %c0_i32, %c0_i32_0, %c0_i32_1 : i32, i32, i32
  }
  func.func @transform_9(%arg0: i32) -> (i32, i32, i32) {
    %c0_i32 = arith.constant 0 : i32
    %c0_i32_0 = arith.constant 0 : i32
    %c0_i32_1 = arith.constant 0 : i32
    %c0_i32_2 = arith.constant 0 : i32
    return %c0_i32, %c0_i32_0, %c0_i32_1 : i32, i32, i32
  }
  func.func @transform_10(%arg0: i32) -> (i32, i32, i32, i32) {
    %c0_i32 = arith.constant 0 : i32
    %c0_i32_0 = arith.constant 0 : i32
    %c0_i32_1 = arith.constant 0 : i32
    %c0_i32_2 = arith.constant 0 : i32
    %c0_i32_3 = arith.constant 0 : i32
    return %c0_i32, %c0_i32_0, %c0_i32_1, %c0_i32_2 : i32, i32, i32, i32
  }
  func.func @transform_11(%arg0: i32) -> (i32, i32, i32) {
    %c0_i32 = arith.constant 0 : i32
    %c0_i32_0 = arith.constant 0 : i32
    %c0_i32_1 = arith.constant 0 : i32
    %c0_i32_2 = arith.constant 0 : i32
    return %c0_i32, %c0_i32_0, %c0_i32_1 : i32, i32, i32
  }
  func.func @transform_12(%arg0: i32) -> (i32, i32, i32) {
    %c0_i32 = arith.constant 0 : i32
    %c0_i32_0 = arith.constant 0 : i32
    %c0_i32_1 = arith.constant 0 : i32
    return %arg0, %c0_i32, %c0_i32_0 : i32, i32, i32
  }
}

</mosaic_0001>

<llo_original>
// kernel: tpu_custom_call.1
$region0: #{tpu_custom_call.1}
  #allocation0 [shape = 'u32[]', space=smem, size = 0x4, offset = 0x4, fixed_abs, tag = 'smem constant byte address 0x4 - core index']
  #allocation1 [shape = 'u32[72,128]{1,0:T(1,128)}', space=vmem, size = 0x9000, scoped, tag = 'internal scratch']
  %s0 = inlined_call_operand.vmem [shape: s32[2,1,8], index: 0, kind: input, shape index: {}]
  %s1 = inlined_call_operand.vmem [shape: f32[2,8,32], index: 1, kind: input, shape index: {}]
  %s2 = inlined_call_operand.vmem [shape: f32[2,8,8], index: 2, kind: input, shape index: {}]
  %s3 = inlined_call_operand.vmem [shape: f32[2,8,8], index: 3, kind: input, shape index: {}]
  %s4 = inlined_call_operand.vmem [shape: f32[16,32], index: 4, kind: input, shape index: {}]
  %s5 = inlined_call_operand.vmem [shape: f32[8,32], index: 5, kind: input, shape index: {}]
  %s6 = inlined_call_operand.vmem [shape: f32[1,6,4,32,8], index: 6, kind: input, shape index: {}]
  %s7 = inlined_call_operand.vmem [shape: f32[1,2,4,8,32], index: 7, kind: input, shape index: {}]
  %s8 = inlined_call_operand.vmem [shape: f32[1,32,64], index: 8, kind: input, shape index: {}]
  %s9 = inlined_call_operand.vmem [shape: f32[1,64,32], index: 9, kind: input, shape index: {}]
  %s10 = inlined_call_operand.vmem [shape: f32[1,6,4,8], index: 10, kind: input, shape index: {}]
  %s11 = inlined_call_operand.vmem [shape: f32[1,10,64], index: 11, kind: input, shape index: {}]
  %s12 = inlined_call_operand.hbm [shape: f32[2,8,32], index: 12, kind: output, shape index: {}]
  %s13 = sld [smem:[#allocation0]]
  $region81: #{tpu_custom_call.1} parent=0
    _
  %s15 = ssub.s32 1, %s13
  %s16 = scalar_select 0, %s15, %s13
  $region1: #{tpu_custom_call.1} parent=0
    #allocation2 [shape = 'u8[8192]{0}', space=vmem, size = 0x2000, scoped, tag = 'output window, operand 0']
    #allocation3 [shape = 's32[2]{0}', space=sflag, size = 0x8, scoped, tag = 'scoped memory for tpu_custom_call.1']
    %17 = vsyncpa [#allocation3], 0
    %s18 = scalar_lea.sflag [#allocation3], 1
    %19 = vsyncpa %s18, 0
    loop: start=0, step=1, limit=4
    $region2: #{tpu_custom_call.1} parent=1 // loop_pre_header
      _
    $region3: #{tpu_custom_call.1} parent=1 // loop_header
      %s21 = sphi 0, %s25
      %p22 = scmp.ge.s32.totalorder %s21, 4
      %s31 = sphi 0, %s33
      %s34 = sphi 0, %s31
      %s35 = sphi 0, %s34
      %s51 = sphi 0, %s35
      %s57 = sphi 0, %s59
      %s60 = sphi 0, %s57
      %s61 = sphi 0, %s60
      %s77 = sphi 0, %s61
      %s83 = sphi 0, %s85
      %s86 = sphi 0, %s83
      %s87 = sphi 0, %s86
      %s103 = sphi 0, %s87
      %s109 = sphi 0, %s111
      %s112 = sphi 0, %s109
      %s113 = sphi 0, %s112
      %s129 = sphi 0, %s113
      %s133 = sphi 0, %s133
      %s135 = sphi 0, %s133
      %s136 = sphi 0, %s135
      %s150 = sphi 0, %s136
      %s154 = sphi 0, %s154
      %s156 = sphi 0, %s154
      %s157 = sphi 0, %s156
      %s171 = sphi 0, %s157
      %s175 = sphi 0, %s175
      %s177 = sphi 0, %s175
      %s178 = sphi 0, %s177
      %s192 = sphi 0, %s178
      %s196 = sphi 0, %s196
      %s198 = sphi 0, %s196
      %s199 = sphi 0, %s198
      %s213 = sphi 0, %s199
      %s217 = sphi 0, %s217
      %s219 = sphi 0, %s217
      %s220 = sphi 0, %s219
      %s234 = sphi 0, %s220
      %s238 = sphi 0, %s238
      %s240 = sphi 0, %s238
      %s241 = sphi 0, %s240
      %s255 = sphi 0, %s241
      %s259 = sphi 0, %s259
      %s261 = sphi 0, %s259
      %s262 = sphi 0, %s261
      %s276 = sphi 0, %s262
      %s280 = sphi 0, %s280
      %s282 = sphi 0, %s280
      %s283 = sphi 0, %s282
      %s297 = sphi 0, %s283
      %s303 = sphi 0, %s305
      %s306 = sphi 0, %s303
      %s307 = sphi 0, %s306
      %s323 = sphi 0, %s307
    $region4: #{tpu_custom_call.1} parent=1 // loop_header_branch
      %24 = sbr.rel (%p22) target = $region8
    $region5: #{tpu_custom_call.1} parent=1 // loop_body
      %s26 = ssub.s32 %s21, 1
      %s27 = ssub.s32 %s21, 2
      %s28 = sadd.s32 %s21, 1
      %s29 = ssub.s32 %s21, %s28
      %p30 = scmp.eq.s32.totalorder %s29, 0
      %s32 = sadd.s32 %s31, 1
      %s33 = scalar_select %p30, %s31, %s32
      %p36 = pneg %p30
      %p37 = scmp.eq.s32.totalorder %s21, 1
      %p38 = por %p36, %p37
      %p39 = scmp.ne.s32.totalorder %s31, %s34
      %p40 = scmp.eq.s32.totalorder %s21, 0
      %p41 = por %p39, %p40
      %p42 = scmp.ne.s32.totalorder %s31, %s34
      %p43 = scmp.eq.s32.totalorder %s26, 1
      %p44 = por %p42, %p43
      %p45 = scmp.ne.s32.totalorder %s34, %s35
      %p46 = scmp.eq.s32.totalorder %s26, 0
      %p47 = por %p45, %p46
      %p48 = scmp.ne.s32.totalorder %s34, %s35
      %p49 = scmp.eq.s32.totalorder %s27, 1
      %p50 = por %p48, %p49
      %p52 = scmp.ne.s32.totalorder %s35, %s51
      %p53 = scmp.eq.s32.totalorder %s27, 0
      %p54 = por %p52, %p53
      %s55 = ssub.s32 %s21, %s28
      %p56 = scmp.eq.s32.totalorder %s55, 0
      %s58 = sadd.s32 %s57, 1
      %s59 = scalar_select %p56, %s57, %s58
      %p62 = pneg %p56
      %p63 = scmp.eq.s32.totalorder %s21, 1
      %p64 = por %p62, %p63
      %p65 = scmp.ne.s32.totalorder %s57, %s60
      %p66 = scmp.eq.s32.totalorder %s21, 0
      %p67 = por %p65, %p66
      %p68 = scmp.ne.s32.totalorder %s57, %s60
      %p69 = scmp.eq.s32.totalorder %s26, 1
      %p70 = por %p68, %p69
      %p71 = scmp.ne.s32.totalorder %s60, %s61
      %p72 = scmp.eq.s32.totalorder %s26, 0
      %p73 = por %p71, %p72
      %p74 = scmp.ne.s32.totalorder %s60, %s61
      %p75 = scmp.eq.s32.totalorder %s27, 1
      %p76 = por %p74, %p75
      %p78 = scmp.ne.s32.totalorder %s61, %s77
      %p79 = scmp.eq.s32.totalorder %s27, 0
      %p80 = por %p78, %p79
      %s81 = ssub.s32 %s21, %s28
      %p82 = scmp.eq.s32.totalorder %s81, 0
      %s84 = sadd.s32 %s83, 1
      %s85 = scalar_select %p82, %s83, %s84
      %p88 = pneg %p82
      %p89 = scmp.eq.s32.totalorder %s21, 1
      %p90 = por %p88, %p89
      %p91 = scmp.ne.s32.totalorder %s83, %s86
      %p92 = scmp.eq.s32.totalorder %s21, 0
      %p93 = por %p91, %p92
      %p94 = scmp.ne.s32.totalorder %s83, %s86
      %p95 = scmp.eq.s32.totalorder %s26, 1
      %p96 = por %p94, %p95
      %p97 = scmp.ne.s32.totalorder %s86, %s87
      %p98 = scmp.eq.s32.totalorder %s26, 0
      %p99 = por %p97, %p98
      %p100 = scmp.ne.s32.totalorder %s86, %s87
      %p101 = scmp.eq.s32.totalorder %s27, 1
      %p102 = por %p100, %p101
      %p104 = scmp.ne.s32.totalorder %s87, %s103
      %p105 = scmp.eq.s32.totalorder %s27, 0
      %p106 = por %p104, %p105
      %s107 = ssub.s32 %s21, %s28
      %p108 = scmp.eq.s32.totalorder %s107, 0
      %s110 = sadd.s32 %s109, 1
      %s111 = scalar_select %p108, %s109, %s110
      %p114 = pneg %p108
      %p115 = scmp.eq.s32.totalorder %s21, 1
      %p116 = por %p114, %p115
      %p117 = scmp.ne.s32.totalorder %s109, %s112
      %p118 = scmp.eq.s32.totalorder %s21, 0
      %p119 = por %p117, %p118
      %p120 = scmp.ne.s32.totalorder %s109, %s112
      %p121 = scmp.eq.s32.totalorder %s26, 1
      %p122 = por %p120, %p121
      %p123 = scmp.ne.s32.totalorder %s112, %s113
      %p124 = scmp.eq.s32.totalorder %s26, 0
      %p125 = por %p123, %p124
      %p126 = scmp.ne.s32.totalorder %s112, %s113
      %p127 = scmp.eq.s32.totalorder %s27, 1
      %p128 = por %p126, %p127
      %p130 = scmp.ne.s32.totalorder %s113, %s129
      %p131 = scmp.eq.s32.totalorder %s27, 0
      %p132 = por %p130, %p131
      %s134 = sadd.s32 %s133, 1
      %p137 = scmp.eq.s32.totalorder %s21, 1
      %p138 = scmp.ne.s32.totalorder %s133, %s135
      %p139 = scmp.eq.s32.totalorder %s21, 0
      %p140 = por %p138, %p139
      %p141 = scmp.ne.s32.totalorder %s133, %s135
      %p142 = scmp.eq.s32.totalorder %s26, 1
      %p143 = por %p141, %p142
      %p144 = scmp.ne.s32.totalorder %s135, %s136
      %p145 = scmp.eq.s32.totalorder %s26, 0
      %p146 = por %p144, %p145
      %p147 = scmp.ne.s32.totalorder %s135, %s136
      %p148 = scmp.eq.s32.totalorder %s27, 1
      %p149 = por %p147, %p148
      %p151 = scmp.ne.s32.totalorder %s136, %s150
      %p152 = scmp.eq.s32.totalorder %s27, 0
      %p153 = por %p151, %p152
      %s155 = sadd.s32 %s154, 1
      %p158 = scmp.eq.s32.totalorder %s21, 1
      %p159 = scmp.ne.s32.totalorder %s154, %s156
      %p160 = scmp.eq.s32.totalorder %s21, 0
      %p161 = por %p159, %p160
      %p162 = scmp.ne.s32.totalorder %s154, %s156
      %p163 = scmp.eq.s32.totalorder %s26, 1
      %p164 = por %p162, %p163
      %p165 = scmp.ne.s32.totalorder %s156, %s157
      %p166 = scmp.eq.s32.totalorder %s26, 0
      %p167 = por %p165, %p166
      %p168 = scmp.ne.s32.totalorder %s156, %s157
      %p169 = scmp.eq.s32.totalorder %s27, 1
      %p170 = por %p168, %p169
      %p172 = scmp.ne.s32.totalorder %s157, %s171
      %p173 = scmp.eq.s32.totalorder %s27, 0
      %p174 = por %p172, %p173
      %s176 = sadd.s32 %s175, 1
      %p179 = scmp.eq.s32.totalorder %s21, 1
      %p180 = scmp.ne.s32.totalorder %s175, %s177
      %p181 = scmp.eq.s32.totalorder %s21, 0
      %p182 = por %p180, %p181
      %p183 = scmp.ne.s32.totalorder %s175, %s177
      %p184 = scmp.eq.s32.totalorder %s26, 1
      %p185 = por %p183, %p184
      %p186 = scmp.ne.s32.totalorder %s177, %s178
      %p187 = scmp.eq.s32.totalorder %s26, 0
      %p188 = por %p186, %p187
      %p189 = scmp.ne.s32.totalorder %s177, %s178
      %p190 = scmp.eq.s32.totalorder %s27, 1
      %p191 = por %p189, %p190
      %p193 = scmp.ne.s32.totalorder %s178, %s192
      %p194 = scmp.eq.s32.totalorder %s27, 0
      %p195 = por %p193, %p194
      %s197 = sadd.s32 %s196, 1
      %p200 = scmp.eq.s32.totalorder %s21, 1
      %p201 = scmp.ne.s32.totalorder %s196, %s198
      %p202 = scmp.eq.s32.totalorder %s21, 0
      %p203 = por %p201, %p202
      %p204 = scmp.ne.s32.totalorder %s196, %s198
      %p205 = scmp.eq.s32.totalorder %s26, 1
      %p206 = por %p204, %p205
      %p207 = scmp.ne.s32.totalorder %s198, %s199
      %p208 = scmp.eq.s32.totalorder %s26, 0
      %p209 = por %p207, %p208
      %p210 = scmp.ne.s32.totalorder %s198, %s199
      %p211 = scmp.eq.s32.totalorder %s27, 1
      %p212 = por %p210, %p211
      %p214 = scmp.ne.s32.totalorder %s199, %s213
      %p215 = scmp.eq.s32.totalorder %s27, 0
      %p216 = por %p214, %p215
      %s218 = sadd.s32 %s217, 1
      %p221 = scmp.eq.s32.totalorder %s21, 1
      %p222 = scmp.ne.s32.totalorder %s217, %s219
      %p223 = scmp.eq.s32.totalorder %s21, 0
      %p224 = por %p222, %p223
      %p225 = scmp.ne.s32.totalorder %s217, %s219
      %p226 = scmp.eq.s32.totalorder %s26, 1
      %p227 = por %p225, %p226
      %p228 = scmp.ne.s32.totalorder %s219, %s220
      %p229 = scmp.eq.s32.totalorder %s26, 0
      %p230 = por %p228, %p229
      %p231 = scmp.ne.s32.totalorder %s219, %s220
      %p232 = scmp.eq.s32.totalorder %s27, 1
      %p233 = por %p231, %p232
      %p235 = scmp.ne.s32.totalorder %s220, %s234
      %p236 = scmp.eq.s32.totalorder %s27, 0
      %p237 = por %p235, %p236
      %s239 = sadd.s32 %s238, 1
      %p242 = scmp.eq.s32.totalorder %s21, 1
      %p243 = scmp.ne.s32.totalorder %s238, %s240
      %p244 = scmp.eq.s32.totalorder %s21, 0
      %p245 = por %p243, %p244
      %p246 = scmp.ne.s32.totalorder %s238, %s240
      %p247 = scmp.eq.s32.totalorder %s26, 1
      %p248 = por %p246, %p247
      %p249 = scmp.ne.s32.totalorder %s240, %s241
      %p250 = scmp.eq.s32.totalorder %s26, 0
      %p251 = por %p249, %p250
      %p252 = scmp.ne.s32.totalorder %s240, %s241
      %p253 = scmp.eq.s32.totalorder %s27, 1
      %p254 = por %p252, %p253
      %p256 = scmp.ne.s32.totalorder %s241, %s255
      %p257 = scmp.eq.s32.totalorder %s27, 0
      %p258 = por %p256, %p257
      %s260 = sadd.s32 %s259, 1
      %p263 = scmp.eq.s32.totalorder %s21, 1
      %p264 = scmp.ne.s32.totalorder %s259, %s261
      %p265 = scmp.eq.s32.totalorder %s21, 0
      %p266 = por %p264, %p265
      %p267 = scmp.ne.s32.totalorder %s259, %s261
      %p268 = scmp.eq.s32.totalorder %s26, 1
      %p269 = por %p267, %p268
      %p270 = scmp.ne.s32.totalorder %s261, %s262
      %p271 = scmp.eq.s32.totalorder %s26, 0
      %p272 = por %p270, %p271
      %p273 = scmp.ne.s32.totalorder %s261, %s262
      %p274 = scmp.eq.s32.totalorder %s27, 1
      %p275 = por %p273, %p274
      %p277 = scmp.ne.s32.totalorder %s262, %s276
      %p278 = scmp.eq.s32.totalorder %s27, 0
      %p279 = por %p277, %p278
      %s281 = sadd.s32 %s280, 1
      %p284 = scmp.eq.s32.totalorder %s21, 1
      %p285 = scmp.ne.s32.totalorder %s280, %s282
      %p286 = scmp.eq.s32.totalorder %s21, 0
      %p287 = por %p285, %p286
      %p288 = scmp.ne.s32.totalorder %s280, %s282
      %p289 = scmp.eq.s32.totalorder %s26, 1
      %p290 = por %p288, %p289
      %p291 = scmp.ne.s32.totalorder %s282, %s283
      %p292 = scmp.eq.s32.totalorder %s26, 0
      %p293 = por %p291, %p292
      %p294 = scmp.ne.s32.totalorder %s282, %s283
      %p295 = scmp.eq.s32.totalorder %s27, 1
      %p296 = por %p294, %p295
      %p298 = scmp.ne.s32.totalorder %s283, %s297
      %p299 = scmp.eq.s32.totalorder %s27, 0
      %p300 = por %p298, %p299
      %s301 = ssub.s32 %s21, %s28
      %p302 = scmp.eq.s32.totalorder %s301, 0
      %s304 = sadd.s32 %s303, 1
      %s305 = scalar_select %p302, %s303, %s304
      %p308 = pneg %p302
      %p309 = scmp.eq.s32.totalorder %s21, 1
      %p310 = por %p308, %p309
      %p311 = scmp.ne.s32.totalorder %s303, %s306
      %p312 = scmp.eq.s32.totalorder %s21, 0
      %p313 = por %p311, %p312
      %p314 = scmp.ne.s32.totalorder %s303, %s306
      %p315 = scmp.eq.s32.totalorder %s26, 1
      %p316 = por %p314, %p315
      %p317 = scmp.ne.s32.totalorder %s306, %s307
      %p318 = scmp.eq.s32.totalorder %s26, 0
      %p319 = por %p317, %p318
      %p320 = scmp.ne.s32.totalorder %s306, %s307
      %p321 = scmp.eq.s32.totalorder %s27, 1
      %p322 = por %p320, %p321
      %p324 = scmp.ne.s32.totalorder %s307, %s323
      %p325 = scmp.eq.s32.totalorder %s27, 0
      %p326 = por %p324, %p325
      %p327 = scmp.le.s32.totalorder 1, %s21
      %p328 = scmp.lt.s32.totalorder %s21, 3
      %p329 = pnand %p327, %p328
      %p330 = pneg %p329
      // Predicated region
      $region9: #{tpu_custom_call.1} parent=5 // pred_check
        _
      $region10: #{tpu_custom_call.1} parent=5 // pred_check_branch
        %332 = sbr.rel (%p329) target = $region12
      $region11: #{tpu_custom_call.1} parent=5 // pred_region
        %s333 = ssub.s32 %s21, 1
        // Predicated region
        $region13: #{tpu_custom_call.1} parent=11 // pred_check
          %p334 = pneg %p146
        $region14: #{tpu_custom_call.1} parent=11 // pred_check_branch
          %336 = sbr.rel (%p334) target = $region16
        $region15: #{tpu_custom_call.1} parent=11 // pred_region
          _
        $region16: #{tpu_custom_call.1} parent=11 // pred_fallthru
          _
        // Predicated region
        $region17: #{tpu_custom_call.1} parent=11 // pred_check
          %p337 = pneg %p167
        $region18: #{tpu_custom_call.1} parent=11 // pred_check_branch
          %339 = sbr.rel (%p337) target = $region20
        $region19: #{tpu_custom_call.1} parent=11 // pred_region
          _
        $region20: #{tpu_custom_call.1} parent=11 // pred_fallthru
          _
        // Predicated region
        $region21: #{tpu_custom_call.1} parent=11 // pred_check
          %p340 = pneg %p188
        $region22: #{tpu_custom_call.1} parent=11 // pred_check_branch
          %342 = sbr.rel (%p340) target = $region24
        $region23: #{tpu_custom_call.1} parent=11 // pred_region
          _
        $region24: #{tpu_custom_call.1} parent=11 // pred_fallthru
          _
        // Predicated region
        $region25: #{tpu_custom_call.1} parent=11 // pred_check
          %p343 = pneg %p209
        $region26: #{tpu_custom_call.1} parent=11 // pred_check_branch
          %345 = sbr.rel (%p343) target = $region28
        $region27: #{tpu_custom_call.1} parent=11 // pred_region
          _
        $region28: #{tpu_custom_call.1} parent=11 // pred_fallthru
          _
        // Predicated region
        $region29: #{tpu_custom_call.1} parent=11 // pred_check
          %p346 = pneg %p230
        $region30: #{tpu_custom_call.1} parent=11 // pred_check_branch
          %348 = sbr.rel (%p346) target = $region32
        $region31: #{tpu_custom_call.1} parent=11 // pred_region
          _
        $region32: #{tpu_custom_call.1} parent=11 // pred_fallthru
          _
        // Predicated region
        $region33: #{tpu_custom_call.1} parent=11 // pred_check
          %p349 = pneg %p251
        $region34: #{tpu_custom_call.1} parent=11 // pred_check_branch
          %351 = sbr.rel (%p349) target = $region36
        $region35: #{tpu_custom_call.1} parent=11 // pred_region
          _
        $region36: #{tpu_custom_call.1} parent=11 // pred_fallthru
          _
        // Predicated region
        $region37: #{tpu_custom_call.1} parent=11 // pred_check
          %p352 = pneg %p272
        $region38: #{tpu_custom_call.1} parent=11 // pred_check_branch
          %354 = sbr.rel (%p352) target = $region40
        $region39: #{tpu_custom_call.1} parent=11 // pred_region
          _
        $region40: #{tpu_custom_call.1} parent=11 // pred_fallthru
          _
        // Predicated region
        $region41: #{tpu_custom_call.1} parent=11 // pred_check
          %p355 = pneg %p293
        $region42: #{tpu_custom_call.1} parent=11 // pred_check_branch
          %357 = sbr.rel (%p355) target = $region44
        $region43: #{tpu_custom_call.1} parent=11 // pred_region
          _
        $region44: #{tpu_custom_call.1} parent=11 // pred_fallthru
          _
      $region12: #{tpu_custom_call.1} parent=5 // pred_fallthru
        _
      %p358 = scmp.lt.s32.totalorder %s21, 2
      // Predicated region
      $region45: #{tpu_custom_call.1} parent=5 // pred_check
        %p359 = pneg %p358
      $region46: #{tpu_custom_call.1} parent=5 // pred_check_branch
        %361 = sbr.rel (%p359) target = $region48
      $region47: #{tpu_custom_call.1} parent=5 // pred_region
        // Predicated region
        $region49: #{tpu_custom_call.1} parent=47 // pred_check
          %p362 = pneg %p41
        $region50: #{tpu_custom_call.1} parent=47 // pred_check_branch
          %364 = sbr.rel (%p362) target = $region52
        $region51: #{tpu_custom_call.1} parent=47 // pred_region
          %p365 = scmp.lt.s32.totalorder %s21, 1
          %s366 = scalar_select %p365, %s21, 1
          %s367 = scalar_lea.vmem %s0, %s366
        $region52: #{tpu_custom_call.1} parent=47 // pred_fallthru
          _
        // Predicated region
        $region53: #{tpu_custom_call.1} parent=47 // pred_check
          %p368 = pneg %p67
        $region54: #{tpu_custom_call.1} parent=47 // pred_check_branch
          %370 = sbr.rel (%p368) target = $region56
        $region55: #{tpu_custom_call.1} parent=47 // pred_region
          %p371 = scmp.lt.s32.totalorder %s21, 1
          %s372 = scalar_select %p371, %s21, 1
          %s373 = smul.addr %s372, 8
          %s374 = scalar_lea.vmem %s1, %s373
        $region56: #{tpu_custom_call.1} parent=47 // pred_fallthru
          _
        // Predicated region
        $region57: #{tpu_custom_call.1} parent=47 // pred_check
          %p375 = pneg %p93
        $region58: #{tpu_custom_call.1} parent=47 // pred_check_branch
          %377 = sbr.rel (%p375) target = $region60
        $region59: #{tpu_custom_call.1} parent=47 // pred_region
          %p378 = scmp.lt.s32.totalorder %s21, 1
          %s379 = scalar_select %p378, %s21, 1
          %s380 = smul.addr %s379, 8
          %s381 = scalar_lea.vmem %s2, %s380
        $region60: #{tpu_custom_call.1} parent=47 // pred_fallthru
          _
        // Predicated region
        $region61: #{tpu_custom_call.1} parent=47 // pred_check
          %p382 = pneg %p119
        $region62: #{tpu_custom_call.1} parent=47 // pred_check_branch
          %384 = sbr.rel (%p382) target = $region64
        $region63: #{tpu_custom_call.1} parent=47 // pred_region
          %p385 = scmp.lt.s32.totalorder %s21, 1
          %s386 = scalar_select %p385, %s21, 1
          %s387 = smul.addr %s386, 8
          %s388 = scalar_lea.vmem %s3, %s387
        $region64: #{tpu_custom_call.1} parent=47 // pred_fallthru
          _
      $region48: #{tpu_custom_call.1} parent=5 // pred_fallthru
        _
      %p389 = scmp.le.s32.totalorder 1, %s21
      %p390 = scmp.lt.s32.totalorder %s21, 3
      %p391 = pnand %p389, %p390
      %p392 = pneg %p391
      // Predicated region
      $region65: #{tpu_custom_call.1} parent=5 // pred_check
        _
      $region66: #{tpu_custom_call.1} parent=5 // pred_check_branch
        %394 = sbr.rel (%p391) target = $region68
      $region67: #{tpu_custom_call.1} parent=5 // pred_region
        %s395 = ssub.s32 %s21, 1
        %p396 = scmp.lt.s32.totalorder %s26, 1
        %s397 = scalar_select %p396, %s26, 1
        %s398 = scalar_lea.vmem %s0, %s397
        %p399 = pneg %p47
        %p400 = pneg %p44
        %p401 = scmp.lt.s32.totalorder %s26, 1
        %s402 = scalar_select %p401, %s26, 1
        %s403 = smul.addr %s402, 8
        %s404 = scalar_lea.vmem %s1, %s403
        %p405 = pneg %p73
        %p406 = pneg %p70
        %p407 = scmp.lt.s32.totalorder %s26, 1
        %s408 = scalar_select %p407, %s26, 1
        %s409 = smul.addr %s408, 8
        %s410 = scalar_lea.vmem %s2, %s409
        %p411 = pneg %p99
        %p412 = pneg %p96
        %p413 = scmp.lt.s32.totalorder %s26, 1
        %s414 = scalar_select %p413, %s26, 1
        %s415 = smul.addr %s414, 8
        %s416 = scalar_lea.vmem %s3, %s415
        %p417 = pneg %p125
        %p418 = pneg %p122
        %p419 = pneg %p146
        %p420 = pneg %p143
        %p421 = pneg %p167
        %p422 = pneg %p164
        %p423 = pneg %p188
        %p424 = pneg %p185
        %p425 = pneg %p209
        %p426 = pneg %p206
        %p427 = pneg %p230
        %p428 = pneg %p227
        %p429 = pneg %p251
        %p430 = pneg %p248
        %p431 = pneg %p272
        %p432 = pneg %p269
        %p433 = pneg %p293
        %p434 = pneg %p290
        %p435 = pneg %p319
        %p436 = pneg %p316
        %s437 = sand.u32 %s306, 1
        %s438 = scalar_lea.sflag [#allocation3], %s437
        %s439 = sand.u32 %s306, 1
        %s440 = smul.addr %s439, 8
        %s441 = scalar_lea.vmem [#allocation2], %s440
        %p442 = scmp.lt.s32.totalorder %s26, 1
        %s443 = scalar_select %p442, %s26, 1
        %s444 = scalar_lea.vmem %s0, %s443
        %p445 = scmp.lt.s32.totalorder %s26, 1
        %s446 = scalar_select %p445, %s26, 1
        %s447 = smul.addr %s446, 8
        %s448 = scalar_lea.vmem %s1, %s447
        %p449 = scmp.lt.s32.totalorder %s26, 1
        %s450 = scalar_select %p449, %s26, 1
        %s451 = smul.addr %s450, 8
        %s452 = scalar_lea.vmem %s2, %s451
        %p453 = scmp.lt.s32.totalorder %s26, 1
        %s454 = scalar_select %p453, %s26, 1
        %s455 = smul.addr %s454, 8
        %s456 = scalar_lea.vmem %s3, %s455
        %v457 = vld [vmem:[%s444] sm:$0x1]
        %v458 = vperm.slane %v457, 0
        %v459 = vlaneseq
        %v460 = vshrl.u32 %v459, 7
        %462 = vset.pattern.permute.xlu0 %v460
        %463 = vperm.xlu0 %462, %v458
        %v464 = vpop.permute.xlu0 %463
        %v465 = vlaneseq
        %v466 = vand.u32 %v465, 127
        %vm467 = vcmp.eq.s32.totalorder %v464, %v466
        %v468 = vsel %vm467, 1, 0
        %v469 = vcvt.s32.f32 %v468
        %v470 = vld [vmem:[%s4] sm:$0xff]
        %v471 = vld [vmem:[%s4 + $0x8] sm:$0xff]
        %v472 = vld [vmem:[%s5] sm:$0xff]
        %vm473 = vcmask 130048
        %v475 = vsel %vm473, %v469, 0
        %477 = vmatpush.msra.mxu0 0.0
        %478 = vmatpush.msra.mxu0 0.0
        %479 = vmatpush.msra.mxu0 0.0
        %480 = vmatpush.msra.mxu0 0.0
        %481 = vmatpush.msra.mxu0 0.0
        %482 = vmatpush.msra.mxu0 0.0
        %483 = vmatpush.msra.mxu0 0.0
        %484 = vmatpush.msra.mxu0 0.0
        %485 = vmatpush.msra.mxu0 0.0
        %486 = vmatpush.msra.mxu0 0.0
        %487 = vmatpush.msra.mxu0 0.0
        %488 = vmatpush.msra.mxu0 0.0
        %489 = vmatpush.msra.mxu0 0.0
        %490 = vmatpush.msra.mxu0 0.0
        %491 = vmatpush.msra.mxu0 %v471
        %492 = vmatpush.msra.mxu0 %v470
        %493 = vmatmul.f32.gmra.mxu0 %v475
        %v494 = vpop.f32.mrf.mxu0
        %v495 = vadd.f32 %v472, %v494
        %496 = vdwg.mxu0
        %v497 = vld [vmem:[%s448] sm:$0xff]
        %v498 = vld [vmem:[%s452] sm:$0xff]
        %v499 = vld [vmem:[%s456] sm:$0xff]
        %v500 = vld [vmem:[%s11] sm:$0x1]
        %v501 = vld [vmem:[%s11 + $0x1] sm:$0x1]
        %v502 = vld [vmem:[%s11 + $0x2] sm:$0x1]
        %v503 = vld [vmem:[%s11 + $0x3] sm:$0x1]
        %v504 = vld [vmem:[%s11 + $0x4] sm:$0x1]
        %v505 = vld [vmem:[%s11 + $0x5] sm:$0x1]
        %v506 = vld [vmem:[%s11 + $0x6] sm:$0x1]
        %v507 = vld [vmem:[%s11 + $0x7] sm:$0x1]
        %v508 = vld [vmem:[%s11 + $0x8] sm:$0x1]
        %v509 = vld [vmem:[%s11 + $0x9] sm:$0x1]
        %v510 = vld [vmem:[%s6] sm:$0xff]
        %v511 = vld [vmem:[%s6 + $0x8] sm:$0xff]
        %v512 = vld [vmem:[%s6 + $0x10] sm:$0xff]
        %v513 = vld [vmem:[%s6 + $0x18] sm:$0xff]
        %s514 = scalar_lea.vmem %s6, 128
        %v515 = vld [vmem:[%s514] sm:$0xff]
        %v516 = vld [vmem:[%s514 + $0x8] sm:$0xff]
        %v517 = vld [vmem:[%s514 + $0x10] sm:$0xff]
        %v518 = vld [vmem:[%s514 + $0x18] sm:$0xff]
        %s519 = scalar_lea.vmem %s6, 256
        %v520 = vld [vmem:[%s519] sm:$0xff]
        %v521 = vld [vmem:[%s519 + $0x8] sm:$0xff]
        %v522 = vld [vmem:[%s519 + $0x10] sm:$0xff]
        %v523 = vld [vmem:[%s519 + $0x18] sm:$0xff]
        %v524 = vld [vmem:[%s10] sm:$0x1]
        %s525 = scalar_lea.vmem %s10, 4
        %v526 = vld [vmem:[%s525] sm:$0x1]
        %s527 = scalar_lea.vmem %s10, 8
        %v528 = vld [vmem:[%s527] sm:$0x1]
        %v529 = vperm.slane %v524, 0
        %vm530 = vcmask 261120
        %v532 = vsel %vm530, %v495, 0
        %534 = vmatpush.msra.mxu0 0.0
        %535 = vmatpush.msra.mxu0 0.0
        %536 = vmatpush.msra.mxu0 0.0
        %537 = vmatpush.msra.mxu0 0.0
        %538 = vmatpush.msra.mxu0 0.0
        %539 = vmatpush.msra.mxu0 0.0
        %540 = vmatpush.msra.mxu0 0.0
        %541 = vmatpush.msra.mxu0 0.0
        %542 = vmatpush.msra.mxu0 0.0
        %543 = vmatpush.msra.mxu0 0.0
        %544 = vmatpush.msra.mxu0 0.0
        %545 = vmatpush.msra.mxu0 0.0
        %546 = vmatpush.msra.mxu0 %v513
        %547 = vmatpush.msra.mxu0 %v512
        %548 = vmatpush.msra.mxu0 %v511
        %549 = vmatpush.msra.mxu0 %v510
        %550 = vmatmul.f32.gmra.mxu0 %v532
        %v551 = vpop.f32.mrf.mxu0
        %v552 = vadd.f32 %v529, %v551
        %553 = vdwg.mxu0
        %v554 = vperm.slane %v526, 0
        %555 = vmatpush.msra.mxu0 0.0
        %556 = vmatpush.msra.mxu0 0.0
        %557 = vmatpush.msra.mxu0 0.0
        %558 = vmatpush.msra.mxu0 0.0
        %559 = vmatpush.msra.mxu0 0.0
        %560 = vmatpush.msra.mxu0 0.0
        %561 = vmatpush.msra.mxu0 0.0
        %562 = vmatpush.msra.mxu0 0.0
        %563 = vmatpush.msra.mxu0 0.0
        %564 = vmatpush.msra.mxu0 0.0
        %565 = vmatpush.msra.mxu0 0.0
        %566 = vmatpush.msra.mxu0 0.0
        %567 = vmatpush.msra.mxu0 %v518
        %568 = vmatpush.msra.mxu0 %v517
        %569 = vmatpush.msra.mxu0 %v516
        %570 = vmatpush.msra.mxu0 %v515
        %571 = vmatmul.f32.gmra.mxu0 %v532
        %v572 = vpop.f32.mrf.mxu0
        %v573 = vadd.f32 %v554, %v572
        %574 = vdwg.mxu0
        %v575 = vperm.slane %v528, 0
        %576 = vmatpush.msra.mxu0 0.0
        %577 = vmatpush.msra.mxu0 0.0
        %578 = vmatpush.msra.mxu0 0.0
        %579 = vmatpush.msra.mxu0 0.0
        %580 = vmatpush.msra.mxu0 0.0
        %581 = vmatpush.msra.mxu0 0.0
        %582 = vmatpush.msra.mxu0 0.0
        %583 = vmatpush.msra.mxu0 0.0
        %584 = vmatpush.msra.mxu0 0.0
        %585 = vmatpush.msra.mxu0 0.0
        %586 = vmatpush.msra.mxu0 0.0
        %587 = vmatpush.msra.mxu0 0.0
        %588 = vmatpush.msra.mxu0 %v523
        %589 = vmatpush.msra.mxu0 %v522
        %590 = vmatpush.msra.mxu0 %v521
        %591 = vmatpush.msra.mxu0 %v520
        %592 = vmatmul.f32.gmra.mxu0 %v532
        %v593 = vpop.f32.mrf.mxu0
        %v594 = vadd.f32 %v575, %v593
        %595 = vdwg.mxu0
        %vm596 = vcmask 64512
        %v598 = vsel %vm596, %v552, 0
        %v601 = vsel %vm596, %v573, 0
        %603 = vmatpush.xpose.msra.mxu0 0.0
        %604 = vmatpush.xpose.msra.mxu0 0.0
        %605 = vmatpush.xpose.msra.mxu0 0.0
        %606 = vmatpush.xpose.msra.mxu0 0.0
        %607 = vmatpush.xpose.msra.mxu0 0.0
        %608 = vmatpush.xpose.msra.mxu0 0.0
        %609 = vmatpush.xpose.msra.mxu0 0.0
        %610 = vmatpush.xpose.msra.mxu0 0.0
        %611 = vmatpush.xpose.msra.mxu0 0.0
        %612 = vmatpush.xpose.msra.mxu0 0.0
        %613 = vmatpush.xpose.msra.mxu0 0.0
        %614 = vmatpush.xpose.msra.mxu0 0.0
        %615 = vmatpush.xpose.msra.mxu0 0.0
        %616 = vmatpush.xpose.msra.mxu0 0.0
        %617 = vmatpush.xpose.msra.mxu0 0.0
        %618 = vmatpush.xpose.msra.mxu0 %v601
        %619 = vmatmul.f32.gmra.mxu0 %v598
        %v620 = vpop.f32.mrf.mxu0
        %v621 = vadd.f32 %v498, %v620
        %622 = vdwg.mxu0
        %v623 = vsel %vm596, %v621, -inf
        %624 = vmax.xlane.f32.xlu0 %v623
        %v625 = vpop.xlane.xlu0 %624
        %v626 = vsub.f32 %v621, %v625
        %v627 = vmul.f32 %v626, 1.442695
        %v628 = vpow.pop %v627
        %v629 = vsel %vm596, %v628, 0.0
        %630 = vadd.xlane.f32.xlu0 %v629
        %v631 = vpop.xlane.xlu0 %630
        %v632 = vrcp.pop %v631
        %v633 = vmul.f32 %v628, %v632
        %v635 = vsel %vm596, %v633, 0
        %637 = vmatpush.msra.mxu0 0.0
        %638 = vmatpush.msra.mxu0 0.0
        %639 = vmatpush.msra.mxu0 0.0
        %640 = vmatpush.msra.mxu0 0.0
        %641 = vmatpush.msra.mxu0 0.0
        %642 = vmatpush.msra.mxu0 0.0
        %643 = vmatpush.msra.mxu0 0.0
        %644 = vmatpush.msra.mxu0 0.0
        %645 = vmatpush.msra.mxu0 0.0
        %646 = vmatpush.msra.mxu0 0.0
        %647 = vmatpush.msra.mxu0 0.0
        %648 = vmatpush.msra.mxu0 0.0
        %649 = vmatpush.msra.mxu0 0.0
        %650 = vmatpush.msra.mxu0 0.0
        %651 = vmatpush.msra.mxu0 0.0
        %652 = vmatpush.msra.mxu0 %v594
        %653 = vmatmul.f32.gmra.mxu0 %v635
        %v654 = vpop.f32.mrf.mxu0
        %v655 = vadd.f32 0.0, %v654
        %656 = vdwg.mxu0
        %v657 = vld [vmem:[%s7] sm:$0xff]
        %s658 = scalar_lea.vmem %s6, 32
        %v659 = vld [vmem:[%s658] sm:$0xff]
        %v660 = vld [vmem:[%s658 + $0x8] sm:$0xff]
        %v661 = vld [vmem:[%s658 + $0x10] sm:$0xff]
        %v662 = vld [vmem:[%s658 + $0x18] sm:$0xff]
        %s663 = scalar_lea.vmem %s6, 160
        %v664 = vld [vmem:[%s663] sm:$0xff]
        %v665 = vld [vmem:[%s663 + $0x8] sm:$0xff]
        %v666 = vld [vmem:[%s663 + $0x10] sm:$0xff]
        %v667 = vld [vmem:[%s663 + $0x18] sm:$0xff]
        %s668 = scalar_lea.vmem %s6, 288
        %v669 = vld [vmem:[%s668] sm:$0xff]
        %v670 = vld [vmem:[%s668 + $0x8] sm:$0xff]
        %v671 = vld [vmem:[%s668 + $0x10] sm:$0xff]
        %v672 = vld [vmem:[%s668 + $0x18] sm:$0xff]
        %v673 = vld [vmem:[%s10 + $0x1] sm:$0x1]
        %v674 = vld [vmem:[%s525 + $0x1] sm:$0x1]
        %v675 = vld [vmem:[%s527 + $0x1] sm:$0x1]
        %v676 = vperm.slane %v673, 0
        %677 = vmatpush.msra.mxu0 0.0
        %678 = vmatpush.msra.mxu0 0.0
        %679 = vmatpush.msra.mxu0 0.0
        %680 = vmatpush.msra.mxu0 0.0
        %681 = vmatpush.msra.mxu0 0.0
        %682 = vmatpush.msra.mxu0 0.0
        %683 = vmatpush.msra.mxu0 0.0
        %684 = vmatpush.msra.mxu0 0.0
        %685 = vmatpush.msra.mxu0 0.0
        %686 = vmatpush.msra.mxu0 0.0
        %687 = vmatpush.msra.mxu0 0.0
        %688 = vmatpush.msra.mxu0 0.0
        %689 = vmatpush.msra.mxu0 %v662
        %690 = vmatpush.msra.mxu0 %v661
        %691 = vmatpush.msra.mxu0 %v660
        %692 = vmatpush.msra.mxu0 %v659
        %693 = vmatmul.f32.gmra.mxu0 %v532
        %v694 = vpop.f32.mrf.mxu0
        %v695 = vadd.f32 %v676, %v694
        %696 = vdwg.mxu0
        %v697 = vperm.slane %v674, 0
        %698 = vmatpush.msra.mxu0 0.0
        %699 = vmatpush.msra.mxu0 0.0
        %700 = vmatpush.msra.mxu0 0.0
        %701 = vmatpush.msra.mxu0 0.0
        %702 = vmatpush.msra.mxu0 0.0
        %703 = vmatpush.msra.mxu0 0.0
        %704 = vmatpush.msra.mxu0 0.0
        %705 = vmatpush.msra.mxu0 0.0
        %706 = vmatpush.msra.mxu0 0.0
        %707 = vmatpush.msra.mxu0 0.0
        %708 = vmatpush.msra.mxu0 0.0
        %709 = vmatpush.msra.mxu0 0.0
        %710 = vmatpush.msra.mxu0 %v667
        %711 = vmatpush.msra.mxu0 %v666
        %712 = vmatpush.msra.mxu0 %v665
        %713 = vmatpush.msra.mxu0 %v664
        %714 = vmatmul.f32.gmra.mxu0 %v532
        %v715 = vpop.f32.mrf.mxu0
        %v716 = vadd.f32 %v697, %v715
        %717 = vdwg.mxu0
        %v718 = vperm.slane %v675, 0
        %719 = vmatpush.msra.mxu0 0.0
        %720 = vmatpush.msra.mxu0 0.0
        %721 = vmatpush.msra.mxu0 0.0
        %722 = vmatpush.msra.mxu0 0.0
        %723 = vmatpush.msra.mxu0 0.0
        %724 = vmatpush.msra.mxu0 0.0
        %725 = vmatpush.msra.mxu0 0.0
        %726 = vmatpush.msra.mxu0 0.0
        %727 = vmatpush.msra.mxu0 0.0
        %728 = vmatpush.msra.mxu0 0.0
        %729 = vmatpush.msra.mxu0 0.0
        %730 = vmatpush.msra.mxu0 0.0
        %731 = vmatpush.msra.mxu0 %v672
        %732 = vmatpush.msra.mxu0 %v671
        %733 = vmatpush.msra.mxu0 %v670
        %734 = vmatpush.msra.mxu0 %v669
        %735 = vmatmul.f32.gmra.mxu0 %v532
        %v736 = vpop.f32.mrf.mxu0
        %v737 = vadd.f32 %v718, %v736
        %738 = vdwg.mxu0
        %v740 = vsel %vm596, %v695, 0
        %v743 = vsel %vm596, %v716, 0
        %745 = vmatpush.xpose.msra.mxu0 0.0
        %746 = vmatpush.xpose.msra.mxu0 0.0
        %747 = vmatpush.xpose.msra.mxu0 0.0
        %748 = vmatpush.xpose.msra.mxu0 0.0
        %749 = vmatpush.xpose.msra.mxu0 0.0
        %750 = vmatpush.xpose.msra.mxu0 0.0
        %751 = vmatpush.xpose.msra.mxu0 0.0
        %752 = vmatpush.xpose.msra.mxu0 0.0
        %753 = vmatpush.xpose.msra.mxu0 0.0
        %754 = vmatpush.xpose.msra.mxu0 0.0
        %755 = vmatpush.xpose.msra.mxu0 0.0
        %756 = vmatpush.xpose.msra.mxu0 0.0
        %757 = vmatpush.xpose.msra.mxu0 0.0
        %758 = vmatpush.xpose.msra.mxu0 0.0
        %759 = vmatpush.xpose.msra.mxu0 0.0
        %760 = vmatpush.xpose.msra.mxu0 %v743
        %761 = vmatmul.f32.gmra.mxu0 %v740
        %v762 = vpop.f32.mrf.mxu0
        %v763 = vadd.f32 %v498, %v762
        %764 = vdwg.mxu0
        %v765 = vsel %vm596, %v763, -inf
        %766 = vmax.xlane.f32.xlu0 %v765
        %v767 = vpop.xlane.xlu0 %766
        %v768 = vsub.f32 %v763, %v767
        %v769 = vmul.f32 %v768, 1.442695
        %v770 = vpow.pop %v769
        %v771 = vsel %vm596, %v770, 0.0
        %772 = vadd.xlane.f32.xlu0 %v771
        %v773 = vpop.xlane.xlu0 %772
        %v774 = vrcp.pop %v773
        %v775 = vmul.f32 %v770, %v774
        %v777 = vsel %vm596, %v775, 0
        %779 = vmatpush.msra.mxu0 0.0
        %780 = vmatpush.msra.mxu0 0.0
        %781 = vmatpush.msra.mxu0 0.0
        %782 = vmatpush.msra.mxu0 0.0
        %783 = vmatpush.msra.mxu0 0.0
        %784 = vmatpush.msra.mxu0 0.0
        %785 = vmatpush.msra.mxu0 0.0
        %786 = vmatpush.msra.mxu0 0.0
        %787 = vmatpush.msra.mxu0 0.0
        %788 = vmatpush.msra.mxu0 0.0
        %789 = vmatpush.msra.mxu0 0.0
        %790 = vmatpush.msra.mxu0 0.0
        %791 = vmatpush.msra.mxu0 0.0
        %792 = vmatpush.msra.mxu0 0.0
        %793 = vmatpush.msra.mxu0 0.0
        %794 = vmatpush.msra.mxu0 %v737
        %795 = vmatmul.f32.gmra.mxu0 %v777
        %v796 = vpop.f32.mrf.mxu0
        %v797 = vadd.f32 0.0, %v796
        %798 = vdwg.mxu0
        %s799 = scalar_lea.vmem %s7, 8
        %v800 = vld [vmem:[%s799] sm:$0xff]
        %v802 = vsel %vm596, %v797, 0
        %804 = vmatpush.msra.mxu0 0.0
        %805 = vmatpush.msra.mxu0 0.0
        %806 = vmatpush.msra.mxu0 0.0
        %807 = vmatpush.msra.mxu0 0.0
        %808 = vmatpush.msra.mxu0 0.0
        %809 = vmatpush.msra.mxu0 0.0
        %810 = vmatpush.msra.mxu0 0.0
        %811 = vmatpush.msra.mxu0 0.0
        %812 = vmatpush.msra.mxu0 0.0
        %813 = vmatpush.msra.mxu0 0.0
        %814 = vmatpush.msra.mxu0 0.0
        %815 = vmatpush.msra.mxu0 0.0
        %816 = vmatpush.msra.mxu0 0.0
        %817 = vmatpush.msra.mxu0 0.0
        %818 = vmatpush.msra.mxu0 0.0
        %819 = vmatpush.msra.mxu0 %v800
        %820 = vmatmul.f32.gmra.mxu0 %v802
        %v821 = vpop.f32.mrf.mxu0
        %v822 = vadd.f32 0.0, %v821
        %823 = vdwg.mxu0
        %v825 = vsel %vm596, %v655, 0
        %827 = vmatpush.msra.mxu0 0.0
        %828 = vmatpush.msra.mxu0 0.0
        %829 = vmatpush.msra.mxu0 0.0
        %830 = vmatpush.msra.mxu0 0.0
        %831 = vmatpush.msra.mxu0 0.0
        %832 = vmatpush.msra.mxu0 0.0
        %833 = vmatpush.msra.mxu0 0.0
        %834 = vmatpush.msra.mxu0 0.0
        %835 = vmatpush.msra.mxu0 0.0
        %836 = vmatpush.msra.mxu0 0.0
        %837 = vmatpush.msra.mxu0 0.0
        %838 = vmatpush.msra.mxu0 0.0
        %839 = vmatpush.msra.mxu0 0.0
        %840 = vmatpush.msra.mxu0 0.0
        %841 = vmatpush.msra.mxu0 0.0
        %842 = vmatpush.msra.mxu0 %v657
        %843 = vmatmul.f32.gmra.mxu0 %v825
        %v844 = vpop.f32.mrf.mxu0
        %v845 = vadd.f32 %v822, %v844
        %846 = vdwg.mxu0
        %s847 = scalar_lea.vmem %s6, 64
        %v848 = vld [vmem:[%s847] sm:$0xff]
        %v849 = vld [vmem:[%s847 + $0x8] sm:$0xff]
        %v850 = vld [vmem:[%s847 + $0x10] sm:$0xff]
        %v851 = vld [vmem:[%s847 + $0x18] sm:$0xff]
        %s852 = scalar_lea.vmem %s6, 192
        %v853 = vld [vmem:[%s852] sm:$0xff]
        %v854 = vld [vmem:[%s852 + $0x8] sm:$0xff]
        %v855 = vld [vmem:[%s852 + $0x10] sm:$0xff]
        %v856 = vld [vmem:[%s852 + $0x18] sm:$0xff]
        %s857 = scalar_lea.vmem %s6, 320
        %v858 = vld [vmem:[%s857] sm:$0xff]
        %v859 = vld [vmem:[%s857 + $0x8] sm:$0xff]
        %v860 = vld [vmem:[%s857 + $0x10] sm:$0xff]
        %v861 = vld [vmem:[%s857 + $0x18] sm:$0xff]
        %v862 = vld [vmem:[%s10 + $0x2] sm:$0x1]
        %v863 = vld [vmem:[%s525 + $0x2] sm:$0x1]
        %v864 = vld [vmem:[%s527 + $0x2] sm:$0x1]
        %v865 = vperm.slane %v862, 0
        %866 = vmatpush.msra.mxu0 0.0
        %867 = vmatpush.msra.mxu0 0.0
        %868 = vmatpush.msra.mxu0 0.0
        %869 = vmatpush.msra.mxu0 0.0
        %870 = vmatpush.msra.mxu0 0.0
        %871 = vmatpush.msra.mxu0 0.0
        %872 = vmatpush.msra.mxu0 0.0
        %873 = vmatpush.msra.mxu0 0.0
        %874 = vmatpush.msra.mxu0 0.0
        %875 = vmatpush.msra.mxu0 0.0
        %876 = vmatpush.msra.mxu0 0.0
        %877 = vmatpush.msra.mxu0 0.0
        %878 = vmatpush.msra.mxu0 %v851
        %879 = vmatpush.msra.mxu0 %v850
        %880 = vmatpush.msra.mxu0 %v849
        %881 = vmatpush.msra.mxu0 %v848
        %882 = vmatmul.f32.gmra.mxu0 %v532
        %v883 = vpop.f32.mrf.mxu0
        %v884 = vadd.f32 %v865, %v883
        %885 = vdwg.mxu0
        %v886 = vperm.slane %v863, 0
        %887 = vmatpush.msra.mxu0 0.0
        %888 = vmatpush.msra.mxu0 0.0
        %889 = vmatpush.msra.mxu0 0.0
        %890 = vmatpush.msra.mxu0 0.0
        %891 = vmatpush.msra.mxu0 0.0
        %892 = vmatpush.msra.mxu0 0.0
        %893 = vmatpush.msra.mxu0 0.0
        %894 = vmatpush.msra.mxu0 0.0
        %895 = vmatpush.msra.mxu0 0.0
        %896 = vmatpush.msra.mxu0 0.0
        %897 = vmatpush.msra.mxu0 0.0
        %898 = vmatpush.msra.mxu0 0.0
        %899 = vmatpush.msra.mxu0 %v856
        %900 = vmatpush.msra.mxu0 %v855
        %901 = vmatpush.msra.mxu0 %v854
        %902 = vmatpush.msra.mxu0 %v853
        %903 = vmatmul.f32.gmra.mxu0 %v532
        %v904 = vpop.f32.mrf.mxu0
        %v905 = vadd.f32 %v886, %v904
        %906 = vdwg.mxu0
        %v907 = vperm.slane %v864, 0
        %908 = vmatpush.msra.mxu0 0.0
        %909 = vmatpush.msra.mxu0 0.0
        %910 = vmatpush.msra.mxu0 0.0
        %911 = vmatpush.msra.mxu0 0.0
        %912 = vmatpush.msra.mxu0 0.0
        %913 = vmatpush.msra.mxu0 0.0
        %914 = vmatpush.msra.mxu0 0.0
        %915 = vmatpush.msra.mxu0 0.0
        %916 = vmatpush.msra.mxu0 0.0
        %917 = vmatpush.msra.mxu0 0.0
        %918 = vmatpush.msra.mxu0 0.0
        %919 = vmatpush.msra.mxu0 0.0
        %920 = vmatpush.msra.mxu0 %v861
        %921 = vmatpush.msra.mxu0 %v860
        %922 = vmatpush.msra.mxu0 %v859
        %923 = vmatpush.msra.mxu0 %v858
        %924 = vmatmul.f32.gmra.mxu0 %v532
        %v925 = vpop.f32.mrf.mxu0
        %v926 = vadd.f32 %v907, %v925
        %927 = vdwg.mxu0
        %v929 = vsel %vm596, %v884, 0
        %v932 = vsel %vm596, %v905, 0
        %934 = vmatpush.xpose.msra.mxu0 0.0
        %935 = vmatpush.xpose.msra.mxu0 0.0
        %936 = vmatpush.xpose.msra.mxu0 0.0
        %937 = vmatpush.xpose.msra.mxu0 0.0
        %938 = vmatpush.xpose.msra.mxu0 0.0
        %939 = vmatpush.xpose.msra.mxu0 0.0
        %940 = vmatpush.xpose.msra.mxu0 0.0
        %941 = vmatpush.xpose.msra.mxu0 0.0
        %942 = vmatpush.xpose.msra.mxu0 0.0
        %943 = vmatpush.xpose.msra.mxu0 0.0
        %944 = vmatpush.xpose.msra.mxu0 0.0
        %945 = vmatpush.xpose.msra.mxu0 0.0
        %946 = vmatpush.xpose.msra.mxu0 0.0
        %947 = vmatpush.xpose.msra.mxu0 0.0
        %948 = vmatpush.xpose.msra.mxu0 0.0
        %949 = vmatpush.xpose.msra.mxu0 %v932
        %950 = vmatmul.f32.gmra.mxu0 %v929
        %v951 = vpop.f32.mrf.mxu0
        %v952 = vadd.f32 %v498, %v951
        %953 = vdwg.mxu0
        %v954 = vsel %vm596, %v952, -inf
        %955 = vmax.xlane.f32.xlu0 %v954
        %v956 = vpop.xlane.xlu0 %955
        %v957 = vsub.f32 %v952, %v956
        %v958 = vmul.f32 %v957, 1.442695
        %v959 = vpow.pop %v958
        %v960 = vsel %vm596, %v959, 0.0
        %961 = vadd.xlane.f32.xlu0 %v960
        %v962 = vpop.xlane.xlu0 %961
        %v963 = vrcp.pop %v962
        %v964 = vmul.f32 %v959, %v963
        %v966 = vsel %vm596, %v964, 0
        %968 = vmatpush.msra.mxu0 0.0
        %969 = vmatpush.msra.mxu0 0.0
        %970 = vmatpush.msra.mxu0 0.0
        %971 = vmatpush.msra.mxu0 0.0
        %972 = vmatpush.msra.mxu0 0.0
        %973 = vmatpush.msra.mxu0 0.0
        %974 = vmatpush.msra.mxu0 0.0
        %975 = vmatpush.msra.mxu0 0.0
        %976 = vmatpush.msra.mxu0 0.0
        %977 = vmatpush.msra.mxu0 0.0
        %978 = vmatpush.msra.mxu0 0.0
        %979 = vmatpush.msra.mxu0 0.0
        %980 = vmatpush.msra.mxu0 0.0
        %981 = vmatpush.msra.mxu0 0.0
        %982 = vmatpush.msra.mxu0 0.0
        %983 = vmatpush.msra.mxu0 %v926
        %984 = vmatmul.f32.gmra.mxu0 %v966
        %v985 = vpop.f32.mrf.mxu0
        %v986 = vadd.f32 0.0, %v985
        %987 = vdwg.mxu0
        %s988 = scalar_lea.vmem %s7, 16
        %v989 = vld [vmem:[%s988] sm:$0xff]
        %v991 = vsel %vm596, %v986, 0
        %993 = vmatpush.msra.mxu0 0.0
        %994 = vmatpush.msra.mxu0 0.0
        %995 = vmatpush.msra.mxu0 0.0
        %996 = vmatpush.msra.mxu0 0.0
        %997 = vmatpush.msra.mxu0 0.0
        %998 = vmatpush.msra.mxu0 0.0
        %999 = vmatpush.msra.mxu0 0.0
        %1000 = vmatpush.msra.mxu0 0.0
        %1001 = vmatpush.msra.mxu0 0.0
        %1002 = vmatpush.msra.mxu0 0.0
        %1003 = vmatpush.msra.mxu0 0.0
        %1004 = vmatpush.msra.mxu0 0.0
        %1005 = vmatpush.msra.mxu0 0.0
        %1006 = vmatpush.msra.mxu0 0.0
        %1007 = vmatpush.msra.mxu0 0.0
        %1008 = vmatpush.msra.mxu0 %v989
        %1009 = vmatmul.f32.gmra.mxu0 %v991
        %v1010 = vpop.f32.mrf.mxu0
        %v1011 = vadd.f32 0.0, %v1010
        %1012 = vdwg.mxu0
        %v1013 = vadd.f32 %v845, %v1011
        %s1014 = scalar_lea.vmem %s6, 96
        %v1015 = vld [vmem:[%s1014] sm:$0xff]
        %v1016 = vld [vmem:[%s1014 + $0x8] sm:$0xff]
        %v1017 = vld [vmem:[%s1014 + $0x10] sm:$0xff]
        %v1018 = vld [vmem:[%s1014 + $0x18] sm:$0xff]
        %s1019 = scalar_lea.vmem %s6, 224
        %v1020 = vld [vmem:[%s1019] sm:$0xff]
        %v1021 = vld [vmem:[%s1019 + $0x8] sm:$0xff]
        %v1022 = vld [vmem:[%s1019 + $0x10] sm:$0xff]
        %v1023 = vld [vmem:[%s1019 + $0x18] sm:$0xff]
        %s1024 = scalar_lea.vmem %s6, 352
        %v1025 = vld [vmem:[%s1024] sm:$0xff]
        %v1026 = vld [vmem:[%s1024 + $0x8] sm:$0xff]
        %v1027 = vld [vmem:[%s1024 + $0x10] sm:$0xff]
        %v1028 = vld [vmem:[%s1024 + $0x18] sm:$0xff]
        %v1029 = vld [vmem:[%s10 + $0x3] sm:$0x1]
        %v1030 = vld [vmem:[%s525 + $0x3] sm:$0x1]
        %v1031 = vld [vmem:[%s527 + $0x3] sm:$0x1]
        %v1032 = vperm.slane %v1029, 0
        %1033 = vmatpush.msra.mxu0 0.0
        %1034 = vmatpush.msra.mxu0 0.0
        %1035 = vmatpush.msra.mxu0 0.0
        %1036 = vmatpush.msra.mxu0 0.0
        %1037 = vmatpush.msra.mxu0 0.0
        %1038 = vmatpush.msra.mxu0 0.0
        %1039 = vmatpush.msra.mxu0 0.0
        %1040 = vmatpush.msra.mxu0 0.0
        %1041 = vmatpush.msra.mxu0 0.0
        %1042 = vmatpush.msra.mxu0 0.0
        %1043 = vmatpush.msra.mxu0 0.0
        %1044 = vmatpush.msra.mxu0 0.0
        %1045 = vmatpush.msra.mxu0 %v1018
        %1046 = vmatpush.msra.mxu0 %v1017
        %1047 = vmatpush.msra.mxu0 %v1016
        %1048 = vmatpush.msra.mxu0 %v1015
        %1049 = vmatmul.f32.gmra.mxu0 %v532
        %v1050 = vpop.f32.mrf.mxu0
        %v1051 = vadd.f32 %v1032, %v1050
        %1052 = vdwg.mxu0
        %v1053 = vperm.slane %v1030, 0
        %1054 = vmatpush.msra.mxu0 0.0
        %1055 = vmatpush.msra.mxu0 0.0
        %1056 = vmatpush.msra.mxu0 0.0
        %1057 = vmatpush.msra.mxu0 0.0
        %1058 = vmatpush.msra.mxu0 0.0
        %1059 = vmatpush.msra.mxu0 0.0
        %1060 = vmatpush.msra.mxu0 0.0
        %1061 = vmatpush.msra.mxu0 0.0
        %1062 = vmatpush.msra.mxu0 0.0
        %1063 = vmatpush.msra.mxu0 0.0
        %1064 = vmatpush.msra.mxu0 0.0
        %1065 = vmatpush.msra.mxu0 0.0
        %1066 = vmatpush.msra.mxu0 %v1023
        %1067 = vmatpush.msra.mxu0 %v1022
        %1068 = vmatpush.msra.mxu0 %v1021
        %1069 = vmatpush.msra.mxu0 %v1020
        %1070 = vmatmul.f32.gmra.mxu0 %v532
        %v1071 = vpop.f32.mrf.mxu0
        %v1072 = vadd.f32 %v1053, %v1071
        %1073 = vdwg.mxu0
        %v1074 = vperm.slane %v1031, 0
        %1075 = vmatpush.msra.mxu0 0.0
        %1076 = vmatpush.msra.mxu0 0.0
        %1077 = vmatpush.msra.mxu0 0.0
        %1078 = vmatpush.msra.mxu0 0.0
        %1079 = vmatpush.msra.mxu0 0.0
        %1080 = vmatpush.msra.mxu0 0.0
        %1081 = vmatpush.msra.mxu0 0.0
        %1082 = vmatpush.msra.mxu0 0.0
        %1083 = vmatpush.msra.mxu0 0.0
        %1084 = vmatpush.msra.mxu0 0.0
        %1085 = vmatpush.msra.mxu0 0.0
        %1086 = vmatpush.msra.mxu0 0.0
        %1087 = vmatpush.msra.mxu0 %v1028
        %1088 = vmatpush.msra.mxu0 %v1027
        %1089 = vmatpush.msra.mxu0 %v1026
        %1090 = vmatpush.msra.mxu0 %v1025
        %1091 = vmatmul.f32.gmra.mxu0 %v532
        %v1092 = vpop.f32.mrf.mxu0
        %v1093 = vadd.f32 %v1074, %v1092
        %1094 = vdwg.mxu0
        %v1096 = vsel %vm596, %v1051, 0
        %v1099 = vsel %vm596, %v1072, 0
        %1101 = vmatpush.xpose.msra.mxu0 0.0
        %1102 = vmatpush.xpose.msra.mxu0 0.0
        %1103 = vmatpush.xpose.msra.mxu0 0.0
        %1104 = vmatpush.xpose.msra.mxu0 0.0
        %1105 = vmatpush.xpose.msra.mxu0 0.0
        %1106 = vmatpush.xpose.msra.mxu0 0.0
        %1107 = vmatpush.xpose.msra.mxu0 0.0
        %1108 = vmatpush.xpose.msra.mxu0 0.0
        %1109 = vmatpush.xpose.msra.mxu0 0.0
        %1110 = vmatpush.xpose.msra.mxu0 0.0
        %1111 = vmatpush.xpose.msra.mxu0 0.0
        %1112 = vmatpush.xpose.msra.mxu0 0.0
        %1113 = vmatpush.xpose.msra.mxu0 0.0
        %1114 = vmatpush.xpose.msra.mxu0 0.0
        %1115 = vmatpush.xpose.msra.mxu0 0.0
        %1116 = vmatpush.xpose.msra.mxu0 %v1099
        %1117 = vmatmul.f32.gmra.mxu0 %v1096
        %v1118 = vpop.f32.mrf.mxu0
        %v1119 = vadd.f32 %v498, %v1118
        %1120 = vdwg.mxu0
        %v1121 = vsel %vm596, %v1119, -inf
        %1122 = vmax.xlane.f32.xlu0 %v1121
        %v1123 = vpop.xlane.xlu0 %1122
        %v1124 = vsub.f32 %v1119, %v1123
        %v1125 = vmul.f32 %v1124, 1.442695
        %v1126 = vpow.pop %v1125
        %v1127 = vsel %vm596, %v1126, 0.0
        %1128 = vadd.xlane.f32.xlu0 %v1127
        %v1129 = vpop.xlane.xlu0 %1128
        %v1130 = vrcp.pop %v1129
        %v1131 = vmul.f32 %v1126, %v1130
        %v1133 = vsel %vm596, %v1131, 0
        %1135 = vmatpush.msra.mxu0 0.0
        %1136 = vmatpush.msra.mxu0 0.0
        %1137 = vmatpush.msra.mxu0 0.0
        %1138 = vmatpush.msra.mxu0 0.0
        %1139 = vmatpush.msra.mxu0 0.0
        %1140 = vmatpush.msra.mxu0 0.0
        %1141 = vmatpush.msra.mxu0 0.0
        %1142 = vmatpush.msra.mxu0 0.0
        %1143 = vmatpush.msra.mxu0 0.0
        %1144 = vmatpush.msra.mxu0 0.0
        %1145 = vmatpush.msra.mxu0 0.0
        %1146 = vmatpush.msra.mxu0 0.0
        %1147 = vmatpush.msra.mxu0 0.0
        %1148 = vmatpush.msra.mxu0 0.0
        %1149 = vmatpush.msra.mxu0 0.0
        %1150 = vmatpush.msra.mxu0 %v1093
        %1151 = vmatmul.f32.gmra.mxu0 %v1133
        %v1152 = vpop.f32.mrf.mxu0
        %v1153 = vadd.f32 0.0, %v1152
        %1154 = vdwg.mxu0
        %s1155 = scalar_lea.vmem %s7, 24
        %v1156 = vld [vmem:[%s1155] sm:$0xff]
        %v1158 = vsel %vm596, %v1153, 0
        %1160 = vmatpush.msra.mxu0 0.0
        %1161 = vmatpush.msra.mxu0 0.0
        %1162 = vmatpush.msra.mxu0 0.0
        %1163 = vmatpush.msra.mxu0 0.0
        %1164 = vmatpush.msra.mxu0 0.0
        %1165 = vmatpush.msra.mxu0 0.0
        %1166 = vmatpush.msra.mxu0 0.0
        %1167 = vmatpush.msra.mxu0 0.0
        %1168 = vmatpush.msra.mxu0 0.0
        %1169 = vmatpush.msra.mxu0 0.0
        %1170 = vmatpush.msra.mxu0 0.0
        %1171 = vmatpush.msra.mxu0 0.0
        %1172 = vmatpush.msra.mxu0 0.0
        %1173 = vmatpush.msra.mxu0 0.0
        %1174 = vmatpush.msra.mxu0 0.0
        %1175 = vmatpush.msra.mxu0 %v1156
        %1176 = vmatmul.f32.gmra.mxu0 %v1158
        %v1177 = vpop.f32.mrf.mxu0
        %v1178 = vadd.f32 0.0, %v1177
        %1179 = vdwg.mxu0
        %v1180 = vadd.f32 %v1013, %v1178
        %v1181 = vperm.slane %v500, 0
        %v1182 = vadd.f32 %v1180, %v1181
        %v1183 = vadd.f32 %v1182, %v495
        %v1184 = vsel %vm530, %v1183, 0.0
        %1185 = vadd.xlane.f32.xlu0 %v1184
        %v1186 = vpop.xlane.xlu0 %1185
        %v1187 = vrcp.pop 32.0
        %v1188 = vmul.f32 32.0, %v1187
        %v1189 = vsub.f32 1.0, %v1188
        %v1190 = vmul.f32 %v1187, %v1189
        %v1191 = vadd.f32 %v1187, %v1190
        %vm1192 = vweird.f32 %v1187
        %v1193 = vsel %vm1192, %v1187, %v1191
        %v1194 = vmul.f32 %v1186, %v1193
        %v1195 = vmul.f32 %v1183, %v1183
        %v1196 = vsel %vm530, %v1195, 0.0
        %1197 = vadd.xlane.f32.xlu0 %v1196
        %v1198 = vpop.xlane.xlu0 %1197
        %v1199 = vmul.f32 %v1198, %v1193
        %v1200 = vmul.f32 %v1194, %v1194
        %v1201 = vsub.f32 %v1199, %v1200
        %v1202 = vsub.f32 %v1183, %v1194
        %v1203 = vadd.f32 %v1201, 1e-05
        %v1204 = vrsqrt.pop %v1203
        %v1205 = vmul.f32 %v1204, %v1203
        %v1206 = vmul.f32 %v1205, %v1204
        %v1207 = vmul.f32 0.5, %v1206
        %v1208 = vsub.f32 1.5, %v1207
        %v1209 = vmul.f32 %v1204, %v1208
        %vm1210 = vweird.f32 %v1203
        %vm1211 = vweird.f32 %v1204
        %vm1212 = vmor %vm1210, %vm1211
        %v1213 = vsel %vm1212, %v1204, %v1209
        %v1214 = vmul.f32 %v1202, %v1213
        %v1215 = vperm.slane %v504, 0
        %v1216 = vmul.f32 %v1214, %v1215
        %v1217 = vperm.slane %v505, 0
        %v1218 = vadd.f32 %v1216, %v1217
        %s1219 = scalar_lea.vmem %s6, 384
        %v1220 = vld [vmem:[%s1219] sm:$0xff]
        %v1221 = vld [vmem:[%s1219 + $0x8] sm:$0xff]
        %v1222 = vld [vmem:[%s1219 + $0x10] sm:$0xff]
        %v1223 = vld [vmem:[%s1219 + $0x18] sm:$0xff]
        %s1224 = scalar_lea.vmem %s6, 512
        %v1225 = vld [vmem:[%s1224] sm:$0xff]
        %v1226 = vld [vmem:[%s1224 + $0x8] sm:$0xff]
        %v1227 = vld [vmem:[%s1224 + $0x10] sm:$0xff]
        %v1228 = vld [vmem:[%s1224 + $0x18] sm:$0xff]
        %s1229 = scalar_lea.vmem %s6, 640
        %v1230 = vld [vmem:[%s1229] sm:$0xff]
        %v1231 = vld [vmem:[%s1229 + $0x8] sm:$0xff]
        %v1232 = vld [vmem:[%s1229 + $0x10] sm:$0xff]
        %v1233 = vld [vmem:[%s1229 + $0x18] sm:$0xff]
        %s1234 = scalar_lea.vmem %s10, 12
        %v1235 = vld [vmem:[%s1234] sm:$0x1]
        %s1236 = scalar_lea.vmem %s10, 16
        %v1237 = vld [vmem:[%s1236] sm:$0x1]
        %s1238 = scalar_lea.vmem %s10, 20
        %v1239 = vld [vmem:[%s1238] sm:$0x1]
        %v1240 = vperm.slane %v1235, 0
        %v1242 = vsel %vm530, %v1218, 0
        %1244 = vmatpush.msra.mxu0 0.0
        %1245 = vmatpush.msra.mxu0 0.0
        %1246 = vmatpush.msra.mxu0 0.0
        %1247 = vmatpush.msra.mxu0 0.0
        %1248 = vmatpush.msra.mxu0 0.0
        %1249 = vmatpush.msra.mxu0 0.0
        %1250 = vmatpush.msra.mxu0 0.0
        %1251 = vmatpush.msra.mxu0 0.0
        %1252 = vmatpush.msra.mxu0 0.0
        %1253 = vmatpush.msra.mxu0 0.0
        %1254 = vmatpush.msra.mxu0 0.0
        %1255 = vmatpush.msra.mxu0 0.0
        %1256 = vmatpush.msra.mxu0 %v1223
        %1257 = vmatpush.msra.mxu0 %v1222
        %1258 = vmatpush.msra.mxu0 %v1221
        %1259 = vmatpush.msra.mxu0 %v1220
        %1260 = vmatmul.f32.gmra.mxu0 %v1242
        %v1261 = vpop.f32.mrf.mxu0
        %v1262 = vadd.f32 %v1240, %v1261
        %1263 = vdwg.mxu0
        %v1264 = vperm.slane %v1237, 0
        %v1266 = vsel %vm530, %v497, 0
        %1268 = vmatpush.msra.mxu0 0.0
        %1269 = vmatpush.msra.mxu0 0.0
        %1270 = vmatpush.msra.mxu0 0.0
        %1271 = vmatpush.msra.mxu0 0.0
        %1272 = vmatpush.msra.mxu0 0.0
        %1273 = vmatpush.msra.mxu0 0.0
        %1274 = vmatpush.msra.mxu0 0.0
        %1275 = vmatpush.msra.mxu0 0.0
        %1276 = vmatpush.msra.mxu0 0.0
        %1277 = vmatpush.msra.mxu0 0.0
        %1278 = vmatpush.msra.mxu0 0.0
        %1279 = vmatpush.msra.mxu0 0.0
        %1280 = vmatpush.msra.mxu0 %v1228
        %1281 = vmatpush.msra.mxu0 %v1227
        %1282 = vmatpush.msra.mxu0 %v1226
        %1283 = vmatpush.msra.mxu0 %v1225
        %1284 = vmatmul.f32.gmra.mxu0 %v1266
        %v1285 = vpop.f32.mrf.mxu0
        %v1286 = vadd.f32 %v1264, %v1285
        %1287 = vdwg.mxu0
        %v1288 = vperm.slane %v1239, 0
        %1289 = vmatpush.msra.mxu0 0.0
        %1290 = vmatpush.msra.mxu0 0.0
        %1291 = vmatpush.msra.mxu0 0.0
        %1292 = vmatpush.msra.mxu0 0.0
        %1293 = vmatpush.msra.mxu0 0.0
        %1294 = vmatpush.msra.mxu0 0.0
        %1295 = vmatpush.msra.mxu0 0.0
        %1296 = vmatpush.msra.mxu0 0.0
        %1297 = vmatpush.msra.mxu0 0.0
        %1298 = vmatpush.msra.mxu0 0.0
        %1299 = vmatpush.msra.mxu0 0.0
        %1300 = vmatpush.msra.mxu0 0.0
        %1301 = vmatpush.msra.mxu0 %v1233
        %1302 = vmatpush.msra.mxu0 %v1232
        %1303 = vmatpush.msra.mxu0 %v1231
        %1304 = vmatpush.msra.mxu0 %v1230
        %1305 = vmatmul.f32.gmra.mxu0 %v1266
        %v1306 = vpop.f32.mrf.mxu0
        %v1307 = vadd.f32 %v1288, %v1306
        %1308 = vdwg.mxu0
        %v1310 = vsel %vm596, %v1262, 0
        %v1313 = vsel %vm596, %v1286, 0
        %1315 = vmatpush.xpose.msra.mxu0 0.0
        %1316 = vmatpush.xpose.msra.mxu0 0.0
        %1317 = vmatpush.xpose.msra.mxu0 0.0
        %1318 = vmatpush.xpose.msra.mxu0 0.0
        %1319 = vmatpush.xpose.msra.mxu0 0.0
        %1320 = vmatpush.xpose.msra.mxu0 0.0
        %1321 = vmatpush.xpose.msra.mxu0 0.0
        %1322 = vmatpush.xpose.msra.mxu0 0.0
        %1323 = vmatpush.xpose.msra.mxu0 0.0
        %1324 = vmatpush.xpose.msra.mxu0 0.0
        %1325 = vmatpush.xpose.msra.mxu0 0.0
        %1326 = vmatpush.xpose.msra.mxu0 0.0
        %1327 = vmatpush.xpose.msra.mxu0 0.0
        %1328 = vmatpush.xpose.msra.mxu0 0.0
        %1329 = vmatpush.xpose.msra.mxu0 0.0
        %1330 = vmatpush.xpose.msra.mxu0 %v1313
        %1331 = vmatmul.f32.gmra.mxu0 %v1310
        %v1332 = vpop.f32.mrf.mxu0
        %v1333 = vadd.f32 %v499, %v1332
        %1334 = vdwg.mxu0
        %v1335 = vsel %vm596, %v1333, -inf
        %1336 = vmax.xlane.f32.xlu0 %v1335
        %v1337 = vpop.xlane.xlu0 %1336
        %v1338 = vsub.f32 %v1333, %v1337
        %v1339 = vmul.f32 %v1338, 1.442695
        %v1340 = vpow.pop %v1339
        %v1341 = vsel %vm596, %v1340, 0.0
        %1342 = vadd.xlane.f32.xlu0 %v1341
        %v1343 = vpop.xlane.xlu0 %1342
        %v1344 = vrcp.pop %v1343
        %v1345 = vmul.f32 %v1340, %v1344
        %v1347 = vsel %vm596, %v1345, 0
        %1349 = vmatpush.msra.mxu0 0.0
        %1350 = vmatpush.msra.mxu0 0.0
        %1351 = vmatpush.msra.mxu0 0.0
        %1352 = vmatpush.msra.mxu0 0.0
        %1353 = vmatpush.msra.mxu0 0.0
        %1354 = vmatpush.msra.mxu0 0.0
        %1355 = vmatpush.msra.mxu0 0.0
        %1356 = vmatpush.msra.mxu0 0.0
        %1357 = vmatpush.msra.mxu0 0.0
        %1358 = vmatpush.msra.mxu0 0.0
        %1359 = vmatpush.msra.mxu0 0.0
        %1360 = vmatpush.msra.mxu0 0.0
        %1361 = vmatpush.msra.mxu0 0.0
        %1362 = vmatpush.msra.mxu0 0.0
        %1363 = vmatpush.msra.mxu0 0.0
        %1364 = vmatpush.msra.mxu0 %v1307
        %1365 = vmatmul.f32.gmra.mxu0 %v1347
        %v1366 = vpop.f32.mrf.mxu0
        %v1367 = vadd.f32 0.0, %v1366
        %1368 = vdwg.mxu0
        %s1369 = scalar_lea.vmem %s7, 32
        %v1370 = vld [vmem:[%s1369] sm:$0xff]
        %s1371 = scalar_lea.vmem %s6, 416
        %v1372 = vld [vmem:[%s1371] sm:$0xff]
        %v1373 = vld [vmem:[%s1371 + $0x8] sm:$0xff]
        %v1374 = vld [vmem:[%s1371 + $0x10] sm:$0xff]
        %v1375 = vld [vmem:[%s1371 + $0x18] sm:$0xff]
        %s1376 = scalar_lea.vmem %s6, 544
        %v1377 = vld [vmem:[%s1376] sm:$0xff]
        %v1378 = vld [vmem:[%s1376 + $0x8] sm:$0xff]
        %v1379 = vld [vmem:[%s1376 + $0x10] sm:$0xff]
        %v1380 = vld [vmem:[%s1376 + $0x18] sm:$0xff]
        %s1381 = scalar_lea.vmem %s6, 672
        %v1382 = vld [vmem:[%s1381] sm:$0xff]
        %v1383 = vld [vmem:[%s1381 + $0x8] sm:$0xff]
        %v1384 = vld [vmem:[%s1381 + $0x10] sm:$0xff]
        %v1385 = vld [vmem:[%s1381 + $0x18] sm:$0xff]
        %v1386 = vld [vmem:[%s1234 + $0x1] sm:$0x1]
        %v1387 = vld [vmem:[%s1236 + $0x1] sm:$0x1]
        %v1388 = vld [vmem:[%s1238 + $0x1] sm:$0x1]
        %v1389 = vperm.slane %v1386, 0
        %1390 = vmatpush.msra.mxu0 0.0
        %1391 = vmatpush.msra.mxu0 0.0
        %1392 = vmatpush.msra.mxu0 0.0
        %1393 = vmatpush.msra.mxu0 0.0
        %1394 = vmatpush.msra.mxu0 0.0
        %1395 = vmatpush.msra.mxu0 0.0
        %1396 = vmatpush.msra.mxu0 0.0
        %1397 = vmatpush.msra.mxu0 0.0
        %1398 = vmatpush.msra.mxu0 0.0
        %1399 = vmatpush.msra.mxu0 0.0
        %1400 = vmatpush.msra.mxu0 0.0
        %1401 = vmatpush.msra.mxu0 0.0
        %1402 = vmatpush.msra.mxu0 %v1375
        %1403 = vmatpush.msra.mxu0 %v1374
        %1404 = vmatpush.msra.mxu0 %v1373
        %1405 = vmatpush.msra.mxu0 %v1372
        %1406 = vmatmul.f32.gmra.mxu0 %v1242
        %v1407 = vpop.f32.mrf.mxu0
        %v1408 = vadd.f32 %v1389, %v1407
        %1409 = vdwg.mxu0
        %v1410 = vperm.slane %v1387, 0
        %1411 = vmatpush.msra.mxu0 0.0
        %1412 = vmatpush.msra.mxu0 0.0
        %1413 = vmatpush.msra.mxu0 0.0
        %1414 = vmatpush.msra.mxu0 0.0
        %1415 = vmatpush.msra.mxu0 0.0
        %1416 = vmatpush.msra.mxu0 0.0
        %1417 = vmatpush.msra.mxu0 0.0
        %1418 = vmatpush.msra.mxu0 0.0
        %1419 = vmatpush.msra.mxu0 0.0
        %1420 = vmatpush.msra.mxu0 0.0
        %1421 = vmatpush.msra.mxu0 0.0
        %1422 = vmatpush.msra.mxu0 0.0
        %1423 = vmatpush.msra.mxu0 %v1380
        %1424 = vmatpush.msra.mxu0 %v1379
        %1425 = vmatpush.msra.mxu0 %v1378
        %1426 = vmatpush.msra.mxu0 %v1377
        %1427 = vmatmul.f32.gmra.mxu0 %v1266
        %v1428 = vpop.f32.mrf.mxu0
        %v1429 = vadd.f32 %v1410, %v1428
        %1430 = vdwg.mxu0
        %v1431 = vperm.slane %v1388, 0
        %1432 = vmatpush.msra.mxu0 0.0
        %1433 = vmatpush.msra.mxu0 0.0
        %1434 = vmatpush.msra.mxu0 0.0
        %1435 = vmatpush.msra.mxu0 0.0
        %1436 = vmatpush.msra.mxu0 0.0
        %1437 = vmatpush.msra.mxu0 0.0
        %1438 = vmatpush.msra.mxu0 0.0
        %1439 = vmatpush.msra.mxu0 0.0
        %1440 = vmatpush.msra.mxu0 0.0
        %1441 = vmatpush.msra.mxu0 0.0
        %1442 = vmatpush.msra.mxu0 0.0
        %1443 = vmatpush.msra.mxu0 0.0
        %1444 = vmatpush.msra.mxu0 %v1385
        %1445 = vmatpush.msra.mxu0 %v1384
        %1446 = vmatpush.msra.mxu0 %v1383
        %1447 = vmatpush.msra.mxu0 %v1382
        %1448 = vmatmul.f32.gmra.mxu0 %v1266
        %v1449 = vpop.f32.mrf.mxu0
        %v1450 = vadd.f32 %v1431, %v1449
        %1451 = vdwg.mxu0
        %v1453 = vsel %vm596, %v1408, 0
        %v1456 = vsel %vm596, %v1429, 0
        %1458 = vmatpush.xpose.msra.mxu0 0.0
        %1459 = vmatpush.xpose.msra.mxu0 0.0
        %1460 = vmatpush.xpose.msra.mxu0 0.0
        %1461 = vmatpush.xpose.msra.mxu0 0.0
        %1462 = vmatpush.xpose.msra.mxu0 0.0
        %1463 = vmatpush.xpose.msra.mxu0 0.0
        %1464 = vmatpush.xpose.msra.mxu0 0.0
        %1465 = vmatpush.xpose.msra.mxu0 0.0
        %1466 = vmatpush.xpose.msra.mxu0 0.0
        %1467 = vmatpush.xpose.msra.mxu0 0.0
        %1468 = vmatpush.xpose.msra.mxu0 0.0
        %1469 = vmatpush.xpose.msra.mxu0 0.0
        %1470 = vmatpush.xpose.msra.mxu0 0.0
        %1471 = vmatpush.xpose.msra.mxu0 0.0
        %1472 = vmatpush.xpose.msra.mxu0 0.0
        %1473 = vmatpush.xpose.msra.mxu0 %v1456
        %1474 = vmatmul.f32.gmra.mxu0 %v1453
        %v1475 = vpop.f32.mrf.mxu0
        %v1476 = vadd.f32 %v499, %v1475
        %1477 = vdwg.mxu0
        %v1478 = vsel %vm596, %v1476, -inf
        %1479 = vmax.xlane.f32.xlu0 %v1478
        %v1480 = vpop.xlane.xlu0 %1479
        %v1481 = vsub.f32 %v1476, %v1480
        %v1482 = vmul.f32 %v1481, 1.442695
        %v1483 = vpow.pop %v1482
        %v1484 = vsel %vm596, %v1483, 0.0
        %1485 = vadd.xlane.f32.xlu0 %v1484
        %v1486 = vpop.xlane.xlu0 %1485
        %v1487 = vrcp.pop %v1486
        %v1488 = vmul.f32 %v1483, %v1487
        %v1490 = vsel %vm596, %v1488, 0
        %1492 = vmatpush.msra.mxu0 0.0
        %1493 = vmatpush.msra.mxu0 0.0
        %1494 = vmatpush.msra.mxu0 0.0
        %1495 = vmatpush.msra.mxu0 0.0
        %1496 = vmatpush.msra.mxu0 0.0
        %1497 = vmatpush.msra.mxu0 0.0
        %1498 = vmatpush.msra.mxu0 0.0
        %1499 = vmatpush.msra.mxu0 0.0
        %1500 = vmatpush.msra.mxu0 0.0
        %1501 = vmatpush.msra.mxu0 0.0
        %1502 = vmatpush.msra.mxu0 0.0
        %1503 = vmatpush.msra.mxu0 0.0
        %1504 = vmatpush.msra.mxu0 0.0
        %1505 = vmatpush.msra.mxu0 0.0
        %1506 = vmatpush.msra.mxu0 0.0
        %1507 = vmatpush.msra.mxu0 %v1450
        %1508 = vmatmul.f32.gmra.mxu0 %v1490
        %v1509 = vpop.f32.mrf.mxu0
        %v1510 = vadd.f32 0.0, %v1509
        %1511 = vdwg.mxu0
        %s1512 = scalar_lea.vmem %s7, 40
        %v1513 = vld [vmem:[%s1512] sm:$0xff]
        %v1515 = vsel %vm596, %v1510, 0
        %1517 = vmatpush.msra.mxu0 0.0
        %1518 = vmatpush.msra.mxu0 0.0
        %1519 = vmatpush.msra.mxu0 0.0
        %1520 = vmatpush.msra.mxu0 0.0
        %1521 = vmatpush.msra.mxu0 0.0
        %1522 = vmatpush.msra.mxu0 0.0
        %1523 = vmatpush.msra.mxu0 0.0
        %1524 = vmatpush.msra.mxu0 0.0
        %1525 = vmatpush.msra.mxu0 0.0
        %1526 = vmatpush.msra.mxu0 0.0
        %1527 = vmatpush.msra.mxu0 0.0
        %1528 = vmatpush.msra.mxu0 0.0
        %1529 = vmatpush.msra.mxu0 0.0
        %1530 = vmatpush.msra.mxu0 0.0
        %1531 = vmatpush.msra.mxu0 0.0
        %1532 = vmatpush.msra.mxu0 %v1513
        %1533 = vmatmul.f32.gmra.mxu0 %v1515
        %v1534 = vpop.f32.mrf.mxu0
        %v1535 = vadd.f32 0.0, %v1534
        %1536 = vdwg.mxu0
        %v1538 = vsel %vm596, %v1367, 0
        %1540 = vmatpush.msra.mxu0 0.0
        %1541 = vmatpush.msra.mxu0 0.0
        %1542 = vmatpush.msra.mxu0 0.0
        %1543 = vmatpush.msra.mxu0 0.0
        %1544 = vmatpush.msra.mxu0 0.0
        %1545 = vmatpush.msra.mxu0 0.0
        %1546 = vmatpush.msra.mxu0 0.0
        %1547 = vmatpush.msra.mxu0 0.0
        %1548 = vmatpush.msra.mxu0 0.0
        %1549 = vmatpush.msra.mxu0 0.0
        %1550 = vmatpush.msra.mxu0 0.0
        %1551 = vmatpush.msra.mxu0 0.0
        %1552 = vmatpush.msra.mxu0 0.0
        %1553 = vmatpush.msra.mxu0 0.0
        %1554 = vmatpush.msra.mxu0 0.0
        %1555 = vmatpush.msra.mxu0 %v1370
        %1556 = vmatmul.f32.gmra.mxu0 %v1538
        %v1557 = vpop.f32.mrf.mxu0
        %v1558 = vadd.f32 %v1535, %v1557
        %1559 = vdwg.mxu0
        %s1560 = scalar_lea.vmem %s6, 448
        %v1561 = vld [vmem:[%s1560] sm:$0xff]
        %v1562 = vld [vmem:[%s1560 + $0x8] sm:$0xff]
        %v1563 = vld [vmem:[%s1560 + $0x10] sm:$0xff]
        %v1564 = vld [vmem:[%s1560 + $0x18] sm:$0xff]
        %s1565 = scalar_lea.vmem %s6, 576
        %v1566 = vld [vmem:[%s1565] sm:$0xff]
        %v1567 = vld [vmem:[%s1565 + $0x8] sm:$0xff]
        %v1568 = vld [vmem:[%s1565 + $0x10] sm:$0xff]
        %v1569 = vld [vmem:[%s1565 + $0x18] sm:$0xff]
        %s1570 = scalar_lea.vmem %s6, 704
        %v1571 = vld [vmem:[%s1570] sm:$0xff]
        %v1572 = vld [vmem:[%s1570 + $0x8] sm:$0xff]
        %v1573 = vld [vmem:[%s1570 + $0x10] sm:$0xff]
        %v1574 = vld [vmem:[%s1570 + $0x18] sm:$0xff]
        %v1575 = vld [vmem:[%s1234 + $0x2] sm:$0x1]
        %v1576 = vld [vmem:[%s1236 + $0x2] sm:$0x1]
        %v1577 = vld [vmem:[%s1238 + $0x2] sm:$0x1]
        %v1578 = vperm.slane %v1575, 0
        %1579 = vmatpush.msra.mxu0 0.0
        %1580 = vmatpush.msra.mxu0 0.0
        %1581 = vmatpush.msra.mxu0 0.0
        %1582 = vmatpush.msra.mxu0 0.0
        %1583 = vmatpush.msra.mxu0 0.0
        %1584 = vmatpush.msra.mxu0 0.0
        %1585 = vmatpush.msra.mxu0 0.0
        %1586 = vmatpush.msra.mxu0 0.0
        %1587 = vmatpush.msra.mxu0 0.0
        %1588 = vmatpush.msra.mxu0 0.0
        %1589 = vmatpush.msra.mxu0 0.0
        %1590 = vmatpush.msra.mxu0 0.0
        %1591 = vmatpush.msra.mxu0 %v1564
        %1592 = vmatpush.msra.mxu0 %v1563
        %1593 = vmatpush.msra.mxu0 %v1562
        %1594 = vmatpush.msra.mxu0 %v1561
        %1595 = vmatmul.f32.gmra.mxu0 %v1242
        %v1596 = vpop.f32.mrf.mxu0
        %v1597 = vadd.f32 %v1578, %v1596
        %1598 = vdwg.mxu0
        %v1599 = vperm.slane %v1576, 0
        %1600 = vmatpush.msra.mxu0 0.0
        %1601 = vmatpush.msra.mxu0 0.0
        %1602 = vmatpush.msra.mxu0 0.0
        %1603 = vmatpush.msra.mxu0 0.0
        %1604 = vmatpush.msra.mxu0 0.0
        %1605 = vmatpush.msra.mxu0 0.0
        %1606 = vmatpush.msra.mxu0 0.0
        %1607 = vmatpush.msra.mxu0 0.0
        %1608 = vmatpush.msra.mxu0 0.0
        %1609 = vmatpush.msra.mxu0 0.0
        %1610 = vmatpush.msra.mxu0 0.0
        %1611 = vmatpush.msra.mxu0 0.0
        %1612 = vmatpush.msra.mxu0 %v1569
        %1613 = vmatpush.msra.mxu0 %v1568
        %1614 = vmatpush.msra.mxu0 %v1567
        %1615 = vmatpush.msra.mxu0 %v1566
        %1616 = vmatmul.f32.gmra.mxu0 %v1266
        %v1617 = vpop.f32.mrf.mxu0
        %v1618 = vadd.f32 %v1599, %v1617
        %1619 = vdwg.mxu0
        %v1620 = vperm.slane %v1577, 0
        %1621 = vmatpush.msra.mxu0 0.0
        %1622 = vmatpush.msra.mxu0 0.0
        %1623 = vmatpush.msra.mxu0 0.0
        %1624 = vmatpush.msra.mxu0 0.0
        %1625 = vmatpush.msra.mxu0 0.0
        %1626 = vmatpush.msra.mxu0 0.0
        %1627 = vmatpush.msra.mxu0 0.0
        %1628 = vmatpush.msra.mxu0 0.0
        %1629 = vmatpush.msra.mxu0 0.0
        %1630 = vmatpush.msra.mxu0 0.0
        %1631 = vmatpush.msra.mxu0 0.0
        %1632 = vmatpush.msra.mxu0 0.0
        %1633 = vmatpush.msra.mxu0 %v1574
        %1634 = vmatpush.msra.mxu0 %v1573
        %1635 = vmatpush.msra.mxu0 %v1572
        %1636 = vmatpush.msra.mxu0 %v1571
        %1637 = vmatmul.f32.gmra.mxu0 %v1266
        %v1638 = vpop.f32.mrf.mxu0
        %v1639 = vadd.f32 %v1620, %v1638
        %1640 = vdwg.mxu0
        %v1642 = vsel %vm596, %v1597, 0
        %v1645 = vsel %vm596, %v1618, 0
        %1647 = vmatpush.xpose.msra.mxu0 0.0
        %1648 = vmatpush.xpose.msra.mxu0 0.0
        %1649 = vmatpush.xpose.msra.mxu0 0.0
        %1650 = vmatpush.xpose.msra.mxu0 0.0
        %1651 = vmatpush.xpose.msra.mxu0 0.0
        %1652 = vmatpush.xpose.msra.mxu0 0.0
        %1653 = vmatpush.xpose.msra.mxu0 0.0
        %1654 = vmatpush.xpose.msra.mxu0 0.0
        %1655 = vmatpush.xpose.msra.mxu0 0.0
        %1656 = vmatpush.xpose.msra.mxu0 0.0
        %1657 = vmatpush.xpose.msra.mxu0 0.0
        %1658 = vmatpush.xpose.msra.mxu0 0.0
        %1659 = vmatpush.xpose.msra.mxu0 0.0
        %1660 = vmatpush.xpose.msra.mxu0 0.0
        %1661 = vmatpush.xpose.msra.mxu0 0.0
        %1662 = vmatpush.xpose.msra.mxu0 %v1645
        %1663 = vmatmul.f32.gmra.mxu0 %v1642
        %v1664 = vpop.f32.mrf.mxu0
        %v1665 = vadd.f32 %v499, %v1664
        %1666 = vdwg.mxu0
        %v1667 = vsel %vm596, %v1665, -inf
        %1668 = vmax.xlane.f32.xlu0 %v1667
        %v1669 = vpop.xlane.xlu0 %1668
        %v1670 = vsub.f32 %v1665, %v1669
        %v1671 = vmul.f32 %v1670, 1.442695
        %v1672 = vpow.pop %v1671
        %v1673 = vsel %vm596, %v1672, 0.0
        %1674 = vadd.xlane.f32.xlu0 %v1673
        %v1675 = vpop.xlane.xlu0 %1674
        %v1676 = vrcp.pop %v1675
        %v1677 = vmul.f32 %v1672, %v1676
        %v1679 = vsel %vm596, %v1677, 0
        %1681 = vmatpush.msra.mxu0 0.0
        %1682 = vmatpush.msra.mxu0 0.0
        %1683 = vmatpush.msra.mxu0 0.0
        %1684 = vmatpush.msra.mxu0 0.0
        %1685 = vmatpush.msra.mxu0 0.0
        %1686 = vmatpush.msra.mxu0 0.0
        %1687 = vmatpush.msra.mxu0 0.0
        %1688 = vmatpush.msra.mxu0 0.0
        %1689 = vmatpush.msra.mxu0 0.0
        %1690 = vmatpush.msra.mxu0 0.0
        %1691 = vmatpush.msra.mxu0 0.0
        %1692 = vmatpush.msra.mxu0 0.0
        %1693 = vmatpush.msra.mxu0 0.0
        %1694 = vmatpush.msra.mxu0 0.0
        %1695 = vmatpush.msra.mxu0 0.0
        %1696 = vmatpush.msra.mxu0 %v1639
        %1697 = vmatmul.f32.gmra.mxu0 %v1679
        %v1698 = vpop.f32.mrf.mxu0
        %v1699 = vadd.f32 0.0, %v1698
        %1700 = vdwg.mxu0
        %s1701 = scalar_lea.vmem %s7, 48
        %v1702 = vld [vmem:[%s1701] sm:$0xff]
        %v1704 = vsel %vm596, %v1699, 0
        %1706 = vmatpush.msra.mxu0 0.0
        %1707 = vmatpush.msra.mxu0 0.0
        %1708 = vmatpush.msra.mxu0 0.0
        %1709 = vmatpush.msra.mxu0 0.0
        %1710 = vmatpush.msra.mxu0 0.0
        %1711 = vmatpush.msra.mxu0 0.0
        %1712 = vmatpush.msra.mxu0 0.0
        %1713 = vmatpush.msra.mxu0 0.0
        %1714 = vmatpush.msra.mxu0 0.0
        %1715 = vmatpush.msra.mxu0 0.0
        %1716 = vmatpush.msra.mxu0 0.0
        %1717 = vmatpush.msra.mxu0 0.0
        %1718 = vmatpush.msra.mxu0 0.0
        %1719 = vmatpush.msra.mxu0 0.0
        %1720 = vmatpush.msra.mxu0 0.0
        %1721 = vmatpush.msra.mxu0 %v1702
        %1722 = vmatmul.f32.gmra.mxu0 %v1704
        %v1723 = vpop.f32.mrf.mxu0
        %v1724 = vadd.f32 0.0, %v1723
        %1725 = vdwg.mxu0
        %v1726 = vadd.f32 %v1558, %v1724
        %s1727 = scalar_lea.vmem %s6, 480
        %v1728 = vld [vmem:[%s1727] sm:$0xff]
        %v1729 = vld [vmem:[%s1727 + $0x8] sm:$0xff]
        %v1730 = vld [vmem:[%s1727 + $0x10] sm:$0xff]
        %v1731 = vld [vmem:[%s1727 + $0x18] sm:$0xff]
        %s1732 = scalar_lea.vmem %s6, 608
        %v1733 = vld [vmem:[%s1732] sm:$0xff]
        %v1734 = vld [vmem:[%s1732 + $0x8] sm:$0xff]
        %v1735 = vld [vmem:[%s1732 + $0x10] sm:$0xff]
        %v1736 = vld [vmem:[%s1732 + $0x18] sm:$0xff]
        %s1737 = scalar_lea.vmem %s6, 736
        %v1738 = vld [vmem:[%s1737] sm:$0xff]
        %v1739 = vld [vmem:[%s1737 + $0x8] sm:$0xff]
        %v1740 = vld [vmem:[%s1737 + $0x10] sm:$0xff]
        %v1741 = vld [vmem:[%s1737 + $0x18] sm:$0xff]
        %v1742 = vld [vmem:[%s1234 + $0x3] sm:$0x1]
        %v1743 = vld [vmem:[%s1236 + $0x3] sm:$0x1]
        %v1744 = vld [vmem:[%s1238 + $0x3] sm:$0x1]
        %v1745 = vperm.slane %v1742, 0
        %1746 = vmatpush.msra.mxu0 0.0
        %1747 = vmatpush.msra.mxu0 0.0
        %1748 = vmatpush.msra.mxu0 0.0
        %1749 = vmatpush.msra.mxu0 0.0
        %1750 = vmatpush.msra.mxu0 0.0
        %1751 = vmatpush.msra.mxu0 0.0
        %1752 = vmatpush.msra.mxu0 0.0
        %1753 = vmatpush.msra.mxu0 0.0
        %1754 = vmatpush.msra.mxu0 0.0
        %1755 = vmatpush.msra.mxu0 0.0
        %1756 = vmatpush.msra.mxu0 0.0
        %1757 = vmatpush.msra.mxu0 0.0
        %1758 = vmatpush.msra.mxu0 %v1731
        %1759 = vmatpush.msra.mxu0 %v1730
        %1760 = vmatpush.msra.mxu0 %v1729
        %1761 = vmatpush.msra.mxu0 %v1728
        %1762 = vmatmul.f32.gmra.mxu0 %v1242
        %v1763 = vpop.f32.mrf.mxu0
        %v1764 = vadd.f32 %v1745, %v1763
        %1765 = vdwg.mxu0
        %v1766 = vperm.slane %v1743, 0
        %1767 = vmatpush.msra.mxu0 0.0
        %1768 = vmatpush.msra.mxu0 0.0
        %1769 = vmatpush.msra.mxu0 0.0
        %1770 = vmatpush.msra.mxu0 0.0
        %1771 = vmatpush.msra.mxu0 0.0
        %1772 = vmatpush.msra.mxu0 0.0
        %1773 = vmatpush.msra.mxu0 0.0
        %1774 = vmatpush.msra.mxu0 0.0
        %1775 = vmatpush.msra.mxu0 0.0
        %1776 = vmatpush.msra.mxu0 0.0
        %1777 = vmatpush.msra.mxu0 0.0
        %1778 = vmatpush.msra.mxu0 0.0
        %1779 = vmatpush.msra.mxu0 %v1736
        %1780 = vmatpush.msra.mxu0 %v1735
        %1781 = vmatpush.msra.mxu0 %v1734
        %1782 = vmatpush.msra.mxu0 %v1733
        %1783 = vmatmul.f32.gmra.mxu0 %v1266
        %v1784 = vpop.f32.mrf.mxu0
        %v1785 = vadd.f32 %v1766, %v1784
        %1786 = vdwg.mxu0
        %v1787 = vperm.slane %v1744, 0
        %1788 = vmatpush.msra.mxu0 0.0
        %1789 = vmatpush.msra.mxu0 0.0
        %1790 = vmatpush.msra.mxu0 0.0
        %1791 = vmatpush.msra.mxu0 0.0
        %1792 = vmatpush.msra.mxu0 0.0
        %1793 = vmatpush.msra.mxu0 0.0
        %1794 = vmatpush.msra.mxu0 0.0
        %1795 = vmatpush.msra.mxu0 0.0
        %1796 = vmatpush.msra.mxu0 0.0
        %1797 = vmatpush.msra.mxu0 0.0
        %1798 = vmatpush.msra.mxu0 0.0
        %1799 = vmatpush.msra.mxu0 0.0
        %1800 = vmatpush.msra.mxu0 %v1741
        %1801 = vmatpush.msra.mxu0 %v1740
        %1802 = vmatpush.msra.mxu0 %v1739
        %1803 = vmatpush.msra.mxu0 %v1738
        %1804 = vmatmul.f32.gmra.mxu0 %v1266
        %v1805 = vpop.f32.mrf.mxu0
        %v1806 = vadd.f32 %v1787, %v1805
        %1807 = vdwg.mxu0
        %v1809 = vsel %vm596, %v1764, 0
        %v1812 = vsel %vm596, %v1785, 0
        %1814 = vmatpush.xpose.msra.mxu0 0.0
        %1815 = vmatpush.xpose.msra.mxu0 0.0
        %1816 = vmatpush.xpose.msra.mxu0 0.0
        %1817 = vmatpush.xpose.msra.mxu0 0.0
        %1818 = vmatpush.xpose.msra.mxu0 0.0
        %1819 = vmatpush.xpose.msra.mxu0 0.0
        %1820 = vmatpush.xpose.msra.mxu0 0.0
        %1821 = vmatpush.xpose.msra.mxu0 0.0
        %1822 = vmatpush.xpose.msra.mxu0 0.0
        %1823 = vmatpush.xpose.msra.mxu0 0.0
        %1824 = vmatpush.xpose.msra.mxu0 0.0
        %1825 = vmatpush.xpose.msra.mxu0 0.0
        %1826 = vmatpush.xpose.msra.mxu0 0.0
        %1827 = vmatpush.xpose.msra.mxu0 0.0
        %1828 = vmatpush.xpose.msra.mxu0 0.0
        %1829 = vmatpush.xpose.msra.mxu0 %v1812
        %1830 = vmatmul.f32.gmra.mxu0 %v1809
        %v1831 = vpop.f32.mrf.mxu0
        %v1832 = vadd.f32 %v499, %v1831
        %1833 = vdwg.mxu0
        %v1834 = vsel %vm596, %v1832, -inf
        %1835 = vmax.xlane.f32.xlu0 %v1834
        %v1836 = vpop.xlane.xlu0 %1835
        %v1837 = vsub.f32 %v1832, %v1836
        %v1838 = vmul.f32 %v1837, 1.442695
        %v1839 = vpow.pop %v1838
        %v1840 = vsel %vm596, %v1839, 0.0
        %1841 = vadd.xlane.f32.xlu0 %v1840
        %v1842 = vpop.xlane.xlu0 %1841
        %v1843 = vrcp.pop %v1842
        %v1844 = vmul.f32 %v1839, %v1843
        %v1846 = vsel %vm596, %v1844, 0
        %1848 = vmatpush.msra.mxu0 0.0
        %1849 = vmatpush.msra.mxu0 0.0
        %1850 = vmatpush.msra.mxu0 0.0
        %1851 = vmatpush.msra.mxu0 0.0
        %1852 = vmatpush.msra.mxu0 0.0
        %1853 = vmatpush.msra.mxu0 0.0
        %1854 = vmatpush.msra.mxu0 0.0
        %1855 = vmatpush.msra.mxu0 0.0
        %1856 = vmatpush.msra.mxu0 0.0
        %1857 = vmatpush.msra.mxu0 0.0
        %1858 = vmatpush.msra.mxu0 0.0
        %1859 = vmatpush.msra.mxu0 0.0
        %1860 = vmatpush.msra.mxu0 0.0
        %1861 = vmatpush.msra.mxu0 0.0
        %1862 = vmatpush.msra.mxu0 0.0
        %1863 = vmatpush.msra.mxu0 %v1806
        %1864 = vmatmul.f32.gmra.mxu0 %v1846
        %v1865 = vpop.f32.mrf.mxu0
        %v1866 = vadd.f32 0.0, %v1865
        %1867 = vdwg.mxu0
        %s1868 = scalar_lea.vmem %s7, 56
        %v1869 = vld [vmem:[%s1868] sm:$0xff]
        %v1871 = vsel %vm596, %v1866, 0
        %1873 = vmatpush.msra.mxu0 0.0
        %1874 = vmatpush.msra.mxu0 0.0
        %1875 = vmatpush.msra.mxu0 0.0
        %1876 = vmatpush.msra.mxu0 0.0
        %1877 = vmatpush.msra.mxu0 0.0
        %1878 = vmatpush.msra.mxu0 0.0
        %1879 = vmatpush.msra.mxu0 0.0
        %1880 = vmatpush.msra.mxu0 0.0
        %1881 = vmatpush.msra.mxu0 0.0
        %1882 = vmatpush.msra.mxu0 0.0
        %1883 = vmatpush.msra.mxu0 0.0
        %1884 = vmatpush.msra.mxu0 0.0
        %1885 = vmatpush.msra.mxu0 0.0
        %1886 = vmatpush.msra.mxu0 0.0
        %1887 = vmatpush.msra.mxu0 0.0
        %1888 = vmatpush.msra.mxu0 %v1869
        %1889 = vmatmul.f32.gmra.mxu0 %v1871
        %v1890 = vpop.f32.mrf.mxu0
        %v1891 = vadd.f32 0.0, %v1890
        %1892 = vdwg.mxu0
        %v1893 = vadd.f32 %v1726, %v1891
        %v1894 = vperm.slane %v501, 0
        %v1895 = vadd.f32 %v1893, %v1894
        %v1896 = vadd.f32 %v1895, %v1218
        %v1897 = vsel %vm530, %v1896, 0.0
        %1898 = vadd.xlane.f32.xlu0 %v1897
        %v1899 = vpop.xlane.xlu0 %1898
        %v1900 = vmul.f32 %v1899, %v1193
        %v1901 = vmul.f32 %v1896, %v1896
        %v1902 = vsel %vm530, %v1901, 0.0
        %1903 = vadd.xlane.f32.xlu0 %v1902
        %v1904 = vpop.xlane.xlu0 %1903
        %v1905 = vmul.f32 %v1904, %v1193
        %v1906 = vmul.f32 %v1900, %v1900
        %v1907 = vsub.f32 %v1905, %v1906
        %v1908 = vsub.f32 %v1896, %v1900
        %v1909 = vadd.f32 %v1907, 1e-05
        %v1910 = vrsqrt.pop %v1909
        %v1911 = vmul.f32 %v1910, %v1909
        %v1912 = vmul.f32 %v1911, %v1910
        %v1913 = vmul.f32 0.5, %v1912
        %v1914 = vsub.f32 1.5, %v1913
        %v1915 = vmul.f32 %v1910, %v1914
        %vm1916 = vweird.f32 %v1909
        %vm1917 = vweird.f32 %v1910
        %vm1918 = vmor %vm1916, %vm1917
        %v1919 = vsel %vm1918, %v1910, %v1915
        %v1920 = vmul.f32 %v1908, %v1919
        %v1921 = vperm.slane %v506, 0
        %v1922 = vmul.f32 %v1920, %v1921
        %v1923 = vperm.slane %v507, 0
        %v1924 = vadd.f32 %v1922, %v1923
        %v1925 = vld [vmem:[%s8] sm:$0xff]
        %v1926 = vld [vmem:[%s8 + $0x8] sm:$0xff]
        %v1927 = vld [vmem:[%s8 + $0x10] sm:$0xff]
        %v1928 = vld [vmem:[%s8 + $0x18] sm:$0xff]
        %v1929 = vperm.slane %v502, 0
        %v1931 = vsel %vm530, %v1924, 0
        %1933 = vmatpush.msra.mxu0 0.0
        %1934 = vmatpush.msra.mxu0 0.0
        %1935 = vmatpush.msra.mxu0 0.0
        %1936 = vmatpush.msra.mxu0 0.0
        %1937 = vmatpush.msra.mxu0 0.0
        %1938 = vmatpush.msra.mxu0 0.0
        %1939 = vmatpush.msra.mxu0 0.0
        %1940 = vmatpush.msra.mxu0 0.0
        %1941 = vmatpush.msra.mxu0 0.0
        %1942 = vmatpush.msra.mxu0 0.0
        %1943 = vmatpush.msra.mxu0 0.0
        %1944 = vmatpush.msra.mxu0 0.0
        %1945 = vmatpush.msra.mxu0 %v1928
        %1946 = vmatpush.msra.mxu0 %v1927
        %1947 = vmatpush.msra.mxu0 %v1926
        %1948 = vmatpush.msra.mxu0 %v1925
        %1949 = vmatmul.f32.gmra.mxu0 %v1931
        %v1950 = vpop.f32.mrf.mxu0
        %v1951 = vadd.f32 %v1929, %v1950
        %1952 = vdwg.mxu0
        %v1953 = vmax.f32 %v1951, 0.0
        %v1954 = vld [vmem:[%s9] sm:$0xff]
        %v1955 = vld [vmem:[%s9 + $0x8] sm:$0xff]
        %v1956 = vld [vmem:[%s9 + $0x10] sm:$0xff]
        %v1957 = vld [vmem:[%s9 + $0x18] sm:$0xff]
        %v1958 = vld [vmem:[%s9 + $0x20] sm:$0xff]
        %v1959 = vld [vmem:[%s9 + $0x28] sm:$0xff]
        %v1960 = vld [vmem:[%s9 + $0x30] sm:$0xff]
        %v1961 = vld [vmem:[%s9 + $0x38] sm:$0xff]
        %v1962 = vperm.slane %v503, 0
        %vm1963 = vcmask 523264
        %v1965 = vsel %vm1963, %v1953, 0
        %1967 = vmatpush.msra.mxu0 0.0
        %1968 = vmatpush.msra.mxu0 0.0
        %1969 = vmatpush.msra.mxu0 0.0
        %1970 = vmatpush.msra.mxu0 0.0
        %1971 = vmatpush.msra.mxu0 0.0
        %1972 = vmatpush.msra.mxu0 0.0
        %1973 = vmatpush.msra.mxu0 0.0
        %1974 = vmatpush.msra.mxu0 0.0
        %1975 = vmatpush.msra.mxu0 %v1961
        %1976 = vmatpush.msra.mxu0 %v1960
        %1977 = vmatpush.msra.mxu0 %v1959
        %1978 = vmatpush.msra.mxu0 %v1958
        %1979 = vmatpush.msra.mxu0 %v1957
        %1980 = vmatpush.msra.mxu0 %v1956
        %1981 = vmatpush.msra.mxu0 %v1955
        %1982 = vmatpush.msra.mxu0 %v1954
        %1983 = vmatmul.f32.gmra.mxu0 %v1965
        %v1984 = vpop.f32.mrf.mxu0
        %v1985 = vadd.f32 %v1962, %v1984
        %1986 = vdwg.mxu0
        %v1987 = vadd.f32 %v1985, %v1924
        %v1988 = vsel %vm530, %v1987, 0.0
        %1989 = vadd.xlane.f32.xlu0 %v1988
        %v1990 = vpop.xlane.xlu0 %1989
        %v1991 = vmul.f32 %v1990, %v1193
        %v1992 = vmul.f32 %v1987, %v1987
        %v1993 = vsel %vm530, %v1992, 0.0
        %1994 = vadd.xlane.f32.xlu0 %v1993
        %v1995 = vpop.xlane.xlu0 %1994
        %v1996 = vmul.f32 %v1995, %v1193
        %v1997 = vmul.f32 %v1991, %v1991
        %v1998 = vsub.f32 %v1996, %v1997
        %v1999 = vsub.f32 %v1987, %v1991
        %v2000 = vadd.f32 %v1998, 1e-05
        %v2001 = vrsqrt.pop %v2000
        %v2002 = vmul.f32 %v2001, %v2000
        %v2003 = vmul.f32 %v2002, %v2001
        %v2004 = vmul.f32 0.5, %v2003
        %v2005 = vsub.f32 1.5, %v2004
        %v2006 = vmul.f32 %v2001, %v2005
        %vm2007 = vweird.f32 %v2000
        %vm2008 = vweird.f32 %v2001
        %vm2009 = vmor %vm2007, %vm2008
        %v2010 = vsel %vm2009, %v2001, %v2006
        %v2011 = vmul.f32 %v1999, %v2010
        %v2012 = vperm.slane %v508, 0
        %v2013 = vmul.f32 %v2011, %v2012
        %v2014 = vperm.slane %v509, 0
        %v2015 = vadd.f32 %v2013, %v2014
        %2016 = vst.msk [vmem:[%s441] sm:$0xff] %vm530, %v2015
        %s2017 = sand.u32 %s306, 1
        %s2018 = scalar_lea.sflag [#allocation3], %s2017
        %s2019 = sand.u32 %s306, 1
        %s2020 = smul.addr %s2019, 8
        %s2021 = scalar_lea.vmem [#allocation2], %s2020
        // Predicated region
        $region69: #{tpu_custom_call.1} parent=67 // pred_check
          %p2022 = pneg %p316
        $region70: #{tpu_custom_call.1} parent=67 // pred_check_branch
          %2024 = sbr.rel (%p2022) target = $region72
        $region71: #{tpu_custom_call.1} parent=67 // pred_region
          %2026 = vsyncadd %s2018, 0
          %s2027 = smul.addr %s26, 8
          %s2028 = scalar_lea.hbm %s12, %s2027
          %s2030 = sshll.u32 %s2021, 4
          %s2031 = int_to_ptr.vmem [resolvable:$true] %s2030
          %s2032 = sshll.u32 %s2028, 4
          %s2033 = int_to_ptr.hbm [resolvable:$true] %s2032
          %2035 = dma.vmem_to_hbm [thread:$0]  %s2031, 128, %s2033, %s2018
        $region72: #{tpu_custom_call.1} parent=67 // pred_fallthru
          _
      $region68: #{tpu_custom_call.1} parent=5 // pred_fallthru
        _
      %p2036 = scmp.le.s32.totalorder 2, %s21
      // Predicated region
      $region73: #{tpu_custom_call.1} parent=5 // pred_check
        %p2037 = pneg %p2036
      $region74: #{tpu_custom_call.1} parent=5 // pred_check_branch
        %2039 = sbr.rel (%p2037) target = $region76
      $region75: #{tpu_custom_call.1} parent=5 // pred_region
        %s2040 = ssub.s32 %s21, 2
        // Predicated region
        $region77: #{tpu_custom_call.1} parent=75 // pred_check
          %p2041 = pneg %p322
        $region78: #{tpu_custom_call.1} parent=75 // pred_check_branch
          %2043 = sbr.rel (%p2041) target = $region80
        $region79: #{tpu_custom_call.1} parent=75 // pred_region
          %s2044 = sand.u32 %s307, 1
          %s2045 = scalar_lea.sflag [#allocation3], %s2044
          %s2046 = sand.u32 %s307, 1
          %s2047 = smul.addr %s2046, 8
          %s2048 = scalar_lea.vmem [#allocation2], %s2047
          %2050 = dma.done %s2045, 128
        $region80: #{tpu_custom_call.1} parent=75 // pred_fallthru
          _
      $region76: #{tpu_custom_call.1} parent=5 // pred_fallthru
        _
    $region6: #{tpu_custom_call.1} parent=1 // loop_footer
      %s25 = sadd.s32 1, %s21
    $region7: #{tpu_custom_call.1} parent=1 // loop_footer_branch
      %20 = sbr.rel target = $region3
    $region8: #{tpu_custom_call.1} parent=1 // loop_exit
      _
    %2051 = vsyncpa [#allocation3], 1
    %s2052 = scalar_lea.sflag [#allocation3], 1
    %2053 = vsyncpa %s2052, 1

</llo_original>
